<compile_context>
chip_gen: v5e
topology: v5e:2x2
jax: 0.10.0
libtpu: 0.0.40
codegen_flags: <defaults>
</compile_context>

<pallas_src>
import math

import numpy as np
import jax
import jax.numpy as jnp
from jax import lax
from jax.experimental import pallas as pl
from jax.experimental.pallas import tpu as pltpu

# ---- configuration (small, consistent with the module's __init__) ----------
N_CLASS = 5
LAGS = 2
X_DIM = 3
HIDDEN = 32
B = 2
LENGTH = 8                 # T (length after removing lags)
SEQ = LAGS + LENGTH        # lags_and_length
LOG2PI = math.log(2.0 * math.pi)
HI = lax.Precision.HIGHEST


def _lse(x):
    """logsumexp over the last axis, keepdims=True (finite inputs)."""
    m = jnp.max(x, axis=-1, keepdims=True)
    return m + jnp.log(jnp.sum(jnp.exp(x - m), axis=-1, keepdims=True))


# ---------------------------------------------------------------------------
# Fused kernel: emission MLP + Gaussian log-prob + scaled forward + Viterbi
#   inputs : x (B, SEQ, D), MLP weights (W3/b3 pre-permuted to [mus|logvars]),
#            S block-diag ones (C*D, C), A (= softmax rows of log_A),
#            logAT (= log_softmax(log_A, 1).T), logpi (1, C)
#   outputs: logp_x (B, 1) f32, c_est (B, T) int32
# ---------------------------------------------------------------------------
def hmm_fused_kernel(x_ref, w1_ref, b1_ref, w2_ref, b2_ref, w3_ref, b3_ref,
                     s_ref, a_ref, logAT_ref, logpi_ref, logpx_ref, c_ref):
    Bb, seq, D = x_ref.shape
    T = seq - LAGS
    N = Bb * T
    C = logpi_ref.shape[-1]
    Cd = C * D
    H = w1_ref.shape[-1]

    # ------------------ emission MLP (rows ordered b*T + t) ---------------
    # xh @ W1 computed per lag, so xh is never materialized.
    pre = jnp.zeros((N, H), jnp.float32)
    for j in range(LAGS):
        xj = x_ref[:, j:j + T, :].reshape(N, D)
        pre = pre + jnp.dot(xj, w1_ref[j * D:(j + 1) * D, :],
                            preferred_element_type=jnp.float32)
    h = jnp.maximum(pre + b1_ref[...], 0.0)
    h = jnp.maximum(
        jnp.dot(h, w2_ref[...], preferred_element_type=jnp.float32)
        + b2_ref[...], 0.0)
    o = (jnp.dot(h, w3_ref[...], preferred_element_type=jnp.float32)
         + b3_ref[...])                      # (N, 2*Cd)  [all mus | all logvars]
    mu = o[:, :Cd]
    lv = o[:, Cd:]

    xt = x_ref[:, LAGS:, :].reshape(N, D)    # (N, D)
    xt_rep = jnp.tile(xt, (1, C))            # (N, Cd)  class-tiled observation

    diff = xt_rep - mu
    lp = -0.5 * diff * diff * jnp.exp(-lv) - 0.5 * lv - 0.5 * LOG2PI   # (N, Cd)

    # per-class sum -> (N, C) with one MXU matmul against block-diag ones S
    logp_flat = jnp.dot(lp, s_ref[...], preferred_element_type=jnp.float32,
                        precision=HI)        # (N, C), rows ordered b*T + t
    logp3 = logp_flat.reshape(Bb, T, C)      # pure sublane-tile split (T == 8)

    # ------------------ transition constants -----------------------------
    A = a_ref[...]              # (C, C), rows sum to 1
    logAT = logAT_ref[...]      # (C, C), logAT[j, i] = log A[i, j]
    logpi = logpi_ref[...]      # (1, C)

    idxC = lax.broadcasted_iota(jnp.int32, (Bb, C), 1)        # (B, C) lane idx
    idx_i = lax.broadcasted_iota(jnp.int32, (Bb, C, C), 2)    # prev-state idx

    # ------------------ t = 0 ---------------------------------------------
    lp0 = logp3[:, 0, :]                     # (B, C)
    alpha = lp0 + logpi
    m = jnp.max(alpha, axis=-1, keepdims=True)
    total = m                                # running sum of per-step shifts
    alpha = alpha - m
    delta = lp0 + logpi                      # (B, C) Viterbi scores

    psis = []                                # psis[k] = psi at time k+1, (B, C) int32
    for t in range(1, T):                    # static unroll (T is small)
        lpt = logp3[:, t, :]

        # scaled forward in the linear domain:  q[b,j] = sum_i exp(alpha[b,i]) A[i,j]
        q = jnp.dot(jnp.exp(alpha), A, preferred_element_type=jnp.float32,
                    precision=HI)
        alpha_t = lpt + jnp.log(q)
        m = jnp.max(alpha_t, axis=-1, keepdims=True)          # XLU only
        total = total + m
        alpha = alpha_t - m

        # Viterbi, broadcast over next state j:  V3[b,j,i] = delta[b,i] + logA[i,j]
        V3 = delta[:, None, :] + logAT[None, :, :]            # (B, C, C)
        mvk = jnp.max(V3, axis=-1, keepdims=True)             # (B, C, 1)
        psi = jnp.min(jnp.where(V3 == mvk, idx_i, C), axis=-1)  # (B, C) int32, first max
        delta = mvk.reshape(Bb, C) + lpt
        psis.append(psi)

    # logp_x = sum_t shift_t + logsumexp(alpha_final)  (== sum of log_scalers)
    logpx_ref[...] = total + _lse(alpha)

    # ------------------ Viterbi backtrack: single lane-dense store --------
    mvd = jnp.max(delta, axis=-1, keepdims=True)
    c_t = jnp.min(jnp.where(delta == mvd, idxC, C), axis=-1, keepdims=True)  # (B,1)
    cols = [c_t]
    for t in range(T - 2, -1, -1):
        psi_t1 = psis[t]                     # psi at time t+1
        c_t = jnp.sum(jnp.where(idxC == c_t, psi_t1, 0), axis=-1, keepdims=True)
        cols.append(c_t)
    cols.reverse()
    c_ref[...] = jnp.concatenate(cols, axis=-1)              # (B, T), one store


# ---------------------------------------------------------------------------
# Wrapper: parameter prep (column permutation, softmaxes, constant S) +
# a single gridless pallas_call with whole-array VMEM specs.
# ---------------------------------------------------------------------------
def hmm_forward_pallas(x, params):
    W1, b1, W2, b2, W3, b3, logA_p, logpi_p = params
    Bc, Lall, D = x.shape
    T = Lall - LAGS
    C = N_CLASS

    # permute last-layer columns once: [mu_0..mu_{C-1} | logvar_0..logvar_{C-1}]
    cls = np.arange(C)[:, None]
    dim = np.arange(D)[None, :]
    perm = np.concatenate([(cls * 2 * D + dim).reshape(-1),
                           (cls * 2 * D + D + dim).reshape(-1)])
    W3p = W3[:, perm]
    b3p = b3[:, perm]

    # block-diag ones for the per-class Gaussian reduction, built host-side
    S = jnp.asarray(np.kron(np.eye(C, dtype=np.float32),
                            np.ones((D, 1), dtype=np.float32)))   # (C*D, C)

    logA = jax.nn.log_softmax(logA_p, axis=1)
    A = jnp.exp(logA)                                     # (C, C) rows sum to 1
    logAT = logA.T                                        # (C, C), logAT[j,i]=logA[i,j]
    logpi = jax.nn.log_softmax(logpi_p, axis=0)[None, :]  # (1, C)

    vmem = pl.BlockSpec(memory_space=pltpu.MemorySpace.VMEM)

    logpx, c_est = pl.pallas_call(
        hmm_fused_kernel,
        out_shape=(jax.ShapeDtypeStruct((Bc, 1), jnp.float32),
                   jax.ShapeDtypeStruct((Bc, T), jnp.int32)),
        in_specs=[vmem] * 11,
        out_specs=(vmem, vmem),
    )(x, W1, b1, W2, b2, W3p, b3p, S, A, logAT, logpi)

    return logpx[:, 0], c_est


# ---------------------------------------------------------------------------
# Pure-JAX reference (mirrors the PyTorch forward semantics)
# ---------------------------------------------------------------------------
def reference_forward(x, params):
    W1, b1, W2, b2, W3, b3, logA_p, logpi_p = params
    Bc, Lall, D = x.shape
    T = Lall - LAGS
    xh = jnp.stack([x[:, j:j + T, :] for j in range(LAGS)], axis=2)
    xh = xh.reshape(Bc, T, LAGS * D)
    h = jax.nn.relu(xh @ W1 + b1)
    h = jax.nn.relu(h @ W2 + b2)
    out = (h @ W3 + b3).reshape(Bc, T, N_CLASS, 2 * D)
    mus, logvars = out[..., :D], out[..., D:]
    xt = x[:, LAGS:, :][:, :, None, :]
    logp = (-0.5 * (xt - mus) ** 2 * jnp.exp(-logvars)
            - 0.5 * logvars - 0.5 * LOG2PI)
    logp_x_c = logp.sum(-1)                                   # (B, T, C)

    logA = jax.nn.log_softmax(logA_p, axis=1)
    logpi = jax.nn.log_softmax(logpi_p, axis=0)

    # scaled forward
    total = jnp.zeros((Bc,))
    alpha = None
    for t in range(T):
        if t == 0:
            a = logp_x_c[:, 0] + logpi
        else:
            a = logp_x_c[:, t] + jax.nn.logsumexp(
                alpha[:, :, None] + logA[None], axis=1)
        s = jax.nn.logsumexp(a, axis=-1)
        total = total + s
        alpha = a - s[:, None]

    # Viterbi
    delta = logp_x_c[:, 0] + logpi
    psis = []
    for t in range(1, T):
        v = delta[:, :, None] + logA[None]
        psis.append(jnp.argmax(v, axis=1).astype(jnp.int32))
        delta = v.max(axis=1) + logp_x_c[:, t]
    c = [None] * T
    c[T - 1] = jnp.argmax(delta, axis=-1).astype(jnp.int32)
    for t in range(T - 2, -1, -1):
        c[t] = jnp.take_along_axis(psis[t], c[t + 1][:, None], axis=1)[:, 0]
    c_est = jnp.stack(c, axis=1)
    return total, c_est


if __name__ == "__main__":
    key = jax.random.PRNGKey(0)
    keys = jax.random.split(key, 9)
    Din = LAGS * X_DIM
    Dout = N_CLASS * 2 * X_DIM

    W1 = jax.random.normal(keys[0], (Din, HIDDEN), jnp.float32) / np.sqrt(Din)
    b1 = jax.random.normal(keys[1], (1, HIDDEN), jnp.float32) * 0.1
    W2 = jax.random.normal(keys[2], (HIDDEN, HIDDEN), jnp.float32) / np.sqrt(HIDDEN)
    b2 = jax.random.normal(keys[3], (1, HIDDEN), jnp.float32) * 0.1
    W3 = jax.random.normal(keys[4], (HIDDEN, Dout), jnp.float32) / np.sqrt(HIDDEN)
    b3 = jax.random.normal(keys[5], (1, Dout), jnp.float32) * 0.1
    logA_p = jax.random.normal(keys[6], (N_CLASS, N_CLASS), jnp.float32)
    logpi_p = jax.random.normal(keys[7], (N_CLASS,), jnp.float32)
    x = jax.random.normal(keys[8], (B, SEQ, X_DIM), jnp.float32)

    params = (W1, b1, W2, b2, W3, b3, logA_p, logpi_p)

    logpx, c_est = jax.jit(hmm_forward_pallas)(x, params)
    jax.block_until_ready((logpx, c_est))

    ref_logpx, ref_c = reference_forward(x, params)
    assert logpx.shape == (B,) and c_est.shape == (B, LENGTH)
    np.testing.assert_allclose(np.asarray(logpx), np.asarray(ref_logpx),
                               rtol=2e-3, atol=2e-3)
    assert np.array_equal(np.asarray(c_est), np.asarray(ref_c))
    print("KERNEL_OK")
</pallas_src>

<mosaic_0001>
module attributes {stable_mosaic.version = 11 : i64} {
  func.func @hmm_fused_kernel(%arg0: memref<2x10x3xf32, #tpu.memory_space<vmem>>, %arg1: memref<6x32xf32, #tpu.memory_space<vmem>>, %arg2: memref<1x32xf32, #tpu.memory_space<vmem>>, %arg3: memref<32x32xf32, #tpu.memory_space<vmem>>, %arg4: memref<1x32xf32, #tpu.memory_space<vmem>>, %arg5: memref<32x30xf32, #tpu.memory_space<vmem>>, %arg6: memref<1x30xf32, #tpu.memory_space<vmem>>, %arg7: memref<15x5xf32, #tpu.memory_space<vmem>>, %arg8: memref<5x5xf32, #tpu.memory_space<vmem>>, %arg9: memref<5x5xf32, #tpu.memory_space<vmem>>, %arg10: memref<1x5xf32, #tpu.memory_space<vmem>>, %arg11: memref<2x1xf32, #tpu.memory_space<vmem>>, %arg12: memref<2x8xi32, #tpu.memory_space<vmem>>) attributes {dimension_semantics = [], scalar_prefetch = 0 : i64, scratch_operands = 0 : i64, tpu.core_type = #tpu.core_type<tc>} {
    %cst = arith.constant 0.000000e+00 : f32
    %0 = vector.broadcast %cst : f32 to vector<16x32xf32>
    %c0 = arith.constant 0 : index
    %c0_0 = arith.constant 0 : index
    %c0_1 = arith.constant 0 : index
    %1 = vector.load %arg0[%c0, %c0_0, %c0_1] : memref<2x10x3xf32, #tpu.memory_space<vmem>>, vector<2x8x3xf32>
    %2 = vector.shape_cast %1 : vector<2x8x3xf32> to vector<16x3xf32>
    %c0_2 = arith.constant 0 : index
    %c0_3 = arith.constant 0 : index
    %3 = vector.load %arg1[%c0_2, %c0_3] : memref<6x32xf32, #tpu.memory_space<vmem>>, vector<3x32xf32>
    %cst_4 = arith.constant dense<0.000000e+00> : vector<16x32xf32>
    %4 = tpu.matmul %2, %3, %cst_4 {dimension_numbers = #tpu.dot_dimension_numbers<[1], [0], [0], [1], [0, 0, 1, 1], [], []>} : vector<16x3xf32>, vector<3x32xf32>, vector<16x32xf32> -> vector<16x32xf32>
    %5 = arith.addf %0, %4 : vector<16x32xf32>
    %c0_5 = arith.constant 0 : index
    %c1 = arith.constant 1 : index
    %c0_6 = arith.constant 0 : index
    %6 = vector.load %arg0[%c0_5, %c1, %c0_6] : memref<2x10x3xf32, #tpu.memory_space<vmem>>, vector<2x8x3xf32>
    %7 = vector.shape_cast %6 : vector<2x8x3xf32> to vector<16x3xf32>
    %c3 = arith.constant 3 : index
    %c0_7 = arith.constant 0 : index
    %8 = vector.load %arg1[%c3, %c0_7] : memref<6x32xf32, #tpu.memory_space<vmem>>, vector<3x32xf32>
    %cst_8 = arith.constant dense<0.000000e+00> : vector<16x32xf32>
    %9 = tpu.matmul %7, %8, %cst_8 {dimension_numbers = #tpu.dot_dimension_numbers<[1], [0], [0], [1], [0, 0, 1, 1], [], []>} : vector<16x3xf32>, vector<3x32xf32>, vector<16x32xf32> -> vector<16x32xf32>
    %10 = arith.addf %5, %9 : vector<16x32xf32>
    %c0_9 = arith.constant 0 : index
    %c0_10 = arith.constant 0 : index
    %11 = vector.load %arg2[%c0_9, %c0_10] : memref<1x32xf32, #tpu.memory_space<vmem>>, vector<1x32xf32>
    %12 = vector.broadcast %11 : vector<1x32xf32> to vector<16x32xf32>
    %13 = arith.addf %10, %12 : vector<16x32xf32>
    %cst_11 = arith.constant 0.000000e+00 : f32
    %14 = vector.broadcast %cst_11 : f32 to vector<16x32xf32>
    %15 = arith.maximumf %13, %14 : vector<16x32xf32>
    %c0_12 = arith.constant 0 : index
    %c0_13 = arith.constant 0 : index
    %16 = vector.load %arg3[%c0_12, %c0_13] : memref<32x32xf32, #tpu.memory_space<vmem>>, vector<32x32xf32>
    %cst_14 = arith.constant dense<0.000000e+00> : vector<16x32xf32>
    %17 = tpu.matmul %15, %16, %cst_14 {dimension_numbers = #tpu.dot_dimension_numbers<[1], [0], [0], [1], [0, 0, 1, 1], [], []>} : vector<16x32xf32>, vector<32x32xf32>, vector<16x32xf32> -> vector<16x32xf32>
    %c0_15 = arith.constant 0 : index
    %c0_16 = arith.constant 0 : index
    %18 = vector.load %arg4[%c0_15, %c0_16] : memref<1x32xf32, #tpu.memory_space<vmem>>, vector<1x32xf32>
    %19 = vector.broadcast %18 : vector<1x32xf32> to vector<16x32xf32>
    %20 = arith.addf %17, %19 : vector<16x32xf32>
    %cst_17 = arith.constant 0.000000e+00 : f32
    %21 = vector.broadcast %cst_17 : f32 to vector<16x32xf32>
    %22 = arith.maximumf %20, %21 : vector<16x32xf32>
    %c0_18 = arith.constant 0 : index
    %c0_19 = arith.constant 0 : index
    %23 = vector.load %arg5[%c0_18, %c0_19] : memref<32x30xf32, #tpu.memory_space<vmem>>, vector<32x30xf32>
    %cst_20 = arith.constant dense<0.000000e+00> : vector<16x30xf32>
    %24 = tpu.matmul %22, %23, %cst_20 {dimension_numbers = #tpu.dot_dimension_numbers<[1], [0], [0], [1], [0, 0, 1, 1], [], []>} : vector<16x32xf32>, vector<32x30xf32>, vector<16x30xf32> -> vector<16x30xf32>
    %c0_21 = arith.constant 0 : index
    %c0_22 = arith.constant 0 : index
    %25 = vector.load %arg6[%c0_21, %c0_22] : memref<1x30xf32, #tpu.memory_space<vmem>>, vector<1x30xf32>
    %26 = vector.broadcast %25 : vector<1x30xf32> to vector<16x30xf32>
    %27 = arith.addf %24, %26 : vector<16x30xf32>
    %28 = vector.extract_strided_slice %27 {offsets = [0, 0], sizes = [16, 15], strides = [1, 1]} : vector<16x30xf32> to vector<16x15xf32>
    %29 = vector.extract_strided_slice %27 {offsets = [0, 15], sizes = [16, 15], strides = [1, 1]} : vector<16x30xf32> to vector<16x15xf32>
    %c0_23 = arith.constant 0 : index
    %c2 = arith.constant 2 : index
    %c0_24 = arith.constant 0 : index
    %30 = vector.load %arg0[%c0_23, %c2, %c0_24] : memref<2x10x3xf32, #tpu.memory_space<vmem>>, vector<2x8x3xf32>
    %31 = vector.shape_cast %30 : vector<2x8x3xf32> to vector<16x3xf32>
    %32 = tpu.concatenate %31, %31, %31, %31, %31 in 1 : vector<16x3xf32>, vector<16x3xf32>, vector<16x3xf32>, vector<16x3xf32>, vector<16x3xf32> -> vector<16x15xf32>
    %33 = arith.subf %32, %28 : vector<16x15xf32>
    %cst_25 = arith.constant -5.000000e-01 : f32
    %34 = vector.broadcast %cst_25 : f32 to vector<16x15xf32>
    %35 = arith.mulf %34, %33 : vector<16x15xf32>
    %36 = arith.mulf %35, %33 : vector<16x15xf32>
    %cst_26 = arith.constant 0.000000e+00 : f32
    %37 = vector.broadcast %cst_26 : f32 to vector<16x15xf32>
    %38 = arith.subf %37, %29 : vector<16x15xf32>
    %39 = math.exp %38 : vector<16x15xf32>
    %40 = arith.mulf %36, %39 : vector<16x15xf32>
    %cst_27 = arith.constant 5.000000e-01 : f32
    %41 = vector.broadcast %cst_27 : f32 to vector<16x15xf32>
    %42 = arith.mulf %41, %29 : vector<16x15xf32>
    %43 = arith.subf %40, %42 : vector<16x15xf32>
    %cst_28 = arith.constant 0.918938517 : f32
    %44 = vector.broadcast %cst_28 : f32 to vector<16x15xf32>
    %45 = arith.subf %43, %44 : vector<16x15xf32>
    %c0_29 = arith.constant 0 : index
    %c0_30 = arith.constant 0 : index
    %46 = vector.load %arg7[%c0_29, %c0_30] : memref<15x5xf32, #tpu.memory_space<vmem>>, vector<15x5xf32>
    %cst_31 = arith.constant dense<0.000000e+00> : vector<16x5xf32>
    %47 = tpu.matmul %45, %46, %cst_31 {dimension_numbers = #tpu.dot_dimension_numbers<[1], [0], [0], [1], [0, 0, 1, 1], [], []>, precision = #tpu.contract_precision<fp32>} : vector<16x15xf32>, vector<15x5xf32>, vector<16x5xf32> -> vector<16x5xf32>
    %48 = vector.shape_cast %47 : vector<16x5xf32> to vector<2x8x5xf32>
    %c0_32 = arith.constant 0 : index
    %c0_33 = arith.constant 0 : index
    %49 = vector.load %arg8[%c0_32, %c0_33] : memref<5x5xf32, #tpu.memory_space<vmem>>, vector<5x5xf32>
    %c0_34 = arith.constant 0 : index
    %c0_35 = arith.constant 0 : index
    %50 = vector.load %arg9[%c0_34, %c0_35] : memref<5x5xf32, #tpu.memory_space<vmem>>, vector<5x5xf32>
    %c0_36 = arith.constant 0 : index
    %c0_37 = arith.constant 0 : index
    %51 = vector.load %arg10[%c0_36, %c0_37] : memref<1x5xf32, #tpu.memory_space<vmem>>, vector<1x5xf32>
    %52 = tpu.iota {dimensions = array<i32: 1>} : vector<2x5xi32>
    %53 = tpu.iota {dimensions = array<i32: 2>} : vector<2x5x5xi32>
    %54 = vector.extract_strided_slice %48 {offsets = [0, 0, 0], sizes = [2, 1, 5], strides = [1, 1, 1]} : vector<2x8x5xf32> to vector<2x1x5xf32>
    %55 = vector.shape_cast %54 : vector<2x1x5xf32> to vector<2x5xf32>
    %56 = vector.broadcast %51 : vector<1x5xf32> to vector<2x5xf32>
    %57 = arith.addf %55, %56 : vector<2x5xf32>
    %cst_38 = arith.constant dense<0xFF800000> : vector<2xf32>
    %58 = vector.multi_reduction <maximumf>, %57, %cst_38 [1] : vector<2x5xf32> to vector<2xf32>
    %59 = vector.shape_cast %58 : vector<2xf32> to vector<2x1xf32>
    %60 = vector.broadcast %59 : vector<2x1xf32> to vector<2x5xf32>
    %61 = arith.subf %57, %60 : vector<2x5xf32>
    %62 = vector.broadcast %51 : vector<1x5xf32> to vector<2x5xf32>
    %63 = arith.addf %55, %62 : vector<2x5xf32>
    %64 = vector.extract_strided_slice %48 {offsets = [0, 1, 0], sizes = [2, 1, 5], strides = [1, 1, 1]} : vector<2x8x5xf32> to vector<2x1x5xf32>
    %65 = vector.shape_cast %64 : vector<2x1x5xf32> to vector<2x5xf32>
    %66 = math.exp %61 : vector<2x5xf32>
    %cst_39 = arith.constant dense<0.000000e+00> : vector<2x5xf32>
    %67 = tpu.matmul %66, %49, %cst_39 {dimension_numbers = #tpu.dot_dimension_numbers<[1], [0], [0], [1], [0, 0, 1, 1], [], []>, precision = #tpu.contract_precision<fp32>} : vector<2x5xf32>, vector<5x5xf32>, vector<2x5xf32> -> vector<2x5xf32>
    %68 = math.log %67 : vector<2x5xf32>
    %69 = arith.addf %65, %68 : vector<2x5xf32>
    %cst_40 = arith.constant dense<0xFF800000> : vector<2xf32>
    %70 = vector.multi_reduction <maximumf>, %69, %cst_40 [1] : vector<2x5xf32> to vector<2xf32>
    %71 = vector.shape_cast %70 : vector<2xf32> to vector<2x1xf32>
    %72 = arith.addf %59, %71 : vector<2x1xf32>
    %73 = vector.broadcast %71 : vector<2x1xf32> to vector<2x5xf32>
    %74 = arith.subf %69, %73 : vector<2x5xf32>
    %75 = vector.shape_cast %63 : vector<2x5xf32> to vector<2x1x5xf32>
    %76 = vector.shape_cast %50 : vector<5x5xf32> to vector<1x5x5xf32>
    %77 = vector.broadcast %75 : vector<2x1x5xf32> to vector<2x5x5xf32>
    %78 = vector.broadcast %76 : vector<1x5x5xf32> to vector<2x5x5xf32>
    %79 = arith.addf %77, %78 : vector<2x5x5xf32>
    %cst_41 = arith.constant dense<0xFF800000> : vector<2x5xf32>
    %80 = vector.multi_reduction <maximumf>, %79, %cst_41 [2] : vector<2x5x5xf32> to vector<2x5xf32>
    %81 = vector.shape_cast %80 : vector<2x5xf32> to vector<2x5x1xf32>
    %82 = vector.broadcast %81 : vector<2x5x1xf32> to vector<2x5x5xf32>
    %83 = arith.cmpf oeq, %79, %82 : vector<2x5x5xf32>
    %c5_i32 = arith.constant 5 : i32
    %84 = vector.broadcast %c5_i32 : i32 to vector<2x5x5xi32>
    %85 = arith.select %83, %53, %84 : vector<2x5x5xi1>, vector<2x5x5xi32>
    %cst_42 = arith.constant dense<2147483647> : vector<2x5xi32>
    %86 = vector.multi_reduction <minsi>, %85, %cst_42 [2] : vector<2x5x5xi32> to vector<2x5xi32>
    %87 = vector.shape_cast %81 : vector<2x5x1xf32> to vector<2x5xf32>
    %88 = arith.addf %87, %65 : vector<2x5xf32>
    %89 = vector.extract_strided_slice %48 {offsets = [0, 2, 0], sizes = [2, 1, 5], strides = [1, 1, 1]} : vector<2x8x5xf32> to vector<2x1x5xf32>
    %90 = vector.shape_cast %89 : vector<2x1x5xf32> to vector<2x5xf32>
    %91 = math.exp %74 : vector<2x5xf32>
    %cst_43 = arith.constant dense<0.000000e+00> : vector<2x5xf32>
    %92 = tpu.matmul %91, %49, %cst_43 {dimension_numbers = #tpu.dot_dimension_numbers<[1], [0], [0], [1], [0, 0, 1, 1], [], []>, precision = #tpu.contract_precision<fp32>} : vector<2x5xf32>, vector<5x5xf32>, vector<2x5xf32> -> vector<2x5xf32>
    %93 = math.log %92 : vector<2x5xf32>
    %94 = arith.addf %90, %93 : vector<2x5xf32>
    %cst_44 = arith.constant dense<0xFF800000> : vector<2xf32>
    %95 = vector.multi_reduction <maximumf>, %94, %cst_44 [1] : vector<2x5xf32> to vector<2xf32>
    %96 = vector.shape_cast %95 : vector<2xf32> to vector<2x1xf32>
    %97 = arith.addf %72, %96 : vector<2x1xf32>
    %98 = vector.broadcast %96 : vector<2x1xf32> to vector<2x5xf32>
    %99 = arith.subf %94, %98 : vector<2x5xf32>
    %100 = vector.shape_cast %88 : vector<2x5xf32> to vector<2x1x5xf32>
    %101 = vector.shape_cast %50 : vector<5x5xf32> to vector<1x5x5xf32>
    %102 = vector.broadcast %100 : vector<2x1x5xf32> to vector<2x5x5xf32>
    %103 = vector.broadcast %101 : vector<1x5x5xf32> to vector<2x5x5xf32>
    %104 = arith.addf %102, %103 : vector<2x5x5xf32>
    %cst_45 = arith.constant dense<0xFF800000> : vector<2x5xf32>
    %105 = vector.multi_reduction <maximumf>, %104, %cst_45 [2] : vector<2x5x5xf32> to vector<2x5xf32>
    %106 = vector.shape_cast %105 : vector<2x5xf32> to vector<2x5x1xf32>
    %107 = vector.broadcast %106 : vector<2x5x1xf32> to vector<2x5x5xf32>
    %108 = arith.cmpf oeq, %104, %107 : vector<2x5x5xf32>
    %c5_i32_46 = arith.constant 5 : i32
    %109 = vector.broadcast %c5_i32_46 : i32 to vector<2x5x5xi32>
    %110 = arith.select %108, %53, %109 : vector<2x5x5xi1>, vector<2x5x5xi32>
    %cst_47 = arith.constant dense<2147483647> : vector<2x5xi32>
    %111 = vector.multi_reduction <minsi>, %110, %cst_47 [2] : vector<2x5x5xi32> to vector<2x5xi32>
    %112 = vector.shape_cast %106 : vector<2x5x1xf32> to vector<2x5xf32>
    %113 = arith.addf %112, %90 : vector<2x5xf32>
    %114 = vector.extract_strided_slice %48 {offsets = [0, 3, 0], sizes = [2, 1, 5], strides = [1, 1, 1]} : vector<2x8x5xf32> to vector<2x1x5xf32>
    %115 = vector.shape_cast %114 : vector<2x1x5xf32> to vector<2x5xf32>
    %116 = math.exp %99 : vector<2x5xf32>
    %cst_48 = arith.constant dense<0.000000e+00> : vector<2x5xf32>
    %117 = tpu.matmul %116, %49, %cst_48 {dimension_numbers = #tpu.dot_dimension_numbers<[1], [0], [0], [1], [0, 0, 1, 1], [], []>, precision = #tpu.contract_precision<fp32>} : vector<2x5xf32>, vector<5x5xf32>, vector<2x5xf32> -> vector<2x5xf32>
    %118 = math.log %117 : vector<2x5xf32>
    %119 = arith.addf %115, %118 : vector<2x5xf32>
    %cst_49 = arith.constant dense<0xFF800000> : vector<2xf32>
    %120 = vector.multi_reduction <maximumf>, %119, %cst_49 [1] : vector<2x5xf32> to vector<2xf32>
    %121 = vector.shape_cast %120 : vector<2xf32> to vector<2x1xf32>
    %122 = arith.addf %97, %121 : vector<2x1xf32>
    %123 = vector.broadcast %121 : vector<2x1xf32> to vector<2x5xf32>
    %124 = arith.subf %119, %123 : vector<2x5xf32>
    %125 = vector.shape_cast %113 : vector<2x5xf32> to vector<2x1x5xf32>
    %126 = vector.shape_cast %50 : vector<5x5xf32> to vector<1x5x5xf32>
    %127 = vector.broadcast %125 : vector<2x1x5xf32> to vector<2x5x5xf32>
    %128 = vector.broadcast %126 : vector<1x5x5xf32> to vector<2x5x5xf32>
    %129 = arith.addf %127, %128 : vector<2x5x5xf32>
    %cst_50 = arith.constant dense<0xFF800000> : vector<2x5xf32>
    %130 = vector.multi_reduction <maximumf>, %129, %cst_50 [2] : vector<2x5x5xf32> to vector<2x5xf32>
    %131 = vector.shape_cast %130 : vector<2x5xf32> to vector<2x5x1xf32>
    %132 = vector.broadcast %131 : vector<2x5x1xf32> to vector<2x5x5xf32>
    %133 = arith.cmpf oeq, %129, %132 : vector<2x5x5xf32>
    %c5_i32_51 = arith.constant 5 : i32
    %134 = vector.broadcast %c5_i32_51 : i32 to vector<2x5x5xi32>
    %135 = arith.select %133, %53, %134 : vector<2x5x5xi1>, vector<2x5x5xi32>
    %cst_52 = arith.constant dense<2147483647> : vector<2x5xi32>
    %136 = vector.multi_reduction <minsi>, %135, %cst_52 [2] : vector<2x5x5xi32> to vector<2x5xi32>
    %137 = vector.shape_cast %131 : vector<2x5x1xf32> to vector<2x5xf32>
    %138 = arith.addf %137, %115 : vector<2x5xf32>
    %139 = vector.extract_strided_slice %48 {offsets = [0, 4, 0], sizes = [2, 1, 5], strides = [1, 1, 1]} : vector<2x8x5xf32> to vector<2x1x5xf32>
    %140 = vector.shape_cast %139 : vector<2x1x5xf32> to vector<2x5xf32>
    %141 = math.exp %124 : vector<2x5xf32>
    %cst_53 = arith.constant dense<0.000000e+00> : vector<2x5xf32>
    %142 = tpu.matmul %141, %49, %cst_53 {dimension_numbers = #tpu.dot_dimension_numbers<[1], [0], [0], [1], [0, 0, 1, 1], [], []>, precision = #tpu.contract_precision<fp32>} : vector<2x5xf32>, vector<5x5xf32>, vector<2x5xf32> -> vector<2x5xf32>
    %143 = math.log %142 : vector<2x5xf32>
    %144 = arith.addf %140, %143 : vector<2x5xf32>
    %cst_54 = arith.constant dense<0xFF800000> : vector<2xf32>
    %145 = vector.multi_reduction <maximumf>, %144, %cst_54 [1] : vector<2x5xf32> to vector<2xf32>
    %146 = vector.shape_cast %145 : vector<2xf32> to vector<2x1xf32>
    %147 = arith.addf %122, %146 : vector<2x1xf32>
    %148 = vector.broadcast %146 : vector<2x1xf32> to vector<2x5xf32>
    %149 = arith.subf %144, %148 : vector<2x5xf32>
    %150 = vector.shape_cast %138 : vector<2x5xf32> to vector<2x1x5xf32>
    %151 = vector.shape_cast %50 : vector<5x5xf32> to vector<1x5x5xf32>
    %152 = vector.broadcast %150 : vector<2x1x5xf32> to vector<2x5x5xf32>
    %153 = vector.broadcast %151 : vector<1x5x5xf32> to vector<2x5x5xf32>
    %154 = arith.addf %152, %153 : vector<2x5x5xf32>
    %cst_55 = arith.constant dense<0xFF800000> : vector<2x5xf32>
    %155 = vector.multi_reduction <maximumf>, %154, %cst_55 [2] : vector<2x5x5xf32> to vector<2x5xf32>
    %156 = vector.shape_cast %155 : vector<2x5xf32> to vector<2x5x1xf32>
    %157 = vector.broadcast %156 : vector<2x5x1xf32> to vector<2x5x5xf32>
    %158 = arith.cmpf oeq, %154, %157 : vector<2x5x5xf32>
    %c5_i32_56 = arith.constant 5 : i32
    %159 = vector.broadcast %c5_i32_56 : i32 to vector<2x5x5xi32>
    %160 = arith.select %158, %53, %159 : vector<2x5x5xi1>, vector<2x5x5xi32>
    %cst_57 = arith.constant dense<2147483647> : vector<2x5xi32>
    %161 = vector.multi_reduction <minsi>, %160, %cst_57 [2] : vector<2x5x5xi32> to vector<2x5xi32>
    %162 = vector.shape_cast %156 : vector<2x5x1xf32> to vector<2x5xf32>
    %163 = arith.addf %162, %140 : vector<2x5xf32>
    %164 = vector.extract_strided_slice %48 {offsets = [0, 5, 0], sizes = [2, 1, 5], strides = [1, 1, 1]} : vector<2x8x5xf32> to vector<2x1x5xf32>
    %165 = vector.shape_cast %164 : vector<2x1x5xf32> to vector<2x5xf32>
    %166 = math.exp %149 : vector<2x5xf32>
    %cst_58 = arith.constant dense<0.000000e+00> : vector<2x5xf32>
    %167 = tpu.matmul %166, %49, %cst_58 {dimension_numbers = #tpu.dot_dimension_numbers<[1], [0], [0], [1], [0, 0, 1, 1], [], []>, precision = #tpu.contract_precision<fp32>} : vector<2x5xf32>, vector<5x5xf32>, vector<2x5xf32> -> vector<2x5xf32>
    %168 = math.log %167 : vector<2x5xf32>
    %169 = arith.addf %165, %168 : vector<2x5xf32>
    %cst_59 = arith.constant dense<0xFF800000> : vector<2xf32>
    %170 = vector.multi_reduction <maximumf>, %169, %cst_59 [1] : vector<2x5xf32> to vector<2xf32>
    %171 = vector.shape_cast %170 : vector<2xf32> to vector<2x1xf32>
    %172 = arith.addf %147, %171 : vector<2x1xf32>
    %173 = vector.broadcast %171 : vector<2x1xf32> to vector<2x5xf32>
    %174 = arith.subf %169, %173 : vector<2x5xf32>
    %175 = vector.shape_cast %163 : vector<2x5xf32> to vector<2x1x5xf32>
    %176 = vector.shape_cast %50 : vector<5x5xf32> to vector<1x5x5xf32>
    %177 = vector.broadcast %175 : vector<2x1x5xf32> to vector<2x5x5xf32>
    %178 = vector.broadcast %176 : vector<1x5x5xf32> to vector<2x5x5xf32>
    %179 = arith.addf %177, %178 : vector<2x5x5xf32>
    %cst_60 = arith.constant dense<0xFF800000> : vector<2x5xf32>
    %180 = vector.multi_reduction <maximumf>, %179, %cst_60 [2] : vector<2x5x5xf32> to vector<2x5xf32>
    %181 = vector.shape_cast %180 : vector<2x5xf32> to vector<2x5x1xf32>
    %182 = vector.broadcast %181 : vector<2x5x1xf32> to vector<2x5x5xf32>
    %183 = arith.cmpf oeq, %179, %182 : vector<2x5x5xf32>
    %c5_i32_61 = arith.constant 5 : i32
    %184 = vector.broadcast %c5_i32_61 : i32 to vector<2x5x5xi32>
    %185 = arith.select %183, %53, %184 : vector<2x5x5xi1>, vector<2x5x5xi32>
    %cst_62 = arith.constant dense<2147483647> : vector<2x5xi32>
    %186 = vector.multi_reduction <minsi>, %185, %cst_62 [2] : vector<2x5x5xi32> to vector<2x5xi32>
    %187 = vector.shape_cast %181 : vector<2x5x1xf32> to vector<2x5xf32>
    %188 = arith.addf %187, %165 : vector<2x5xf32>
    %189 = vector.extract_strided_slice %48 {offsets = [0, 6, 0], sizes = [2, 1, 5], strides = [1, 1, 1]} : vector<2x8x5xf32> to vector<2x1x5xf32>
    %190 = vector.shape_cast %189 : vector<2x1x5xf32> to vector<2x5xf32>
    %191 = math.exp %174 : vector<2x5xf32>
    %cst_63 = arith.constant dense<0.000000e+00> : vector<2x5xf32>
    %192 = tpu.matmul %191, %49, %cst_63 {dimension_numbers = #tpu.dot_dimension_numbers<[1], [0], [0], [1], [0, 0, 1, 1], [], []>, precision = #tpu.contract_precision<fp32>} : vector<2x5xf32>, vector<5x5xf32>, vector<2x5xf32> -> vector<2x5xf32>
    %193 = math.log %192 : vector<2x5xf32>
    %194 = arith.addf %190, %193 : vector<2x5xf32>
    %cst_64 = arith.constant dense<0xFF800000> : vector<2xf32>
    %195 = vector.multi_reduction <maximumf>, %194, %cst_64 [1] : vector<2x5xf32> to vector<2xf32>
    %196 = vector.shape_cast %195 : vector<2xf32> to vector<2x1xf32>
    %197 = arith.addf %172, %196 : vector<2x1xf32>
    %198 = vector.broadcast %196 : vector<2x1xf32> to vector<2x5xf32>
    %199 = arith.subf %194, %198 : vector<2x5xf32>
    %200 = vector.shape_cast %188 : vector<2x5xf32> to vector<2x1x5xf32>
    %201 = vector.shape_cast %50 : vector<5x5xf32> to vector<1x5x5xf32>
    %202 = vector.broadcast %200 : vector<2x1x5xf32> to vector<2x5x5xf32>
    %203 = vector.broadcast %201 : vector<1x5x5xf32> to vector<2x5x5xf32>
    %204 = arith.addf %202, %203 : vector<2x5x5xf32>
    %cst_65 = arith.constant dense<0xFF800000> : vector<2x5xf32>
    %205 = vector.multi_reduction <maximumf>, %204, %cst_65 [2] : vector<2x5x5xf32> to vector<2x5xf32>
    %206 = vector.shape_cast %205 : vector<2x5xf32> to vector<2x5x1xf32>
    %207 = vector.broadcast %206 : vector<2x5x1xf32> to vector<2x5x5xf32>
    %208 = arith.cmpf oeq, %204, %207 : vector<2x5x5xf32>
    %c5_i32_66 = arith.constant 5 : i32
    %209 = vector.broadcast %c5_i32_66 : i32 to vector<2x5x5xi32>
    %210 = arith.select %208, %53, %209 : vector<2x5x5xi1>, vector<2x5x5xi32>
    %cst_67 = arith.constant dense<2147483647> : vector<2x5xi32>
    %211 = vector.multi_reduction <minsi>, %210, %cst_67 [2] : vector<2x5x5xi32> to vector<2x5xi32>
    %212 = vector.shape_cast %206 : vector<2x5x1xf32> to vector<2x5xf32>
    %213 = arith.addf %212, %190 : vector<2x5xf32>
    %214 = vector.extract_strided_slice %48 {offsets = [0, 7, 0], sizes = [2, 1, 5], strides = [1, 1, 1]} : vector<2x8x5xf32> to vector<2x1x5xf32>
    %215 = vector.shape_cast %214 : vector<2x1x5xf32> to vector<2x5xf32>
    %216 = math.exp %199 : vector<2x5xf32>
    %cst_68 = arith.constant dense<0.000000e+00> : vector<2x5xf32>
    %217 = tpu.matmul %216, %49, %cst_68 {dimension_numbers = #tpu.dot_dimension_numbers<[1], [0], [0], [1], [0, 0, 1, 1], [], []>, precision = #tpu.contract_precision<fp32>} : vector<2x5xf32>, vector<5x5xf32>, vector<2x5xf32> -> vector<2x5xf32>
    %218 = math.log %217 : vector<2x5xf32>
    %219 = arith.addf %215, %218 : vector<2x5xf32>
    %cst_69 = arith.constant dense<0xFF800000> : vector<2xf32>
    %220 = vector.multi_reduction <maximumf>, %219, %cst_69 [1] : vector<2x5xf32> to vector<2xf32>
    %221 = vector.shape_cast %220 : vector<2xf32> to vector<2x1xf32>
    %222 = arith.addf %197, %221 : vector<2x1xf32>
    %223 = vector.broadcast %221 : vector<2x1xf32> to vector<2x5xf32>
    %224 = arith.subf %219, %223 : vector<2x5xf32>
    %225 = vector.shape_cast %213 : vector<2x5xf32> to vector<2x1x5xf32>
    %226 = vector.shape_cast %50 : vector<5x5xf32> to vector<1x5x5xf32>
    %227 = vector.broadcast %225 : vector<2x1x5xf32> to vector<2x5x5xf32>
    %228 = vector.broadcast %226 : vector<1x5x5xf32> to vector<2x5x5xf32>
    %229 = arith.addf %227, %228 : vector<2x5x5xf32>
    %cst_70 = arith.constant dense<0xFF800000> : vector<2x5xf32>
    %230 = vector.multi_reduction <maximumf>, %229, %cst_70 [2] : vector<2x5x5xf32> to vector<2x5xf32>
    %231 = vector.shape_cast %230 : vector<2x5xf32> to vector<2x5x1xf32>
    %232 = vector.broadcast %231 : vector<2x5x1xf32> to vector<2x5x5xf32>
    %233 = arith.cmpf oeq, %229, %232 : vector<2x5x5xf32>
    %c5_i32_71 = arith.constant 5 : i32
    %234 = vector.broadcast %c5_i32_71 : i32 to vector<2x5x5xi32>
    %235 = arith.select %233, %53, %234 : vector<2x5x5xi1>, vector<2x5x5xi32>
    %cst_72 = arith.constant dense<2147483647> : vector<2x5xi32>
    %236 = vector.multi_reduction <minsi>, %235, %cst_72 [2] : vector<2x5x5xi32> to vector<2x5xi32>
    %237 = vector.shape_cast %231 : vector<2x5x1xf32> to vector<2x5xf32>
    %238 = arith.addf %237, %215 : vector<2x5xf32>
    %cst_73 = arith.constant dense<0xFF800000> : vector<2xf32>
    %239 = vector.multi_reduction <maximumf>, %224, %cst_73 [1] : vector<2x5xf32> to vector<2xf32>
    %240 = vector.shape_cast %239 : vector<2xf32> to vector<2x1xf32>
    %241 = vector.broadcast %240 : vector<2x1xf32> to vector<2x5xf32>
    %242 = arith.subf %224, %241 : vector<2x5xf32>
    %243 = math.exp %242 : vector<2x5xf32>
    %cst_74 = arith.constant dense<0.000000e+00> : vector<2xf32>
    %244 = vector.multi_reduction <add>, %243, %cst_74 [1] : vector<2x5xf32> to vector<2xf32>
    %245 = vector.shape_cast %244 : vector<2xf32> to vector<2x1xf32>
    %246 = math.log %245 : vector<2x1xf32>
    %247 = arith.addf %240, %246 : vector<2x1xf32>
    %248 = arith.addf %222, %247 : vector<2x1xf32>
    %c0_75 = arith.constant 0 : index
    %c0_76 = arith.constant 0 : index
    %249 = vector.load %arg11[%c0_75, %c0_76] : memref<2x1xf32, #tpu.memory_space<vmem>>, vector<2x1xf32>
    tpu.vector_store %arg11[%c0_75, %c0_76], %248 {strides = array<i32>} : memref<2x1xf32, #tpu.memory_space<vmem>>, vector<2x1xf32>,
    %cst_77 = arith.constant dense<0xFF800000> : vector<2xf32>
    %250 = vector.multi_reduction <maximumf>, %238, %cst_77 [1] : vector<2x5xf32> to vector<2xf32>
    %251 = vector.shape_cast %250 : vector<2xf32> to vector<2x1xf32>
    %252 = vector.broadcast %251 : vector<2x1xf32> to vector<2x5xf32>
    %253 = arith.cmpf oeq, %238, %252 : vector<2x5xf32>
    %c5_i32_78 = arith.constant 5 : i32
    %254 = vector.broadcast %c5_i32_78 : i32 to vector<2x5xi32>
    %255 = arith.select %253, %52, %254 : vector<2x5xi1>, vector<2x5xi32>
    %cst_79 = arith.constant dense<2147483647> : vector<2xi32>
    %256 = vector.multi_reduction <minsi>, %255, %cst_79 [1] : vector<2x5xi32> to vector<2xi32>
    %257 = vector.shape_cast %256 : vector<2xi32> to vector<2x1xi32>
    %258 = vector.broadcast %257 : vector<2x1xi32> to vector<2x5xi32>
    %259 = arith.cmpi eq, %52, %258 : vector<2x5xi32>
    %c0_i32 = arith.constant 0 : i32
    %260 = vector.broadcast %c0_i32 : i32 to vector<2x5xi32>
    %261 = arith.select %259, %236, %260 : vector<2x5xi1>, vector<2x5xi32>
    %cst_80 = arith.constant dense<0> : vector<2xi32>
    %262 = vector.multi_reduction <add>, %261, %cst_80 [1] : vector<2x5xi32> to vector<2xi32>
    %263 = vector.shape_cast %262 : vector<2xi32> to vector<2x1xi32>
    %264 = vector.broadcast %263 : vector<2x1xi32> to vector<2x5xi32>
    %265 = arith.cmpi eq, %52, %264 : vector<2x5xi32>
    %c0_i32_81 = arith.constant 0 : i32
    %266 = vector.broadcast %c0_i32_81 : i32 to vector<2x5xi32>
    %267 = arith.select %265, %211, %266 : vector<2x5xi1>, vector<2x5xi32>
    %cst_82 = arith.constant dense<0> : vector<2xi32>
    %268 = vector.multi_reduction <add>, %267, %cst_82 [1] : vector<2x5xi32> to vector<2xi32>
    %269 = vector.shape_cast %268 : vector<2xi32> to vector<2x1xi32>
    %270 = vector.broadcast %269 : vector<2x1xi32> to vector<2x5xi32>
    %271 = arith.cmpi eq, %52, %270 : vector<2x5xi32>
    %c0_i32_83 = arith.constant 0 : i32
    %272 = vector.broadcast %c0_i32_83 : i32 to vector<2x5xi32>
    %273 = arith.select %271, %186, %272 : vector<2x5xi1>, vector<2x5xi32>
    %cst_84 = arith.constant dense<0> : vector<2xi32>
    %274 = vector.multi_reduction <add>, %273, %cst_84 [1] : vector<2x5xi32> to vector<2xi32>
    %275 = vector.shape_cast %274 : vector<2xi32> to vector<2x1xi32>
    %276 = vector.broadcast %275 : vector<2x1xi32> to vector<2x5xi32>
    %277 = arith.cmpi eq, %52, %276 : vector<2x5xi32>
    %c0_i32_85 = arith.constant 0 : i32
    %278 = vector.broadcast %c0_i32_85 : i32 to vector<2x5xi32>
    %279 = arith.select %277, %161, %278 : vector<2x5xi1>, vector<2x5xi32>
    %cst_86 = arith.constant dense<0> : vector<2xi32>
    %280 = vector.multi_reduction <add>, %279, %cst_86 [1] : vector<2x5xi32> to vector<2xi32>
    %281 = vector.shape_cast %280 : vector<2xi32> to vector<2x1xi32>
    %282 = vector.broadcast %281 : vector<2x1xi32> to vector<2x5xi32>
    %283 = arith.cmpi eq, %52, %282 : vector<2x5xi32>
    %c0_i32_87 = arith.constant 0 : i32
    %284 = vector.broadcast %c0_i32_87 : i32 to vector<2x5xi32>
    %285 = arith.select %283, %136, %284 : vector<2x5xi1>, vector<2x5xi32>
    %cst_88 = arith.constant dense<0> : vector<2xi32>
    %286 = vector.multi_reduction <add>, %285, %cst_88 [1] : vector<2x5xi32> to vector<2xi32>
    %287 = vector.shape_cast %286 : vector<2xi32> to vector<2x1xi32>
    %288 = vector.broadcast %287 : vector<2x1xi32> to vector<2x5xi32>
    %289 = arith.cmpi eq, %52, %288 : vector<2x5xi32>
    %c0_i32_89 = arith.constant 0 : i32
    %290 = vector.broadcast %c0_i32_89 : i32 to vector<2x5xi32>
    %291 = arith.select %289, %111, %290 : vector<2x5xi1>, vector<2x5xi32>
    %cst_90 = arith.constant dense<0> : vector<2xi32>
    %292 = vector.multi_reduction <add>, %291, %cst_90 [1] : vector<2x5xi32> to vector<2xi32>
    %293 = vector.shape_cast %292 : vector<2xi32> to vector<2x1xi32>
    %294 = vector.broadcast %293 : vector<2x1xi32> to vector<2x5xi32>
    %295 = arith.cmpi eq, %52, %294 : vector<2x5xi32>
    %c0_i32_91 = arith.constant 0 : i32
    %296 = vector.broadcast %c0_i32_91 : i32 to vector<2x5xi32>
    %297 = arith.select %295, %86, %296 : vector<2x5xi1>, vector<2x5xi32>
    %cst_92 = arith.constant dense<0> : vector<2xi32>
    %298 = vector.multi_reduction <add>, %297, %cst_92 [1] : vector<2x5xi32> to vector<2xi32>
    %299 = vector.shape_cast %298 : vector<2xi32> to vector<2x1xi32>
    %300 = tpu.concatenate %299, %293, %287, %281, %275, %269, %263, %257 in 1 : vector<2x1xi32>, vector<2x1xi32>, vector<2x1xi32>, vector<2x1xi32>, vector<2x1xi32>, vector<2x1xi32>, vector<2x1xi32>, vector<2x1xi32> -> vector<2x8xi32>
    %c0_93 = arith.constant 0 : index
    %c0_94 = arith.constant 0 : index
    %301 = vector.load %arg12[%c0_93, %c0_94] : memref<2x8xi32, #tpu.memory_space<vmem>>, vector<2x8xi32>
    tpu.vector_store %arg12[%c0_93, %c0_94], %300 {strides = array<i32>} : memref<2x8xi32, #tpu.memory_space<vmem>>, vector<2x8xi32>,
    return
  }
}

</mosaic_0001>

<llo_original>
// kernel: hmm_forward_pallas.1
$region0: #{hmm_forward_pallas.1}
  #allocation0 [shape = 'u32[]', space=smem, size = 0x4, offset = 0x4, fixed_abs, tag = 'smem constant byte address 0x4 - core index']
  #allocation1 [shape = 'u32[72,128]{1,0:T(1,128)}', space=vmem, size = 0x9000, scoped, tag = 'internal scratch']
  %s0 = inlined_call_operand.vmem [shape: f32[2,10,3], index: 0, kind: input, shape index: {}]
  %s1 = inlined_call_operand.vmem [shape: f32[6,32], index: 1, kind: input, shape index: {}]
  %s2 = inlined_call_operand.vmem [shape: f32[1,32], index: 2, kind: input, shape index: {}]
  %s3 = inlined_call_operand.vmem [shape: f32[32,32], index: 3, kind: input, shape index: {}]
  %s4 = inlined_call_operand.vmem [shape: f32[1,32], index: 4, kind: input, shape index: {}]
  %s5 = inlined_call_operand.vmem [shape: f32[32,30], index: 5, kind: input, shape index: {}]
  %s6 = inlined_call_operand.vmem [shape: f32[1,30], index: 6, kind: input, shape index: {}]
  %s7 = inlined_call_operand.vmem [shape: f32[15,5], index: 7, kind: input, shape index: {}]
  %s8 = inlined_call_operand.vmem [shape: f32[5,5], index: 8, kind: input, shape index: {}]
  %s9 = inlined_call_operand.vmem [shape: f32[5,5], index: 9, kind: input, shape index: {}]
  %s10 = inlined_call_operand.vmem [shape: f32[1,5], index: 10, kind: input, shape index: {}]
  %s11 = inlined_call_operand.vmem [shape: f32[2,1], index: 11, kind: output, shape index: {0}]
  %s12 = inlined_call_operand.hbm [shape: s32[2,8], index: 12, kind: output, shape index: {1}]
  %13 = xla_tuple %s11, %s12
  %s14 = sld [smem:[#allocation0]]
  $region62: #{hmm_forward_pallas.1} parent=0
    _
  %s16 = ssub.s32 1, %s14
  %s17 = scalar_select 0, %s16, %s14
  $region1: #{hmm_forward_pallas.1} parent=0
    #allocation2 [shape = 'u8[1024]{0}', space=vmem, size = 0x400, scoped, tag = 'output window, operand 1, single buffered']
    #allocation3 [shape = 's32[1]{0}', space=sflag, size = 0x4, scoped, tag = 'scoped memory for hmm_forward_pallas.1']
    %18 = vsyncpa [#allocation3], 0
    // Predicated region
    $region2: #{hmm_forward_pallas.1} parent=1 // pred_check
      _
    $region3: #{hmm_forward_pallas.1} parent=1 // pred_check_branch
      %20 = sbr.rel (0) target = $region5
    $region4: #{hmm_forward_pallas.1} parent=1 // pred_region
      _
    $region5: #{hmm_forward_pallas.1} parent=1 // pred_fallthru
      _
    // Predicated region
    $region6: #{hmm_forward_pallas.1} parent=1 // pred_check
      _
    $region7: #{hmm_forward_pallas.1} parent=1 // pred_check_branch
      %22 = sbr.rel (0) target = $region9
    $region8: #{hmm_forward_pallas.1} parent=1 // pred_region
      _
    $region9: #{hmm_forward_pallas.1} parent=1 // pred_fallthru
      _
    // Predicated region
    $region10: #{hmm_forward_pallas.1} parent=1 // pred_check
      _
    $region11: #{hmm_forward_pallas.1} parent=1 // pred_check_branch
      %24 = sbr.rel (0) target = $region13
    $region12: #{hmm_forward_pallas.1} parent=1 // pred_region
      _
    $region13: #{hmm_forward_pallas.1} parent=1 // pred_fallthru
      _
    // Predicated region
    $region14: #{hmm_forward_pallas.1} parent=1 // pred_check
      _
    $region15: #{hmm_forward_pallas.1} parent=1 // pred_check_branch
      %26 = sbr.rel (0) target = $region17
    $region16: #{hmm_forward_pallas.1} parent=1 // pred_region
      _
    $region17: #{hmm_forward_pallas.1} parent=1 // pred_fallthru
      _
    // Predicated region
    $region18: #{hmm_forward_pallas.1} parent=1 // pred_check
      _
    $region19: #{hmm_forward_pallas.1} parent=1 // pred_check_branch
      %28 = sbr.rel (0) target = $region21
    $region20: #{hmm_forward_pallas.1} parent=1 // pred_region
      _
    $region21: #{hmm_forward_pallas.1} parent=1 // pred_fallthru
      _
    // Predicated region
    $region22: #{hmm_forward_pallas.1} parent=1 // pred_check
      _
    $region23: #{hmm_forward_pallas.1} parent=1 // pred_check_branch
      %30 = sbr.rel (0) target = $region25
    $region24: #{hmm_forward_pallas.1} parent=1 // pred_region
      _
    $region25: #{hmm_forward_pallas.1} parent=1 // pred_fallthru
      _
    // Predicated region
    $region26: #{hmm_forward_pallas.1} parent=1 // pred_check
      _
    $region27: #{hmm_forward_pallas.1} parent=1 // pred_check_branch
      %32 = sbr.rel (0) target = $region29
    $region28: #{hmm_forward_pallas.1} parent=1 // pred_region
      _
    $region29: #{hmm_forward_pallas.1} parent=1 // pred_fallthru
      _
    // Predicated region
    $region30: #{hmm_forward_pallas.1} parent=1 // pred_check
      _
    $region31: #{hmm_forward_pallas.1} parent=1 // pred_check_branch
      %34 = sbr.rel (0) target = $region33
    $region32: #{hmm_forward_pallas.1} parent=1 // pred_region
      _
    $region33: #{hmm_forward_pallas.1} parent=1 // pred_fallthru
      _
    // Predicated region
    $region34: #{hmm_forward_pallas.1} parent=1 // pred_check
      _
    $region35: #{hmm_forward_pallas.1} parent=1 // pred_check_branch
      %36 = sbr.rel (0) target = $region37
    $region36: #{hmm_forward_pallas.1} parent=1 // pred_region
      _
    $region37: #{hmm_forward_pallas.1} parent=1 // pred_fallthru
      _
    // Predicated region
    $region38: #{hmm_forward_pallas.1} parent=1 // pred_check
      _
    $region39: #{hmm_forward_pallas.1} parent=1 // pred_check_branch
      %38 = sbr.rel (0) target = $region41
    $region40: #{hmm_forward_pallas.1} parent=1 // pred_region
      _
    $region41: #{hmm_forward_pallas.1} parent=1 // pred_fallthru
      _
    // Predicated region
    $region42: #{hmm_forward_pallas.1} parent=1 // pred_check
      _
    $region43: #{hmm_forward_pallas.1} parent=1 // pred_check_branch
      %40 = sbr.rel (0) target = $region45
    $region44: #{hmm_forward_pallas.1} parent=1 // pred_region
      _
    $region45: #{hmm_forward_pallas.1} parent=1 // pred_fallthru
      _
    %v41 = vld [vmem:[%s0] sm:$0xff]
    %v42 = vld [vmem:[%s0 + $0x10] sm:$0xff]
    %v43 = vld [vmem:[%s1] sm:$0x7]
    %v44 = vld [vmem:[%s0 + $0x1] sm:$0xff]
    %v45 = vld [vmem:[%s0 + $0x11] sm:$0xff]
    %v46 = vld [vmem:[%s1 + $0x3] sm:$0x7]
    %vm47 = vcmask 23552
    %v49 = vsel %vm47, %v44, 0
    %v52 = vsel %vm47, %v45, 0
    %vm54 = vcmask 1042432
    %v56 = vsel %vm54, %v46, 0
    %58 = vmatpush.msra.mxu0 0.0
    %59 = vmatpush.msra.mxu0 0.0
    %60 = vmatpush.msra.mxu0 0.0
    %61 = vmatpush.msra.mxu0 0.0
    %62 = vmatpush.msra.mxu0 0.0
    %63 = vmatpush.msra.mxu0 0.0
    %64 = vmatpush.msra.mxu0 0.0
    %65 = vmatpush.msra.mxu0 0.0
    %66 = vmatpush.msra.mxu0 0.0
    %67 = vmatpush.msra.mxu0 0.0
    %68 = vmatpush.msra.mxu0 0.0
    %69 = vmatpush.msra.mxu0 0.0
    %70 = vmatpush.msra.mxu0 0.0
    %71 = vmatpush.msra.mxu0 0.0
    %72 = vmatpush.msra.mxu0 0.0
    %73 = vmatpush.msra.mxu0 %v56
    %74 = vmatmul.f32.gmra.mxu0 %v49
    %v75 = vpop.f32.mrf.mxu0
    %v76 = vadd.f32 0.0, %v75
    %77 = vmatmul.f32.gmra.mxu0 %v52
    %v78 = vpop.f32.mrf.mxu0
    %v79 = vadd.f32 0.0, %v78
    %80 = vdwg.mxu0
    %v82 = vsel %vm47, %v41, 0
    %v85 = vsel %vm47, %v42, 0
    %v88 = vsel %vm54, %v43, 0
    %90 = vmatpush.msra.mxu0 0.0
    %91 = vmatpush.msra.mxu0 0.0
    %92 = vmatpush.msra.mxu0 0.0
    %93 = vmatpush.msra.mxu0 0.0
    %94 = vmatpush.msra.mxu0 0.0
    %95 = vmatpush.msra.mxu0 0.0
    %96 = vmatpush.msra.mxu0 0.0
    %97 = vmatpush.msra.mxu0 0.0
    %98 = vmatpush.msra.mxu0 0.0
    %99 = vmatpush.msra.mxu0 0.0
    %100 = vmatpush.msra.mxu0 0.0
    %101 = vmatpush.msra.mxu0 0.0
    %102 = vmatpush.msra.mxu0 0.0
    %103 = vmatpush.msra.mxu0 0.0
    %104 = vmatpush.msra.mxu0 0.0
    %105 = vmatpush.msra.mxu0 %v88
    %106 = vmatmul.f32.gmra.mxu0 %v82
    %v107 = vpop.f32.mrf.mxu0
    %v108 = vadd.f32 %v76, %v107
    %109 = vmatmul.f32.gmra.mxu0 %v85
    %v110 = vpop.f32.mrf.mxu0
    %v111 = vadd.f32 %v79, %v110
    %112 = vdwg.mxu0
    %v113 = vld [vmem:[%s2] sm:$0x1]
    %v115 = vperm.slane %v113, 0
    %v117 = vadd.f32 %v108, %v115
    %v118 = vadd.f32 %v111, %v115
    %v119 = vmax.f32 %v117, 0.0
    %v120 = vmax.f32 %v118, 0.0
    %v121 = vld [vmem:[%s3] sm:$0xff]
    %v122 = vld [vmem:[%s3 + $0x8] sm:$0xff]
    %v123 = vld [vmem:[%s3 + $0x10] sm:$0xff]
    %v124 = vld [vmem:[%s3 + $0x18] sm:$0xff]
    %v125 = vld [vmem:[%s4] sm:$0x1]
    %v127 = vperm.slane %v125, 0
    %vm129 = vcmask 261120
    %v131 = vsel %vm129, %v119, 0
    %v134 = vsel %vm129, %v120, 0
    %136 = vmatpush.msra.mxu0 0.0
    %137 = vmatpush.msra.mxu0 0.0
    %138 = vmatpush.msra.mxu0 0.0
    %139 = vmatpush.msra.mxu0 0.0
    %140 = vmatpush.msra.mxu0 0.0
    %141 = vmatpush.msra.mxu0 0.0
    %142 = vmatpush.msra.mxu0 0.0
    %143 = vmatpush.msra.mxu0 0.0
    %144 = vmatpush.msra.mxu0 0.0
    %145 = vmatpush.msra.mxu0 0.0
    %146 = vmatpush.msra.mxu0 0.0
    %147 = vmatpush.msra.mxu0 0.0
    %148 = vmatpush.msra.mxu0 %v124
    %149 = vmatpush.msra.mxu0 %v123
    %150 = vmatpush.msra.mxu0 %v122
    %151 = vmatpush.msra.mxu0 %v121
    %152 = vmatmul.f32.gmra.mxu0 %v131
    %v153 = vpop.f32.mrf.mxu0
    %v154 = vadd.f32 %v127, %v153
    %155 = vmatmul.f32.gmra.mxu0 %v134
    %v156 = vpop.f32.mrf.mxu0
    %v157 = vadd.f32 %v127, %v156
    %158 = vdwg.mxu0
    %v159 = vmax.f32 %v154, 0.0
    %v160 = vmax.f32 %v157, 0.0
    %v161 = vld [vmem:[%s5] sm:$0xff]
    %v162 = vld [vmem:[%s5 + $0x8] sm:$0xff]
    %v163 = vld [vmem:[%s5 + $0x10] sm:$0xff]
    %v164 = vld [vmem:[%s5 + $0x18] sm:$0xff]
    %v165 = vld [vmem:[%s6] sm:$0x1]
    %v167 = vperm.slane %v165, 0
    %v170 = vsel %vm129, %v159, 0
    %v173 = vsel %vm129, %v160, 0
    %175 = vmatpush.msra.mxu0 0.0
    %176 = vmatpush.msra.mxu0 0.0
    %177 = vmatpush.msra.mxu0 0.0
    %178 = vmatpush.msra.mxu0 0.0
    %179 = vmatpush.msra.mxu0 0.0
    %180 = vmatpush.msra.mxu0 0.0
    %181 = vmatpush.msra.mxu0 0.0
    %182 = vmatpush.msra.mxu0 0.0
    %183 = vmatpush.msra.mxu0 0.0
    %184 = vmatpush.msra.mxu0 0.0
    %185 = vmatpush.msra.mxu0 0.0
    %186 = vmatpush.msra.mxu0 0.0
    %187 = vmatpush.msra.mxu0 %v164
    %188 = vmatpush.msra.mxu0 %v163
    %189 = vmatpush.msra.mxu0 %v162
    %190 = vmatpush.msra.mxu0 %v161
    %191 = vmatmul.f32.gmra.mxu0 %v170
    %v192 = vpop.f32.mrf.mxu0
    %v193 = vadd.f32 %v167, %v192
    %194 = vmatmul.f32.gmra.mxu0 %v173
    %v195 = vpop.f32.mrf.mxu0
    %v196 = vadd.f32 %v167, %v195
    %197 = vdwg.mxu0
    %v198 = vld [vmem:[%s0 + $0x2] sm:$0xff]
    %v199 = vld [vmem:[%s0 + $0x12] sm:$0xff]
    %202 = vrot.lane.b32.xlu0 %v198, 3
    %v203 = vpop.permute.xlu0 %202
    %204 = vrot.lane.b32.xlu0 %v199, 3
    %v205 = vpop.permute.xlu0 %204
    %208 = vrot.lane.b32.xlu0 %v198, 6
    %v209 = vpop.permute.xlu0 %208
    %210 = vrot.lane.b32.xlu0 %v199, 6
    %v211 = vpop.permute.xlu0 %210
    %214 = vrot.lane.b32.xlu0 %v198, 9
    %v215 = vpop.permute.xlu0 %214
    %216 = vrot.lane.b32.xlu0 %v199, 9
    %v217 = vpop.permute.xlu0 %216
    %220 = vrot.lane.b32.xlu0 %v198, 12
    %v221 = vpop.permute.xlu0 %220
    %222 = vrot.lane.b32.xlu0 %v199, 12
    %v223 = vpop.permute.xlu0 %222
    %v226 = vsel %vm47, %v198, %v203
    %v227 = vsel %vm47, %v199, %v205
    %vm228 = vcmask 48128
    %v229 = vsel %vm228, %v226, %v209
    %v230 = vsel %vm228, %v227, %v211
    %vm231 = vcmask 72704
    %v232 = vsel %vm231, %v229, %v215
    %v233 = vsel %vm231, %v230, %v217
    %vm234 = vcmask 97280
    %v235 = vsel %vm234, %v232, %v221
    %v236 = vsel %vm234, %v233, %v223
    %v237 = vsub.f32 %v235, %v193
    %v238 = vsub.f32 %v236, %v196
    %v239 = vmul.f32 %v237, -0.5
    %v240 = vmul.f32 %v238, -0.5
    %v241 = vmul.f32 %v239, %v237
    %v242 = vmul.f32 %v240, %v238
    %v243 = vsub.f32 0.0, %v193
    %v244 = vsub.f32 0.0, %v196
    %v245 = vmul.f32 %v243, 1.442695
    %v246 = vpow.pop %v245
    %v247 = vmul.f32 %v244, 1.442695
    %v248 = vpow.pop %v247
    %251 = vrot.lane.b32.xlu0 %v246, 113
    %v252 = vpop.permute.xlu0 %251
    %253 = vrot.lane.b32.xlu0 %v248, 113
    %v254 = vpop.permute.xlu0 %253
    %v257 = vmul.f32 %v241, %v252
    %v258 = vmul.f32 %v242, %v254
    %v259 = vmul.f32 %v193, 0.5
    %v260 = vmul.f32 %v196, 0.5
    %263 = vrot.lane.b32.xlu0 %v259, 113
    %v264 = vpop.permute.xlu0 %263
    %265 = vrot.lane.b32.xlu0 %v260, 113
    %v266 = vpop.permute.xlu0 %265
    %v269 = vsub.f32 %v257, %v264
    %v270 = vsub.f32 %v258, %v266
    %v271 = vsub.f32 %v269, 0.9189385
    %v272 = vsub.f32 %v270, 0.9189385
    %v273 = vld [vmem:[%s7] sm:$0xff]
    %v274 = vld [vmem:[%s7 + $0x8] sm:$0x7f]
    %vm275 = vcmask 121856
    %v277 = vsel %vm275, %v271, 0
    %v280 = vsel %vm275, %v272, 0
    %vm282 = vcmask 1046528
    %v284 = vsel %vm282, %v274, 0
    %286 = vmatpush.msra.mxu0 0.0
    %287 = vmatpush.msra.mxu0 0.0
    %288 = vmatpush.msra.mxu0 0.0
    %289 = vmatpush.msra.mxu0 0.0
    %290 = vmatpush.msra.mxu0 0.0
    %291 = vmatpush.msra.mxu0 0.0
    %292 = vmatpush.msra.mxu0 0.0
    %293 = vmatpush.msra.mxu0 0.0
    %294 = vmatpush.msra.mxu0 0.0
    %295 = vmatpush.msra.mxu0 0.0
    %296 = vmatpush.msra.mxu0 0.0
    %297 = vmatpush.msra.mxu0 0.0
    %298 = vmatpush.msra.mxu0 0.0
    %299 = vmatpush.msra.mxu0 0.0
    %v300 = vand.u32 %v284, 4294901760
    %301 = vmatpush.msra.mxu0 %v300
    %v302 = vand.u32 %v273, 4294901760
    %303 = vmatpush.msra.mxu0 %v302
    %v304 = vand.u32 %v277, 4294901760
    %v305 = vsub.f32 %v277, %v304
    %v306 = vand.u32 %v305, 4294901760
    %v307 = vsub.f32 %v305, %v306
    %v308 = vand.u32 %v307, 4294901760
    %309 = vmatmul.f32.gmra.mxu0 %v308
    %v310 = vpop.f32.mrf.mxu0
    %v311 = vadd.f32 0.0, %v310
    %v312 = vand.u32 %v280, 4294901760
    %v313 = vsub.f32 %v280, %v312
    %v314 = vand.u32 %v313, 4294901760
    %v315 = vsub.f32 %v313, %v314
    %v316 = vand.u32 %v315, 4294901760
    %317 = vmatmul.f32.gmra.mxu0 %v316
    %v318 = vpop.f32.mrf.mxu0
    %v319 = vadd.f32 0.0, %v318
    %320 = vdwg.mxu0
    %321 = vmatpush.msra.mxu0 0.0
    %322 = vmatpush.msra.mxu0 0.0
    %323 = vmatpush.msra.mxu0 0.0
    %324 = vmatpush.msra.mxu0 0.0
    %325 = vmatpush.msra.mxu0 0.0
    %326 = vmatpush.msra.mxu0 0.0
    %327 = vmatpush.msra.mxu0 0.0
    %328 = vmatpush.msra.mxu0 0.0
    %329 = vmatpush.msra.mxu0 0.0
    %330 = vmatpush.msra.mxu0 0.0
    %331 = vmatpush.msra.mxu0 0.0
    %332 = vmatpush.msra.mxu0 0.0
    %333 = vmatpush.msra.mxu0 0.0
    %334 = vmatpush.msra.mxu0 0.0
    %v335 = vand.u32 %v284, 4294901760
    %v336 = vsub.f32 %v284, %v335
    %v337 = vand.u32 %v336, 4294901760
    %v338 = vsub.f32 %v336, %v337
    %v339 = vand.u32 %v338, 4294901760
    %340 = vmatpush.msra.mxu0 %v339
    %v341 = vand.u32 %v273, 4294901760
    %v342 = vsub.f32 %v273, %v341
    %v343 = vand.u32 %v342, 4294901760
    %v344 = vsub.f32 %v342, %v343
    %v345 = vand.u32 %v344, 4294901760
    %346 = vmatpush.msra.mxu0 %v345
    %v347 = vand.u32 %v277, 4294901760
    %348 = vmatmul.f32.gmra.mxu0 %v347
    %v349 = vpop.f32.mrf.mxu0
    %v350 = vadd.f32 %v311, %v349
    %v351 = vand.u32 %v280, 4294901760
    %352 = vmatmul.f32.gmra.mxu0 %v351
    %v353 = vpop.f32.mrf.mxu0
    %v354 = vadd.f32 %v319, %v353
    %355 = vdwg.mxu0
    %356 = vmatpush.msra.mxu0 0.0
    %357 = vmatpush.msra.mxu0 0.0
    %358 = vmatpush.msra.mxu0 0.0
    %359 = vmatpush.msra.mxu0 0.0
    %360 = vmatpush.msra.mxu0 0.0
    %361 = vmatpush.msra.mxu0 0.0
    %362 = vmatpush.msra.mxu0 0.0
    %363 = vmatpush.msra.mxu0 0.0
    %364 = vmatpush.msra.mxu0 0.0
    %365 = vmatpush.msra.mxu0 0.0
    %366 = vmatpush.msra.mxu0 0.0
    %367 = vmatpush.msra.mxu0 0.0
    %368 = vmatpush.msra.mxu0 0.0
    %369 = vmatpush.msra.mxu0 0.0
    %v370 = vand.u32 %v284, 4294901760
    %v371 = vsub.f32 %v284, %v370
    %372 = vmatpush.msra.mxu0 %v371
    %v373 = vand.u32 %v273, 4294901760
    %v374 = vsub.f32 %v273, %v373
    %375 = vmatpush.msra.mxu0 %v374
    %v376 = vand.u32 %v277, 4294901760
    %v377 = vsub.f32 %v277, %v376
    %378 = vmatmul.f32.gmra.mxu0 %v377
    %v379 = vpop.f32.mrf.mxu0
    %v380 = vadd.f32 %v350, %v379
    %v381 = vand.u32 %v280, 4294901760
    %v382 = vsub.f32 %v280, %v381
    %383 = vmatmul.f32.gmra.mxu0 %v382
    %v384 = vpop.f32.mrf.mxu0
    %v385 = vadd.f32 %v354, %v384
    %386 = vdwg.mxu0
    %387 = vmatpush.msra.mxu0 0.0
    %388 = vmatpush.msra.mxu0 0.0
    %389 = vmatpush.msra.mxu0 0.0
    %390 = vmatpush.msra.mxu0 0.0
    %391 = vmatpush.msra.mxu0 0.0
    %392 = vmatpush.msra.mxu0 0.0
    %393 = vmatpush.msra.mxu0 0.0
    %394 = vmatpush.msra.mxu0 0.0
    %395 = vmatpush.msra.mxu0 0.0
    %396 = vmatpush.msra.mxu0 0.0
    %397 = vmatpush.msra.mxu0 0.0
    %398 = vmatpush.msra.mxu0 0.0
    %399 = vmatpush.msra.mxu0 0.0
    %400 = vmatpush.msra.mxu0 0.0
    %v401 = vand.u32 %v284, 4294901760
    %402 = vmatpush.msra.mxu0 %v401
    %v403 = vand.u32 %v273, 4294901760
    %404 = vmatpush.msra.mxu0 %v403
    %v405 = vand.u32 %v277, 4294901760
    %v406 = vsub.f32 %v277, %v405
    %v407 = vand.u32 %v406, 4294901760
    %408 = vmatmul.f32.gmra.mxu0 %v407
    %v409 = vpop.f32.mrf.mxu0
    %v410 = vadd.f32 %v380, %v409
    %v411 = vand.u32 %v280, 4294901760
    %v412 = vsub.f32 %v280, %v411
    %v413 = vand.u32 %v412, 4294901760
    %414 = vmatmul.f32.gmra.mxu0 %v413
    %v415 = vpop.f32.mrf.mxu0
    %v416 = vadd.f32 %v385, %v415
    %417 = vdwg.mxu0
    %418 = vmatpush.msra.mxu0 0.0
    %419 = vmatpush.msra.mxu0 0.0
    %420 = vmatpush.msra.mxu0 0.0
    %421 = vmatpush.msra.mxu0 0.0
    %422 = vmatpush.msra.mxu0 0.0
    %423 = vmatpush.msra.mxu0 0.0
    %424 = vmatpush.msra.mxu0 0.0
    %425 = vmatpush.msra.mxu0 0.0
    %426 = vmatpush.msra.mxu0 0.0
    %427 = vmatpush.msra.mxu0 0.0
    %428 = vmatpush.msra.mxu0 0.0
    %429 = vmatpush.msra.mxu0 0.0
    %430 = vmatpush.msra.mxu0 0.0
    %431 = vmatpush.msra.mxu0 0.0
    %v432 = vand.u32 %v284, 4294901760
    %v433 = vsub.f32 %v284, %v432
    %v434 = vand.u32 %v433, 4294901760
    %435 = vmatpush.msra.mxu0 %v434
    %v436 = vand.u32 %v273, 4294901760
    %v437 = vsub.f32 %v273, %v436
    %v438 = vand.u32 %v437, 4294901760
    %439 = vmatpush.msra.mxu0 %v438
    %v440 = vand.u32 %v277, 4294901760
    %441 = vmatmul.f32.gmra.mxu0 %v440
    %v442 = vpop.f32.mrf.mxu0
    %v443 = vadd.f32 %v410, %v442
    %v444 = vand.u32 %v280, 4294901760
    %445 = vmatmul.f32.gmra.mxu0 %v444
    %v446 = vpop.f32.mrf.mxu0
    %v447 = vadd.f32 %v416, %v446
    %448 = vdwg.mxu0
    %449 = vmatpush.msra.mxu0 0.0
    %450 = vmatpush.msra.mxu0 0.0
    %451 = vmatpush.msra.mxu0 0.0
    %452 = vmatpush.msra.mxu0 0.0
    %453 = vmatpush.msra.mxu0 0.0
    %454 = vmatpush.msra.mxu0 0.0
    %455 = vmatpush.msra.mxu0 0.0
    %456 = vmatpush.msra.mxu0 0.0
    %457 = vmatpush.msra.mxu0 0.0
    %458 = vmatpush.msra.mxu0 0.0
    %459 = vmatpush.msra.mxu0 0.0
    %460 = vmatpush.msra.mxu0 0.0
    %461 = vmatpush.msra.mxu0 0.0
    %462 = vmatpush.msra.mxu0 0.0
    %v463 = vand.u32 %v284, 4294901760
    %464 = vmatpush.msra.mxu0 %v463
    %v465 = vand.u32 %v273, 4294901760
    %466 = vmatpush.msra.mxu0 %v465
    %v467 = vand.u32 %v277, 4294901760
    %468 = vmatmul.f32.gmra.mxu0 %v467
    %v469 = vpop.f32.mrf.mxu0
    %v470 = vadd.f32 %v443, %v469
    %v471 = vand.u32 %v280, 4294901760
    %472 = vmatmul.f32.gmra.mxu0 %v471
    %v473 = vpop.f32.mrf.mxu0
    %v474 = vadd.f32 %v447, %v473
    %475 = vdwg.mxu0
    %v476 = vld [vmem:[%s8] sm:$0x1f]
    %v477 = vld [vmem:[%s9] sm:$0x1f]
    %v478 = vld [vmem:[%s10] sm:$0x1]
    %v479 = vlaneseq
    %v480 = vand.u32 %v479, 127
    %v482 = vperm.slane %v478, 0
    %v484 = vadd.f32 %v470, %v482
    %v485 = vadd.f32 %v474, %v482
    %v488 = vrot.slane %v485, 7
    %vm489 = vcmask 1041409
    %v490 = vsel %vm489, %v488, %v484
    %vm492 = vcmask 33792
    %v493 = vsel %vm492, %v490, -inf
    %494 = vmax.xlane.f32.xlu0 %v493
    %v495 = vpop.xlane.xlu0 %494
    %v497 = vrot.slane %v495, 1
    %v500 = vsub.f32 %v484, %v495
    %v501 = vsub.f32 %v485, %v497
    %v502 = vmul.f32 %v500, 1.442695
    %v503 = vpow.pop %v502
    %v504 = vmul.f32 %v501, 1.442695
    %v505 = vpow.pop %v504
    %v508 = vrot.slane %v505, 7
    %v509 = vsel %vm489, %v508, %v503
    %vm510 = vcmask 39936
    %v511 = vsel %vm510, %v509, 0
    %vm513 = vcmask 1044480
    %v515 = vsel %vm513, %v476, 0
    %517 = vmatpush.msra.mxu0 0.0
    %518 = vmatpush.msra.mxu0 0.0
    %519 = vmatpush.msra.mxu0 0.0
    %520 = vmatpush.msra.mxu0 0.0
    %521 = vmatpush.msra.mxu0 0.0
    %522 = vmatpush.msra.mxu0 0.0
    %523 = vmatpush.msra.mxu0 0.0
    %524 = vmatpush.msra.mxu0 0.0
    %525 = vmatpush.msra.mxu0 0.0
    %526 = vmatpush.msra.mxu0 0.0
    %527 = vmatpush.msra.mxu0 0.0
    %528 = vmatpush.msra.mxu0 0.0
    %529 = vmatpush.msra.mxu0 0.0
    %530 = vmatpush.msra.mxu0 0.0
    %531 = vmatpush.msra.mxu0 0.0
    %v532 = vand.u32 %v515, 4294901760
    %533 = vmatpush.msra.mxu0 %v532
    %v534 = vand.u32 %v511, 4294901760
    %v535 = vsub.f32 %v511, %v534
    %v536 = vand.u32 %v535, 4294901760
    %v537 = vsub.f32 %v535, %v536
    %v538 = vand.u32 %v537, 4294901760
    %539 = vmatmul.f32.gmra.mxu0 %v538
    %v540 = vpop.f32.mrf.mxu0
    %v541 = vadd.f32 0.0, %v540
    %542 = vdwg.mxu0
    %543 = vmatpush.msra.mxu0 0.0
    %544 = vmatpush.msra.mxu0 0.0
    %545 = vmatpush.msra.mxu0 0.0
    %546 = vmatpush.msra.mxu0 0.0
    %547 = vmatpush.msra.mxu0 0.0
    %548 = vmatpush.msra.mxu0 0.0
    %549 = vmatpush.msra.mxu0 0.0
    %550 = vmatpush.msra.mxu0 0.0
    %551 = vmatpush.msra.mxu0 0.0
    %552 = vmatpush.msra.mxu0 0.0
    %553 = vmatpush.msra.mxu0 0.0
    %554 = vmatpush.msra.mxu0 0.0
    %555 = vmatpush.msra.mxu0 0.0
    %556 = vmatpush.msra.mxu0 0.0
    %557 = vmatpush.msra.mxu0 0.0
    %v558 = vand.u32 %v515, 4294901760
    %v559 = vsub.f32 %v515, %v558
    %v560 = vand.u32 %v559, 4294901760
    %v561 = vsub.f32 %v559, %v560
    %v562 = vand.u32 %v561, 4294901760
    %563 = vmatpush.msra.mxu0 %v562
    %v564 = vand.u32 %v511, 4294901760
    %565 = vmatmul.f32.gmra.mxu0 %v564
    %v566 = vpop.f32.mrf.mxu0
    %v567 = vadd.f32 %v541, %v566
    %568 = vdwg.mxu0
    %569 = vmatpush.msra.mxu0 0.0
    %570 = vmatpush.msra.mxu0 0.0
    %571 = vmatpush.msra.mxu0 0.0
    %572 = vmatpush.msra.mxu0 0.0
    %573 = vmatpush.msra.mxu0 0.0
    %574 = vmatpush.msra.mxu0 0.0
    %575 = vmatpush.msra.mxu0 0.0
    %576 = vmatpush.msra.mxu0 0.0
    %577 = vmatpush.msra.mxu0 0.0
    %578 = vmatpush.msra.mxu0 0.0
    %579 = vmatpush.msra.mxu0 0.0
    %580 = vmatpush.msra.mxu0 0.0
    %581 = vmatpush.msra.mxu0 0.0
    %582 = vmatpush.msra.mxu0 0.0
    %583 = vmatpush.msra.mxu0 0.0
    %v584 = vand.u32 %v515, 4294901760
    %v585 = vsub.f32 %v515, %v584
    %586 = vmatpush.msra.mxu0 %v585
    %v587 = vand.u32 %v511, 4294901760
    %v588 = vsub.f32 %v511, %v587
    %589 = vmatmul.f32.gmra.mxu0 %v588
    %v590 = vpop.f32.mrf.mxu0
    %v591 = vadd.f32 %v567, %v590
    %592 = vdwg.mxu0
    %593 = vmatpush.msra.mxu0 0.0
    %594 = vmatpush.msra.mxu0 0.0
    %595 = vmatpush.msra.mxu0 0.0
    %596 = vmatpush.msra.mxu0 0.0
    %597 = vmatpush.msra.mxu0 0.0
    %598 = vmatpush.msra.mxu0 0.0
    %599 = vmatpush.msra.mxu0 0.0
    %600 = vmatpush.msra.mxu0 0.0
    %601 = vmatpush.msra.mxu0 0.0
    %602 = vmatpush.msra.mxu0 0.0
    %603 = vmatpush.msra.mxu0 0.0
    %604 = vmatpush.msra.mxu0 0.0
    %605 = vmatpush.msra.mxu0 0.0
    %606 = vmatpush.msra.mxu0 0.0
    %607 = vmatpush.msra.mxu0 0.0
    %v608 = vand.u32 %v515, 4294901760
    %609 = vmatpush.msra.mxu0 %v608
    %v610 = vand.u32 %v511, 4294901760
    %v611 = vsub.f32 %v511, %v610
    %v612 = vand.u32 %v611, 4294901760
    %613 = vmatmul.f32.gmra.mxu0 %v612
    %v614 = vpop.f32.mrf.mxu0
    %v615 = vadd.f32 %v591, %v614
    %616 = vdwg.mxu0
    %617 = vmatpush.msra.mxu0 0.0
    %618 = vmatpush.msra.mxu0 0.0
    %619 = vmatpush.msra.mxu0 0.0
    %620 = vmatpush.msra.mxu0 0.0
    %621 = vmatpush.msra.mxu0 0.0
    %622 = vmatpush.msra.mxu0 0.0
    %623 = vmatpush.msra.mxu0 0.0
    %624 = vmatpush.msra.mxu0 0.0
    %625 = vmatpush.msra.mxu0 0.0
    %626 = vmatpush.msra.mxu0 0.0
    %627 = vmatpush.msra.mxu0 0.0
    %628 = vmatpush.msra.mxu0 0.0
    %629 = vmatpush.msra.mxu0 0.0
    %630 = vmatpush.msra.mxu0 0.0
    %631 = vmatpush.msra.mxu0 0.0
    %v632 = vand.u32 %v515, 4294901760
    %v633 = vsub.f32 %v515, %v632
    %v634 = vand.u32 %v633, 4294901760
    %635 = vmatpush.msra.mxu0 %v634
    %v636 = vand.u32 %v511, 4294901760
    %637 = vmatmul.f32.gmra.mxu0 %v636
    %v638 = vpop.f32.mrf.mxu0
    %v639 = vadd.f32 %v615, %v638
    %640 = vdwg.mxu0
    %641 = vmatpush.msra.mxu0 0.0
    %642 = vmatpush.msra.mxu0 0.0
    %643 = vmatpush.msra.mxu0 0.0
    %644 = vmatpush.msra.mxu0 0.0
    %645 = vmatpush.msra.mxu0 0.0
    %646 = vmatpush.msra.mxu0 0.0
    %647 = vmatpush.msra.mxu0 0.0
    %648 = vmatpush.msra.mxu0 0.0
    %649 = vmatpush.msra.mxu0 0.0
    %650 = vmatpush.msra.mxu0 0.0
    %651 = vmatpush.msra.mxu0 0.0
    %652 = vmatpush.msra.mxu0 0.0
    %653 = vmatpush.msra.mxu0 0.0
    %654 = vmatpush.msra.mxu0 0.0
    %655 = vmatpush.msra.mxu0 0.0
    %v656 = vand.u32 %v515, 4294901760
    %657 = vmatpush.msra.mxu0 %v656
    %v658 = vand.u32 %v511, 4294901760
    %659 = vmatmul.f32.gmra.mxu0 %v658
    %v660 = vpop.f32.mrf.mxu0
    %v661 = vadd.f32 %v639, %v660
    %662 = vdwg.mxu0
    %v663 = vlog2.pop %v661
    %v664 = vmul.f32 %v663, 0.6931472
    %v666 = vrot.slane %v664, 7
    %v669 = vadd.f32 %v470, %v666
    %v670 = vadd.f32 %v474, %v664
    %v673 = vrot.slane %v670, 7
    %vm674 = vcmask 1042434
    %v675 = vsel %vm674, %v673, %v669
    %vm677 = vcmask 34817
    %v678 = vsel %vm677, %v675, -inf
    %679 = vmax.xlane.f32.xlu0 %v678
    %v680 = vpop.xlane.xlu0 %679
    %v682 = vrot.slane %v680, 1
    %v684 = vadd.f32 %v495, %v682
    %v686 = vsub.f32 %v669, %v680
    %v687 = vsub.f32 %v670, %v682
    %v688 = vperm.slane %v484, 0
    %v689 = vperm.slane %v485, 0
    %v690 = vadd.f32 %v688, %v477
    %v691 = vadd.f32 %v689, %v477
    %vm692 = vcmask 36864
    %v693 = vsel %vm692, %v690, -inf
    %694 = vmax.xlane.f32.xlu0 %v693
    %v695 = vpop.xlane.xlu0 %694
    %v696 = vsel %vm692, %v691, -inf
    %697 = vmax.xlane.f32.xlu0 %v696
    %v698 = vpop.xlane.xlu0 %697
    %vm699 = vcmp.eq.f32.partialorder %v690, %v695
    %vm700 = vcmp.eq.f32.partialorder %v691, %v698
    %v701 = vsel %vm699, %v480, 5
    %v702 = vsel %vm700, %v480, 5
    %v703 = vsel %vm692, %v701, 2147483647
    %v704 = vand.u32 %v703, 65535
    %v705 = vshra.s32 %v703, 16
    %v706 = vcvt.s32.f32 %v704
    %v707 = vcvt.s32.f32 %v705
    %708 = vmin.xlane.f32.xlu0 %v707
    %v709 = vpop.xlane.xlu0 %708
    %vm710 = vcmp.eq.f32.partialorder %v707, %v709
    %v711 = vsel %vm710, %v706, inf
    %712 = vmin.xlane.f32.xlu0 %v711
    %v713 = vpop.xlane.xlu0 %712
    %v714 = vcvt.f32.s32 %v713
    %v715 = vcvt.f32.s32 %v709
    %v716 = vshll.u32 %v715, 16
    %v717 = vadd.s32 %v716, %v714
    %v718 = vsel %vm692, %v702, 2147483647
    %v719 = vand.u32 %v718, 65535
    %v720 = vshra.s32 %v718, 16
    %v721 = vcvt.s32.f32 %v719
    %v722 = vcvt.s32.f32 %v720
    %723 = vmin.xlane.f32.xlu0 %v722
    %v724 = vpop.xlane.xlu0 %723
    %vm725 = vcmp.eq.f32.partialorder %v722, %v724
    %v726 = vsel %vm725, %v721, inf
    %727 = vmin.xlane.f32.xlu0 %v726
    %v728 = vpop.xlane.xlu0 %727
    %v729 = vcvt.f32.s32 %v728
    %v730 = vcvt.f32.s32 %v724
    %v731 = vshll.u32 %v730, 16
    %v732 = vadd.s32 %v731, %v729
    %v735 = vperm.slane %v470, 1
    %v736 = vlaneseq
    %v737 = vshrl.u32 %v736, 7
    %739 = vset.pattern.permute.xlu0 %v737
    %740 = vperm.xlu0 %739, %v735
    %v741 = vpop.permute.xlu0 %740
    %v742 = vperm.slane %v474, 1
    %v743 = vlaneseq
    %v744 = vshrl.u32 %v743, 7
    %746 = vset.pattern.permute.xlu0 %v744
    %747 = vperm.xlu0 %746, %v742
    %v748 = vpop.permute.xlu0 %747
    %v751 = vadd.f32 %v695, %v741
    %v752 = vadd.f32 %v698, %v748
    %v753 = vmul.f32 %v686, 1.442695
    %v754 = vpow.pop %v753
    %v755 = vmul.f32 %v687, 1.442695
    %v756 = vpow.pop %v755
    %v759 = vrot.slane %v754, 1
    %v760 = vsel %vm489, %v756, %v759
    %v761 = vsel %vm510, %v760, 0
    %763 = vmatpush.msra.mxu0 0.0
    %764 = vmatpush.msra.mxu0 0.0
    %765 = vmatpush.msra.mxu0 0.0
    %766 = vmatpush.msra.mxu0 0.0
    %767 = vmatpush.msra.mxu0 0.0
    %768 = vmatpush.msra.mxu0 0.0
    %769 = vmatpush.msra.mxu0 0.0
    %770 = vmatpush.msra.mxu0 0.0
    %771 = vmatpush.msra.mxu0 0.0
    %772 = vmatpush.msra.mxu0 0.0
    %773 = vmatpush.msra.mxu0 0.0
    %774 = vmatpush.msra.mxu0 0.0
    %775 = vmatpush.msra.mxu0 0.0
    %776 = vmatpush.msra.mxu0 0.0
    %777 = vmatpush.msra.mxu0 0.0
    %v778 = vand.u32 %v515, 4294901760
    %779 = vmatpush.msra.mxu0 %v778
    %v780 = vand.u32 %v761, 4294901760
    %v781 = vsub.f32 %v761, %v780
    %v782 = vand.u32 %v781, 4294901760
    %v783 = vsub.f32 %v781, %v782
    %v784 = vand.u32 %v783, 4294901760
    %785 = vmatmul.f32.gmra.mxu0 %v784
    %v786 = vpop.f32.mrf.mxu0
    %v787 = vadd.f32 0.0, %v786
    %788 = vdwg.mxu0
    %789 = vmatpush.msra.mxu0 0.0
    %790 = vmatpush.msra.mxu0 0.0
    %791 = vmatpush.msra.mxu0 0.0
    %792 = vmatpush.msra.mxu0 0.0
    %793 = vmatpush.msra.mxu0 0.0
    %794 = vmatpush.msra.mxu0 0.0
    %795 = vmatpush.msra.mxu0 0.0
    %796 = vmatpush.msra.mxu0 0.0
    %797 = vmatpush.msra.mxu0 0.0
    %798 = vmatpush.msra.mxu0 0.0
    %799 = vmatpush.msra.mxu0 0.0
    %800 = vmatpush.msra.mxu0 0.0
    %801 = vmatpush.msra.mxu0 0.0
    %802 = vmatpush.msra.mxu0 0.0
    %803 = vmatpush.msra.mxu0 0.0
    %v804 = vand.u32 %v515, 4294901760
    %v805 = vsub.f32 %v515, %v804
    %v806 = vand.u32 %v805, 4294901760
    %v807 = vsub.f32 %v805, %v806
    %v808 = vand.u32 %v807, 4294901760
    %809 = vmatpush.msra.mxu0 %v808
    %v810 = vand.u32 %v761, 4294901760
    %811 = vmatmul.f32.gmra.mxu0 %v810
    %v812 = vpop.f32.mrf.mxu0
    %v813 = vadd.f32 %v787, %v812
    %814 = vdwg.mxu0
    %815 = vmatpush.msra.mxu0 0.0
    %816 = vmatpush.msra.mxu0 0.0
    %817 = vmatpush.msra.mxu0 0.0
    %818 = vmatpush.msra.mxu0 0.0
    %819 = vmatpush.msra.mxu0 0.0
    %820 = vmatpush.msra.mxu0 0.0
    %821 = vmatpush.msra.mxu0 0.0
    %822 = vmatpush.msra.mxu0 0.0
    %823 = vmatpush.msra.mxu0 0.0
    %824 = vmatpush.msra.mxu0 0.0
    %825 = vmatpush.msra.mxu0 0.0
    %826 = vmatpush.msra.mxu0 0.0
    %827 = vmatpush.msra.mxu0 0.0
    %828 = vmatpush.msra.mxu0 0.0
    %829 = vmatpush.msra.mxu0 0.0
    %v830 = vand.u32 %v515, 4294901760
    %v831 = vsub.f32 %v515, %v830
    %832 = vmatpush.msra.mxu0 %v831
    %v833 = vand.u32 %v761, 4294901760
    %v834 = vsub.f32 %v761, %v833
    %835 = vmatmul.f32.gmra.mxu0 %v834
    %v836 = vpop.f32.mrf.mxu0
    %v837 = vadd.f32 %v813, %v836
    %838 = vdwg.mxu0
    %839 = vmatpush.msra.mxu0 0.0
    %840 = vmatpush.msra.mxu0 0.0
    %841 = vmatpush.msra.mxu0 0.0
    %842 = vmatpush.msra.mxu0 0.0
    %843 = vmatpush.msra.mxu0 0.0
    %844 = vmatpush.msra.mxu0 0.0
    %845 = vmatpush.msra.mxu0 0.0
    %846 = vmatpush.msra.mxu0 0.0
    %847 = vmatpush.msra.mxu0 0.0
    %848 = vmatpush.msra.mxu0 0.0
    %849 = vmatpush.msra.mxu0 0.0
    %850 = vmatpush.msra.mxu0 0.0
    %851 = vmatpush.msra.mxu0 0.0
    %852 = vmatpush.msra.mxu0 0.0
    %853 = vmatpush.msra.mxu0 0.0
    %v854 = vand.u32 %v515, 4294901760
    %855 = vmatpush.msra.mxu0 %v854
    %v856 = vand.u32 %v761, 4294901760
    %v857 = vsub.f32 %v761, %v856
    %v858 = vand.u32 %v857, 4294901760
    %859 = vmatmul.f32.gmra.mxu0 %v858
    %v860 = vpop.f32.mrf.mxu0
    %v861 = vadd.f32 %v837, %v860
    %862 = vdwg.mxu0
    %863 = vmatpush.msra.mxu0 0.0
    %864 = vmatpush.msra.mxu0 0.0
    %865 = vmatpush.msra.mxu0 0.0
    %866 = vmatpush.msra.mxu0 0.0
    %867 = vmatpush.msra.mxu0 0.0
    %868 = vmatpush.msra.mxu0 0.0
    %869 = vmatpush.msra.mxu0 0.0
    %870 = vmatpush.msra.mxu0 0.0
    %871 = vmatpush.msra.mxu0 0.0
    %872 = vmatpush.msra.mxu0 0.0
    %873 = vmatpush.msra.mxu0 0.0
    %874 = vmatpush.msra.mxu0 0.0
    %875 = vmatpush.msra.mxu0 0.0
    %876 = vmatpush.msra.mxu0 0.0
    %877 = vmatpush.msra.mxu0 0.0
    %v878 = vand.u32 %v515, 4294901760
    %v879 = vsub.f32 %v515, %v878
    %v880 = vand.u32 %v879, 4294901760
    %881 = vmatpush.msra.mxu0 %v880
    %v882 = vand.u32 %v761, 4294901760
    %883 = vmatmul.f32.gmra.mxu0 %v882
    %v884 = vpop.f32.mrf.mxu0
    %v885 = vadd.f32 %v861, %v884
    %886 = vdwg.mxu0
    %887 = vmatpush.msra.mxu0 0.0
    %888 = vmatpush.msra.mxu0 0.0
    %889 = vmatpush.msra.mxu0 0.0
    %890 = vmatpush.msra.mxu0 0.0
    %891 = vmatpush.msra.mxu0 0.0
    %892 = vmatpush.msra.mxu0 0.0
    %893 = vmatpush.msra.mxu0 0.0
    %894 = vmatpush.msra.mxu0 0.0
    %895 = vmatpush.msra.mxu0 0.0
    %896 = vmatpush.msra.mxu0 0.0
    %897 = vmatpush.msra.mxu0 0.0
    %898 = vmatpush.msra.mxu0 0.0
    %899 = vmatpush.msra.mxu0 0.0
    %900 = vmatpush.msra.mxu0 0.0
    %901 = vmatpush.msra.mxu0 0.0
    %v902 = vand.u32 %v515, 4294901760
    %903 = vmatpush.msra.mxu0 %v902
    %v904 = vand.u32 %v761, 4294901760
    %905 = vmatmul.f32.gmra.mxu0 %v904
    %v906 = vpop.f32.mrf.mxu0
    %v907 = vadd.f32 %v885, %v906
    %908 = vdwg.mxu0
    %v909 = vlog2.pop %v907
    %v910 = vmul.f32 %v909, 0.6931472
    %v912 = vrot.slane %v910, 6
    %v913 = vrot.slane %v910, 7
    %v916 = vadd.f32 %v470, %v912
    %v917 = vadd.f32 %v474, %v913
    %v920 = vrot.slane %v917, 7
    %vm921 = vcmask 1043459
    %v922 = vsel %vm921, %v920, %v916
    %vm924 = vcmask 35842
    %v925 = vsel %vm924, %v922, -inf
    %926 = vmax.xlane.f32.xlu0 %v925
    %v927 = vpop.xlane.xlu0 %926
    %v929 = vrot.slane %v927, 2
    %v931 = vadd.f32 %v684, %v929
    %v932 = vrot.slane %v927, 1
    %v935 = vsub.f32 %v916, %v927
    %v936 = vsub.f32 %v917, %v932
    %v938 = vperm.slane %v477, 0
    %v939 = vlaneseq
    %v940 = vshrl.u32 %v939, 7
    %942 = vset.pattern.permute.xlu0 %v940
    %943 = vperm.xlu0 %942, %v938
    %v944 = vpop.permute.xlu0 %943
    %v945 = vperm.slane %v477, 1
    %v946 = vlaneseq
    %v947 = vshrl.u32 %v946, 7
    %949 = vset.pattern.permute.xlu0 %v947
    %950 = vperm.xlu0 %949, %v945
    %v951 = vpop.permute.xlu0 %950
    %v952 = vperm.slane %v477, 2
    %v953 = vlaneseq
    %v954 = vshrl.u32 %v953, 7
    %956 = vset.pattern.permute.xlu0 %v954
    %957 = vperm.xlu0 %956, %v952
    %v958 = vpop.permute.xlu0 %957
    %v959 = vperm.slane %v477, 3
    %v960 = vlaneseq
    %v961 = vshrl.u32 %v960, 7
    %963 = vset.pattern.permute.xlu0 %v961
    %964 = vperm.xlu0 %963, %v959
    %v965 = vpop.permute.xlu0 %964
    %v966 = vperm.slane %v477, 4
    %v967 = vlaneseq
    %v968 = vshrl.u32 %v967, 7
    %970 = vset.pattern.permute.xlu0 %v968
    %971 = vperm.xlu0 %970, %v966
    %v972 = vpop.permute.xlu0 %971
    %v978 = vadd.f32 %v751, %v944
    %v979 = vadd.f32 %v751, %v951
    %v980 = vadd.f32 %v751, %v958
    %v981 = vadd.f32 %v751, %v965
    %v982 = vadd.f32 %v751, %v972
    %v983 = vadd.f32 %v752, %v944
    %v984 = vadd.f32 %v752, %v951
    %v985 = vadd.f32 %v752, %v958
    %v986 = vadd.f32 %v752, %v965
    %v987 = vadd.f32 %v752, %v972
    %998 = vset.pattern.permute.xlu0 0
    %999 = vperm.xlu0 %998, %v978
    %v1000 = vpop.permute.xlu0 %999
    %1001 = vset.pattern.permute.xlu0 0
    %1002 = vperm.xlu0 %1001, %v979
    %v1003 = vpop.permute.xlu0 %1002
    %1004 = vset.pattern.permute.xlu0 0
    %1005 = vperm.xlu0 %1004, %v980
    %v1006 = vpop.permute.xlu0 %1005
    %1007 = vset.pattern.permute.xlu0 0
    %1008 = vperm.xlu0 %1007, %v981
    %v1009 = vpop.permute.xlu0 %1008
    %1010 = vset.pattern.permute.xlu0 0
    %1011 = vperm.xlu0 %1010, %v982
    %v1012 = vpop.permute.xlu0 %1011
    %1013 = vset.pattern.permute.xlu0 0
    %1014 = vperm.xlu0 %1013, %v983
    %v1015 = vpop.permute.xlu0 %1014
    %1016 = vset.pattern.permute.xlu0 0
    %1017 = vperm.xlu0 %1016, %v984
    %v1018 = vpop.permute.xlu0 %1017
    %1019 = vset.pattern.permute.xlu0 0
    %1020 = vperm.xlu0 %1019, %v985
    %v1021 = vpop.permute.xlu0 %1020
    %1022 = vset.pattern.permute.xlu0 0
    %1023 = vperm.xlu0 %1022, %v986
    %v1024 = vpop.permute.xlu0 %1023
    %1025 = vset.pattern.permute.xlu0 0
    %1026 = vperm.xlu0 %1025, %v987
    %v1027 = vpop.permute.xlu0 %1026
    %v1028 = vperm.slane %v1000, %v480
    %v1029 = vperm.slane %v1003, %v480
    %v1030 = vperm.slane %v1006, %v480
    %v1031 = vperm.slane %v1009, %v480
    %v1032 = vperm.slane %v1012, %v480
    %v1033 = vperm.slane %v1015, %v480
    %v1034 = vperm.slane %v1018, %v480
    %v1035 = vperm.slane %v1021, %v480
    %v1036 = vperm.slane %v1024, %v480
    %v1037 = vperm.slane %v1027, %v480
    %v1038 = vsel %vm489, %v1029, %v1028
    %v1039 = vsel %vm674, %v1030, %v1038
    %v1040 = vsel %vm921, %v1031, %v1039
    %vm1041 = vcmask 1044484
    %v1042 = vsel %vm1041, %v1032, %v1040
    %v1043 = vsel %vm489, %v1034, %v1033
    %v1044 = vsel %vm674, %v1035, %v1043
    %v1045 = vsel %vm921, %v1036, %v1044
    %v1046 = vsel %vm1041, %v1037, %v1045
    %v1049 = vsel %vm692, %v1042, -inf
    %1050 = vmax.xlane.f32.xlu0 %v1049
    %v1051 = vpop.xlane.xlu0 %1050
    %v1052 = vsel %vm692, %v1046, -inf
    %1053 = vmax.xlane.f32.xlu0 %v1052
    %v1054 = vpop.xlane.xlu0 %1053
    %v1057 = vperm.slane %v1051, 0
    %v1058 = vperm.slane %v1051, 1
    %v1059 = vperm.slane %v1051, 2
    %v1060 = vperm.slane %v1051, 3
    %v1061 = vperm.slane %v1051, 4
    %v1062 = vperm.slane %v1054, 0
    %v1063 = vperm.slane %v1054, 1
    %v1064 = vperm.slane %v1054, 2
    %v1065 = vperm.slane %v1054, 3
    %v1066 = vperm.slane %v1054, 4
    %vm1077 = vcmp.eq.f32.partialorder %v978, %v1057
    %vm1078 = vcmp.eq.f32.partialorder %v979, %v1058
    %vm1079 = vcmp.eq.f32.partialorder %v980, %v1059
    %vm1080 = vcmp.eq.f32.partialorder %v981, %v1060
    %vm1081 = vcmp.eq.f32.partialorder %v982, %v1061
    %vm1082 = vcmp.eq.f32.partialorder %v983, %v1062
    %vm1083 = vcmp.eq.f32.partialorder %v984, %v1063
    %vm1084 = vcmp.eq.f32.partialorder %v985, %v1064
    %vm1085 = vcmp.eq.f32.partialorder %v986, %v1065
    %vm1086 = vcmp.eq.f32.partialorder %v987, %v1066
    %v1087 = vlaneseq
    %v1088 = vshrl.u32 %v1087, 7
    %1090 = vset.pattern.permute.xlu0 %v1088
    %1091 = vperm.xlu0 %1090, %v480
    %v1092 = vpop.permute.xlu0 %1091
    %v1093 = vsel %vm1077, %v1092, 5
    %v1094 = vsel %vm1078, %v1092, 5
    %v1095 = vsel %vm1079, %v1092, 5
    %v1096 = vsel %vm1080, %v1092, 5
    %v1097 = vsel %vm1081, %v1092, 5
    %v1098 = vsel %vm1082, %v1092, 5
    %v1099 = vsel %vm1083, %v1092, 5
    %v1100 = vsel %vm1084, %v1092, 5
    %v1101 = vsel %vm1085, %v1092, 5
    %v1102 = vsel %vm1086, %v1092, 5
    %1103 = vset.pattern.permute.xlu0 0
    %1104 = vperm.xlu0 %1103, %v1093
    %v1105 = vpop.permute.xlu0 %1104
    %1106 = vset.pattern.permute.xlu0 0
    %1107 = vperm.xlu0 %1106, %v1094
    %v1108 = vpop.permute.xlu0 %1107
    %1109 = vset.pattern.permute.xlu0 0
    %1110 = vperm.xlu0 %1109, %v1095
    %v1111 = vpop.permute.xlu0 %1110
    %1112 = vset.pattern.permute.xlu0 0
    %1113 = vperm.xlu0 %1112, %v1096
    %v1114 = vpop.permute.xlu0 %1113
    %1115 = vset.pattern.permute.xlu0 0
    %1116 = vperm.xlu0 %1115, %v1097
    %v1117 = vpop.permute.xlu0 %1116
    %1118 = vset.pattern.permute.xlu0 0
    %1119 = vperm.xlu0 %1118, %v1098
    %v1120 = vpop.permute.xlu0 %1119
    %1121 = vset.pattern.permute.xlu0 0
    %1122 = vperm.xlu0 %1121, %v1099
    %v1123 = vpop.permute.xlu0 %1122
    %1124 = vset.pattern.permute.xlu0 0
    %1125 = vperm.xlu0 %1124, %v1100
    %v1126 = vpop.permute.xlu0 %1125
    %1127 = vset.pattern.permute.xlu0 0
    %1128 = vperm.xlu0 %1127, %v1101
    %v1129 = vpop.permute.xlu0 %1128
    %1130 = vset.pattern.permute.xlu0 0
    %1131 = vperm.xlu0 %1130, %v1102
    %v1132 = vpop.permute.xlu0 %1131
    %v1133 = vperm.slane %v1105, %v480
    %v1134 = vperm.slane %v1108, %v480
    %v1135 = vperm.slane %v1111, %v480
    %v1136 = vperm.slane %v1114, %v480
    %v1137 = vperm.slane %v1117, %v480
    %v1138 = vperm.slane %v1120, %v480
    %v1139 = vperm.slane %v1123, %v480
    %v1140 = vperm.slane %v1126, %v480
    %v1141 = vperm.slane %v1129, %v480
    %v1142 = vperm.slane %v1132, %v480
    %v1143 = vsel %vm489, %v1134, %v1133
    %v1144 = vsel %vm674, %v1135, %v1143
    %v1145 = vsel %vm921, %v1136, %v1144
    %v1146 = vsel %vm1041, %v1137, %v1145
    %v1147 = vsel %vm489, %v1139, %v1138
    %v1148 = vsel %vm674, %v1140, %v1147
    %v1149 = vsel %vm921, %v1141, %v1148
    %v1150 = vsel %vm1041, %v1142, %v1149
    %v1151 = vsel %vm692, %v1146, 2147483647
    %v1152 = vand.u32 %v1151, 65535
    %v1153 = vshra.s32 %v1151, 16
    %v1154 = vcvt.s32.f32 %v1152
    %v1155 = vcvt.s32.f32 %v1153
    %1156 = vmin.xlane.f32.xlu0 %v1155
    %v1157 = vpop.xlane.xlu0 %1156
    %vm1158 = vcmp.eq.f32.partialorder %v1155, %v1157
    %v1159 = vsel %vm1158, %v1154, inf
    %1160 = vmin.xlane.f32.xlu0 %v1159
    %v1161 = vpop.xlane.xlu0 %1160
    %v1162 = vcvt.f32.s32 %v1161
    %v1163 = vcvt.f32.s32 %v1157
    %v1164 = vshll.u32 %v1163, 16
    %v1165 = vadd.s32 %v1164, %v1162
    %v1166 = vsel %vm692, %v1150, 2147483647
    %v1167 = vand.u32 %v1166, 65535
    %v1168 = vshra.s32 %v1166, 16
    %v1169 = vcvt.s32.f32 %v1167
    %v1170 = vcvt.s32.f32 %v1168
    %1171 = vmin.xlane.f32.xlu0 %v1170
    %v1172 = vpop.xlane.xlu0 %1171
    %vm1173 = vcmp.eq.f32.partialorder %v1170, %v1172
    %v1174 = vsel %vm1173, %v1169, inf
    %1175 = vmin.xlane.f32.xlu0 %v1174
    %v1176 = vpop.xlane.xlu0 %1175
    %v1177 = vcvt.f32.s32 %v1176
    %v1178 = vcvt.f32.s32 %v1172
    %v1179 = vshll.u32 %v1178, 16
    %v1180 = vadd.s32 %v1179, %v1177
    %v1181 = vperm.slane %v470, 2
    %v1182 = vlaneseq
    %v1183 = vshrl.u32 %v1182, 7
    %1185 = vset.pattern.permute.xlu0 %v1183
    %1186 = vperm.xlu0 %1185, %v1181
    %v1187 = vpop.permute.xlu0 %1186
    %v1188 = vperm.slane %v474, 2
    %v1189 = vlaneseq
    %v1190 = vshrl.u32 %v1189, 7
    %1192 = vset.pattern.permute.xlu0 %v1190
    %1193 = vperm.xlu0 %1192, %v1188
    %v1194 = vpop.permute.xlu0 %1193
    %v1197 = vadd.f32 %v1051, %v1187
    %v1198 = vadd.f32 %v1054, %v1194
    %v1199 = vmul.f32 %v935, 1.442695
    %v1200 = vpow.pop %v1199
    %v1201 = vmul.f32 %v936, 1.442695
    %v1202 = vpow.pop %v1201
    %v1205 = vrot.slane %v1200, 2
    %v1206 = vrot.slane %v1202, 1
    %v1207 = vsel %vm489, %v1206, %v1205
    %v1208 = vsel %vm510, %v1207, 0
    %1210 = vmatpush.msra.mxu0 0.0
    %1211 = vmatpush.msra.mxu0 0.0
    %1212 = vmatpush.msra.mxu0 0.0
    %1213 = vmatpush.msra.mxu0 0.0
    %1214 = vmatpush.msra.mxu0 0.0
    %1215 = vmatpush.msra.mxu0 0.0
    %1216 = vmatpush.msra.mxu0 0.0
    %1217 = vmatpush.msra.mxu0 0.0
    %1218 = vmatpush.msra.mxu0 0.0
    %1219 = vmatpush.msra.mxu0 0.0
    %1220 = vmatpush.msra.mxu0 0.0
    %1221 = vmatpush.msra.mxu0 0.0
    %1222 = vmatpush.msra.mxu0 0.0
    %1223 = vmatpush.msra.mxu0 0.0
    %1224 = vmatpush.msra.mxu0 0.0
    %v1225 = vand.u32 %v515, 4294901760
    %1226 = vmatpush.msra.mxu0 %v1225
    %v1227 = vand.u32 %v1208, 4294901760
    %v1228 = vsub.f32 %v1208, %v1227
    %v1229 = vand.u32 %v1228, 4294901760
    %v1230 = vsub.f32 %v1228, %v1229
    %v1231 = vand.u32 %v1230, 4294901760
    %1232 = vmatmul.f32.gmra.mxu0 %v1231
    %v1233 = vpop.f32.mrf.mxu0
    %v1234 = vadd.f32 0.0, %v1233
    %1235 = vdwg.mxu0
    %1236 = vmatpush.msra.mxu0 0.0
    %1237 = vmatpush.msra.mxu0 0.0
    %1238 = vmatpush.msra.mxu0 0.0
    %1239 = vmatpush.msra.mxu0 0.0
    %1240 = vmatpush.msra.mxu0 0.0
    %1241 = vmatpush.msra.mxu0 0.0
    %1242 = vmatpush.msra.mxu0 0.0
    %1243 = vmatpush.msra.mxu0 0.0
    %1244 = vmatpush.msra.mxu0 0.0
    %1245 = vmatpush.msra.mxu0 0.0
    %1246 = vmatpush.msra.mxu0 0.0
    %1247 = vmatpush.msra.mxu0 0.0
    %1248 = vmatpush.msra.mxu0 0.0
    %1249 = vmatpush.msra.mxu0 0.0
    %1250 = vmatpush.msra.mxu0 0.0
    %v1251 = vand.u32 %v515, 4294901760
    %v1252 = vsub.f32 %v515, %v1251
    %v1253 = vand.u32 %v1252, 4294901760
    %v1254 = vsub.f32 %v1252, %v1253
    %v1255 = vand.u32 %v1254, 4294901760
    %1256 = vmatpush.msra.mxu0 %v1255
    %v1257 = vand.u32 %v1208, 4294901760
    %1258 = vmatmul.f32.gmra.mxu0 %v1257
    %v1259 = vpop.f32.mrf.mxu0
    %v1260 = vadd.f32 %v1234, %v1259
    %1261 = vdwg.mxu0
    %1262 = vmatpush.msra.mxu0 0.0
    %1263 = vmatpush.msra.mxu0 0.0
    %1264 = vmatpush.msra.mxu0 0.0
    %1265 = vmatpush.msra.mxu0 0.0
    %1266 = vmatpush.msra.mxu0 0.0
    %1267 = vmatpush.msra.mxu0 0.0
    %1268 = vmatpush.msra.mxu0 0.0
    %1269 = vmatpush.msra.mxu0 0.0
    %1270 = vmatpush.msra.mxu0 0.0
    %1271 = vmatpush.msra.mxu0 0.0
    %1272 = vmatpush.msra.mxu0 0.0
    %1273 = vmatpush.msra.mxu0 0.0
    %1274 = vmatpush.msra.mxu0 0.0
    %1275 = vmatpush.msra.mxu0 0.0
    %1276 = vmatpush.msra.mxu0 0.0
    %v1277 = vand.u32 %v515, 4294901760
    %v1278 = vsub.f32 %v515, %v1277
    %1279 = vmatpush.msra.mxu0 %v1278
    %v1280 = vand.u32 %v1208, 4294901760
    %v1281 = vsub.f32 %v1208, %v1280
    %1282 = vmatmul.f32.gmra.mxu0 %v1281
    %v1283 = vpop.f32.mrf.mxu0
    %v1284 = vadd.f32 %v1260, %v1283
    %1285 = vdwg.mxu0
    %1286 = vmatpush.msra.mxu0 0.0
    %1287 = vmatpush.msra.mxu0 0.0
    %1288 = vmatpush.msra.mxu0 0.0
    %1289 = vmatpush.msra.mxu0 0.0
    %1290 = vmatpush.msra.mxu0 0.0
    %1291 = vmatpush.msra.mxu0 0.0
    %1292 = vmatpush.msra.mxu0 0.0
    %1293 = vmatpush.msra.mxu0 0.0
    %1294 = vmatpush.msra.mxu0 0.0
    %1295 = vmatpush.msra.mxu0 0.0
    %1296 = vmatpush.msra.mxu0 0.0
    %1297 = vmatpush.msra.mxu0 0.0
    %1298 = vmatpush.msra.mxu0 0.0
    %1299 = vmatpush.msra.mxu0 0.0
    %1300 = vmatpush.msra.mxu0 0.0
    %v1301 = vand.u32 %v515, 4294901760
    %1302 = vmatpush.msra.mxu0 %v1301
    %v1303 = vand.u32 %v1208, 4294901760
    %v1304 = vsub.f32 %v1208, %v1303
    %v1305 = vand.u32 %v1304, 4294901760
    %1306 = vmatmul.f32.gmra.mxu0 %v1305
    %v1307 = vpop.f32.mrf.mxu0
    %v1308 = vadd.f32 %v1284, %v1307
    %1309 = vdwg.mxu0
    %1310 = vmatpush.msra.mxu0 0.0
    %1311 = vmatpush.msra.mxu0 0.0
    %1312 = vmatpush.msra.mxu0 0.0
    %1313 = vmatpush.msra.mxu0 0.0
    %1314 = vmatpush.msra.mxu0 0.0
    %1315 = vmatpush.msra.mxu0 0.0
    %1316 = vmatpush.msra.mxu0 0.0
    %1317 = vmatpush.msra.mxu0 0.0
    %1318 = vmatpush.msra.mxu0 0.0
    %1319 = vmatpush.msra.mxu0 0.0
    %1320 = vmatpush.msra.mxu0 0.0
    %1321 = vmatpush.msra.mxu0 0.0
    %1322 = vmatpush.msra.mxu0 0.0
    %1323 = vmatpush.msra.mxu0 0.0
    %1324 = vmatpush.msra.mxu0 0.0
    %v1325 = vand.u32 %v515, 4294901760
    %v1326 = vsub.f32 %v515, %v1325
    %v1327 = vand.u32 %v1326, 4294901760
    %1328 = vmatpush.msra.mxu0 %v1327
    %v1329 = vand.u32 %v1208, 4294901760
    %1330 = vmatmul.f32.gmra.mxu0 %v1329
    %v1331 = vpop.f32.mrf.mxu0
    %v1332 = vadd.f32 %v1308, %v1331
    %1333 = vdwg.mxu0
    %1334 = vmatpush.msra.mxu0 0.0
    %1335 = vmatpush.msra.mxu0 0.0
    %1336 = vmatpush.msra.mxu0 0.0
    %1337 = vmatpush.msra.mxu0 0.0
    %1338 = vmatpush.msra.mxu0 0.0
    %1339 = vmatpush.msra.mxu0 0.0
    %1340 = vmatpush.msra.mxu0 0.0
    %1341 = vmatpush.msra.mxu0 0.0
    %1342 = vmatpush.msra.mxu0 0.0
    %1343 = vmatpush.msra.mxu0 0.0
    %1344 = vmatpush.msra.mxu0 0.0
    %1345 = vmatpush.msra.mxu0 0.0
    %1346 = vmatpush.msra.mxu0 0.0
    %1347 = vmatpush.msra.mxu0 0.0
    %1348 = vmatpush.msra.mxu0 0.0
    %v1349 = vand.u32 %v515, 4294901760
    %1350 = vmatpush.msra.mxu0 %v1349
    %v1351 = vand.u32 %v1208, 4294901760
    %1352 = vmatmul.f32.gmra.mxu0 %v1351
    %v1353 = vpop.f32.mrf.mxu0
    %v1354 = vadd.f32 %v1332, %v1353
    %1355 = vdwg.mxu0
    %v1356 = vlog2.pop %v1354
    %v1357 = vmul.f32 %v1356, 0.6931472
    %v1359 = vrot.slane %v1357, 5
    %v1360 = vrot.slane %v1357, 6
    %v1363 = vadd.f32 %v470, %v1359
    %v1364 = vadd.f32 %v474, %v1360
    %v1367 = vrot.slane %v1364, 7
    %v1368 = vsel %vm1041, %v1367, %v1363
    %vm1370 = vcmask 36867
    %v1371 = vsel %vm1370, %v1368, -inf
    %1372 = vmax.xlane.f32.xlu0 %v1371
    %v1373 = vpop.xlane.xlu0 %1372
    %v1375 = vrot.slane %v1373, 3
    %v1377 = vadd.f32 %v931, %v1375
    %v1378 = vrot.slane %v1373, 1
    %v1381 = vsub.f32 %v1363, %v1373
    %v1382 = vsub.f32 %v1364, %v1378
    %v1383 = vadd.f32 %v1197, %v944
    %v1384 = vadd.f32 %v1197, %v951
    %v1385 = vadd.f32 %v1197, %v958
    %v1386 = vadd.f32 %v1197, %v965
    %v1387 = vadd.f32 %v1197, %v972
    %v1388 = vadd.f32 %v1198, %v944
    %v1389 = vadd.f32 %v1198, %v951
    %v1390 = vadd.f32 %v1198, %v958
    %v1391 = vadd.f32 %v1198, %v965
    %v1392 = vadd.f32 %v1198, %v972
    %1403 = vset.pattern.permute.xlu0 0
    %1404 = vperm.xlu0 %1403, %v1383
    %v1405 = vpop.permute.xlu0 %1404
    %1406 = vset.pattern.permute.xlu0 0
    %1407 = vperm.xlu0 %1406, %v1384
    %v1408 = vpop.permute.xlu0 %1407
    %1409 = vset.pattern.permute.xlu0 0
    %1410 = vperm.xlu0 %1409, %v1385
    %v1411 = vpop.permute.xlu0 %1410
    %1412 = vset.pattern.permute.xlu0 0
    %1413 = vperm.xlu0 %1412, %v1386
    %v1414 = vpop.permute.xlu0 %1413
    %1415 = vset.pattern.permute.xlu0 0
    %1416 = vperm.xlu0 %1415, %v1387
    %v1417 = vpop.permute.xlu0 %1416
    %1418 = vset.pattern.permute.xlu0 0
    %1419 = vperm.xlu0 %1418, %v1388
    %v1420 = vpop.permute.xlu0 %1419
    %1421 = vset.pattern.permute.xlu0 0
    %1422 = vperm.xlu0 %1421, %v1389
    %v1423 = vpop.permute.xlu0 %1422
    %1424 = vset.pattern.permute.xlu0 0
    %1425 = vperm.xlu0 %1424, %v1390
    %v1426 = vpop.permute.xlu0 %1425
    %1427 = vset.pattern.permute.xlu0 0
    %1428 = vperm.xlu0 %1427, %v1391
    %v1429 = vpop.permute.xlu0 %1428
    %1430 = vset.pattern.permute.xlu0 0
    %1431 = vperm.xlu0 %1430, %v1392
    %v1432 = vpop.permute.xlu0 %1431
    %v1433 = vperm.slane %v1405, %v480
    %v1434 = vperm.slane %v1408, %v480
    %v1435 = vperm.slane %v1411, %v480
    %v1436 = vperm.slane %v1414, %v480
    %v1437 = vperm.slane %v1417, %v480
    %v1438 = vperm.slane %v1420, %v480
    %v1439 = vperm.slane %v1423, %v480
    %v1440 = vperm.slane %v1426, %v480
    %v1441 = vperm.slane %v1429, %v480
    %v1442 = vperm.slane %v1432, %v480
    %v1443 = vsel %vm489, %v1434, %v1433
    %v1444 = vsel %vm674, %v1435, %v1443
    %v1445 = vsel %vm921, %v1436, %v1444
    %v1446 = vsel %vm1041, %v1437, %v1445
    %v1447 = vsel %vm489, %v1439, %v1438
    %v1448 = vsel %vm674, %v1440, %v1447
    %v1449 = vsel %vm921, %v1441, %v1448
    %v1450 = vsel %vm1041, %v1442, %v1449
    %v1453 = vsel %vm692, %v1446, -inf
    %1454 = vmax.xlane.f32.xlu0 %v1453
    %v1455 = vpop.xlane.xlu0 %1454
    %v1456 = vsel %vm692, %v1450, -inf
    %1457 = vmax.xlane.f32.xlu0 %v1456
    %v1458 = vpop.xlane.xlu0 %1457
    %v1461 = vperm.slane %v1455, 0
    %v1462 = vperm.slane %v1455, 1
    %v1463 = vperm.slane %v1455, 2
    %v1464 = vperm.slane %v1455, 3
    %v1465 = vperm.slane %v1455, 4
    %v1466 = vperm.slane %v1458, 0
    %v1467 = vperm.slane %v1458, 1
    %v1468 = vperm.slane %v1458, 2
    %v1469 = vperm.slane %v1458, 3
    %v1470 = vperm.slane %v1458, 4
    %vm1481 = vcmp.eq.f32.partialorder %v1383, %v1461
    %vm1482 = vcmp.eq.f32.partialorder %v1384, %v1462
    %vm1483 = vcmp.eq.f32.partialorder %v1385, %v1463
    %vm1484 = vcmp.eq.f32.partialorder %v1386, %v1464
    %vm1485 = vcmp.eq.f32.partialorder %v1387, %v1465
    %vm1486 = vcmp.eq.f32.partialorder %v1388, %v1466
    %vm1487 = vcmp.eq.f32.partialorder %v1389, %v1467
    %vm1488 = vcmp.eq.f32.partialorder %v1390, %v1468
    %vm1489 = vcmp.eq.f32.partialorder %v1391, %v1469
    %vm1490 = vcmp.eq.f32.partialorder %v1392, %v1470
    %v1491 = vsel %vm1481, %v1092, 5
    %v1492 = vsel %vm1482, %v1092, 5
    %v1493 = vsel %vm1483, %v1092, 5
    %v1494 = vsel %vm1484, %v1092, 5
    %v1495 = vsel %vm1485, %v1092, 5
    %v1496 = vsel %vm1486, %v1092, 5
    %v1497 = vsel %vm1487, %v1092, 5
    %v1498 = vsel %vm1488, %v1092, 5
    %v1499 = vsel %vm1489, %v1092, 5
    %v1500 = vsel %vm1490, %v1092, 5
    %1501 = vset.pattern.permute.xlu0 0
    %1502 = vperm.xlu0 %1501, %v1491
    %v1503 = vpop.permute.xlu0 %1502
    %1504 = vset.pattern.permute.xlu0 0
    %1505 = vperm.xlu0 %1504, %v1492
    %v1506 = vpop.permute.xlu0 %1505
    %1507 = vset.pattern.permute.xlu0 0
    %1508 = vperm.xlu0 %1507, %v1493
    %v1509 = vpop.permute.xlu0 %1508
    %1510 = vset.pattern.permute.xlu0 0
    %1511 = vperm.xlu0 %1510, %v1494
    %v1512 = vpop.permute.xlu0 %1511
    %1513 = vset.pattern.permute.xlu0 0
    %1514 = vperm.xlu0 %1513, %v1495
    %v1515 = vpop.permute.xlu0 %1514
    %1516 = vset.pattern.permute.xlu0 0
    %1517 = vperm.xlu0 %1516, %v1496
    %v1518 = vpop.permute.xlu0 %1517
    %1519 = vset.pattern.permute.xlu0 0
    %1520 = vperm.xlu0 %1519, %v1497
    %v1521 = vpop.permute.xlu0 %1520
    %1522 = vset.pattern.permute.xlu0 0
    %1523 = vperm.xlu0 %1522, %v1498
    %v1524 = vpop.permute.xlu0 %1523
    %1525 = vset.pattern.permute.xlu0 0
    %1526 = vperm.xlu0 %1525, %v1499
    %v1527 = vpop.permute.xlu0 %1526
    %1528 = vset.pattern.permute.xlu0 0
    %1529 = vperm.xlu0 %1528, %v1500
    %v1530 = vpop.permute.xlu0 %1529
    %v1531 = vperm.slane %v1503, %v480
    %v1532 = vperm.slane %v1506, %v480
    %v1533 = vperm.slane %v1509, %v480
    %v1534 = vperm.slane %v1512, %v480
    %v1535 = vperm.slane %v1515, %v480
    %v1536 = vperm.slane %v1518, %v480
    %v1537 = vperm.slane %v1521, %v480
    %v1538 = vperm.slane %v1524, %v480
    %v1539 = vperm.slane %v1527, %v480
    %v1540 = vperm.slane %v1530, %v480
    %v1541 = vsel %vm489, %v1532, %v1531
    %v1542 = vsel %vm674, %v1533, %v1541
    %v1543 = vsel %vm921, %v1534, %v1542
    %v1544 = vsel %vm1041, %v1535, %v1543
    %v1545 = vsel %vm489, %v1537, %v1536
    %v1546 = vsel %vm674, %v1538, %v1545
    %v1547 = vsel %vm921, %v1539, %v1546
    %v1548 = vsel %vm1041, %v1540, %v1547
    %v1549 = vsel %vm692, %v1544, 2147483647
    %v1550 = vand.u32 %v1549, 65535
    %v1551 = vshra.s32 %v1549, 16
    %v1552 = vcvt.s32.f32 %v1550
    %v1553 = vcvt.s32.f32 %v1551
    %1554 = vmin.xlane.f32.xlu0 %v1553
    %v1555 = vpop.xlane.xlu0 %1554
    %vm1556 = vcmp.eq.f32.partialorder %v1553, %v1555
    %v1557 = vsel %vm1556, %v1552, inf
    %1558 = vmin.xlane.f32.xlu0 %v1557
    %v1559 = vpop.xlane.xlu0 %1558
    %v1560 = vcvt.f32.s32 %v1559
    %v1561 = vcvt.f32.s32 %v1555
    %v1562 = vshll.u32 %v1561, 16
    %v1563 = vadd.s32 %v1562, %v1560
    %v1564 = vsel %vm692, %v1548, 2147483647
    %v1565 = vand.u32 %v1564, 65535
    %v1566 = vshra.s32 %v1564, 16
    %v1567 = vcvt.s32.f32 %v1565
    %v1568 = vcvt.s32.f32 %v1566
    %1569 = vmin.xlane.f32.xlu0 %v1568
    %v1570 = vpop.xlane.xlu0 %1569
    %vm1571 = vcmp.eq.f32.partialorder %v1568, %v1570
    %v1572 = vsel %vm1571, %v1567, inf
    %1573 = vmin.xlane.f32.xlu0 %v1572
    %v1574 = vpop.xlane.xlu0 %1573
    %v1575 = vcvt.f32.s32 %v1574
    %v1576 = vcvt.f32.s32 %v1570
    %v1577 = vshll.u32 %v1576, 16
    %v1578 = vadd.s32 %v1577, %v1575
    %v1579 = vperm.slane %v470, 3
    %v1580 = vlaneseq
    %v1581 = vshrl.u32 %v1580, 7
    %1583 = vset.pattern.permute.xlu0 %v1581
    %1584 = vperm.xlu0 %1583, %v1579
    %v1585 = vpop.permute.xlu0 %1584
    %v1586 = vperm.slane %v474, 3
    %v1587 = vlaneseq
    %v1588 = vshrl.u32 %v1587, 7
    %1590 = vset.pattern.permute.xlu0 %v1588
    %1591 = vperm.xlu0 %1590, %v1586
    %v1592 = vpop.permute.xlu0 %1591
    %v1595 = vadd.f32 %v1455, %v1585
    %v1596 = vadd.f32 %v1458, %v1592
    %v1597 = vmul.f32 %v1381, 1.442695
    %v1598 = vpow.pop %v1597
    %v1599 = vmul.f32 %v1382, 1.442695
    %v1600 = vpow.pop %v1599
    %v1603 = vrot.slane %v1598, 3
    %v1604 = vrot.slane %v1600, 2
    %v1605 = vsel %vm489, %v1604, %v1603
    %v1606 = vsel %vm510, %v1605, 0
    %1608 = vmatpush.msra.mxu0 0.0
    %1609 = vmatpush.msra.mxu0 0.0
    %1610 = vmatpush.msra.mxu0 0.0
    %1611 = vmatpush.msra.mxu0 0.0
    %1612 = vmatpush.msra.mxu0 0.0
    %1613 = vmatpush.msra.mxu0 0.0
    %1614 = vmatpush.msra.mxu0 0.0
    %1615 = vmatpush.msra.mxu0 0.0
    %1616 = vmatpush.msra.mxu0 0.0
    %1617 = vmatpush.msra.mxu0 0.0
    %1618 = vmatpush.msra.mxu0 0.0
    %1619 = vmatpush.msra.mxu0 0.0
    %1620 = vmatpush.msra.mxu0 0.0
    %1621 = vmatpush.msra.mxu0 0.0
    %1622 = vmatpush.msra.mxu0 0.0
    %v1623 = vand.u32 %v515, 4294901760
    %1624 = vmatpush.msra.mxu0 %v1623
    %v1625 = vand.u32 %v1606, 4294901760
    %v1626 = vsub.f32 %v1606, %v1625
    %v1627 = vand.u32 %v1626, 4294901760
    %v1628 = vsub.f32 %v1626, %v1627
    %v1629 = vand.u32 %v1628, 4294901760
    %1630 = vmatmul.f32.gmra.mxu0 %v1629
    %v1631 = vpop.f32.mrf.mxu0
    %v1632 = vadd.f32 0.0, %v1631
    %1633 = vdwg.mxu0
    %1634 = vmatpush.msra.mxu0 0.0
    %1635 = vmatpush.msra.mxu0 0.0
    %1636 = vmatpush.msra.mxu0 0.0
    %1637 = vmatpush.msra.mxu0 0.0
    %1638 = vmatpush.msra.mxu0 0.0
    %1639 = vmatpush.msra.mxu0 0.0
    %1640 = vmatpush.msra.mxu0 0.0
    %1641 = vmatpush.msra.mxu0 0.0
    %1642 = vmatpush.msra.mxu0 0.0
    %1643 = vmatpush.msra.mxu0 0.0
    %1644 = vmatpush.msra.mxu0 0.0
    %1645 = vmatpush.msra.mxu0 0.0
    %1646 = vmatpush.msra.mxu0 0.0
    %1647 = vmatpush.msra.mxu0 0.0
    %1648 = vmatpush.msra.mxu0 0.0
    %v1649 = vand.u32 %v515, 4294901760
    %v1650 = vsub.f32 %v515, %v1649
    %v1651 = vand.u32 %v1650, 4294901760
    %v1652 = vsub.f32 %v1650, %v1651
    %v1653 = vand.u32 %v1652, 4294901760
    %1654 = vmatpush.msra.mxu0 %v1653
    %v1655 = vand.u32 %v1606, 4294901760
    %1656 = vmatmul.f32.gmra.mxu0 %v1655
    %v1657 = vpop.f32.mrf.mxu0
    %v1658 = vadd.f32 %v1632, %v1657
    %1659 = vdwg.mxu0
    %1660 = vmatpush.msra.mxu0 0.0
    %1661 = vmatpush.msra.mxu0 0.0
    %1662 = vmatpush.msra.mxu0 0.0
    %1663 = vmatpush.msra.mxu0 0.0
    %1664 = vmatpush.msra.mxu0 0.0
    %1665 = vmatpush.msra.mxu0 0.0
    %1666 = vmatpush.msra.mxu0 0.0
    %1667 = vmatpush.msra.mxu0 0.0
    %1668 = vmatpush.msra.mxu0 0.0
    %1669 = vmatpush.msra.mxu0 0.0
    %1670 = vmatpush.msra.mxu0 0.0
    %1671 = vmatpush.msra.mxu0 0.0
    %1672 = vmatpush.msra.mxu0 0.0
    %1673 = vmatpush.msra.mxu0 0.0
    %1674 = vmatpush.msra.mxu0 0.0
    %v1675 = vand.u32 %v515, 4294901760
    %v1676 = vsub.f32 %v515, %v1675
    %1677 = vmatpush.msra.mxu0 %v1676
    %v1678 = vand.u32 %v1606, 4294901760
    %v1679 = vsub.f32 %v1606, %v1678
    %1680 = vmatmul.f32.gmra.mxu0 %v1679
    %v1681 = vpop.f32.mrf.mxu0
    %v1682 = vadd.f32 %v1658, %v1681
    %1683 = vdwg.mxu0
    %1684 = vmatpush.msra.mxu0 0.0
    %1685 = vmatpush.msra.mxu0 0.0
    %1686 = vmatpush.msra.mxu0 0.0
    %1687 = vmatpush.msra.mxu0 0.0
    %1688 = vmatpush.msra.mxu0 0.0
    %1689 = vmatpush.msra.mxu0 0.0
    %1690 = vmatpush.msra.mxu0 0.0
    %1691 = vmatpush.msra.mxu0 0.0
    %1692 = vmatpush.msra.mxu0 0.0
    %1693 = vmatpush.msra.mxu0 0.0
    %1694 = vmatpush.msra.mxu0 0.0
    %1695 = vmatpush.msra.mxu0 0.0
    %1696 = vmatpush.msra.mxu0 0.0
    %1697 = vmatpush.msra.mxu0 0.0
    %1698 = vmatpush.msra.mxu0 0.0
    %v1699 = vand.u32 %v515, 4294901760
    %1700 = vmatpush.msra.mxu0 %v1699
    %v1701 = vand.u32 %v1606, 4294901760
    %v1702 = vsub.f32 %v1606, %v1701
    %v1703 = vand.u32 %v1702, 4294901760
    %1704 = vmatmul.f32.gmra.mxu0 %v1703
    %v1705 = vpop.f32.mrf.mxu0
    %v1706 = vadd.f32 %v1682, %v1705
    %1707 = vdwg.mxu0
    %1708 = vmatpush.msra.mxu0 0.0
    %1709 = vmatpush.msra.mxu0 0.0
    %1710 = vmatpush.msra.mxu0 0.0
    %1711 = vmatpush.msra.mxu0 0.0
    %1712 = vmatpush.msra.mxu0 0.0
    %1713 = vmatpush.msra.mxu0 0.0
    %1714 = vmatpush.msra.mxu0 0.0
    %1715 = vmatpush.msra.mxu0 0.0
    %1716 = vmatpush.msra.mxu0 0.0
    %1717 = vmatpush.msra.mxu0 0.0
    %1718 = vmatpush.msra.mxu0 0.0
    %1719 = vmatpush.msra.mxu0 0.0
    %1720 = vmatpush.msra.mxu0 0.0
    %1721 = vmatpush.msra.mxu0 0.0
    %1722 = vmatpush.msra.mxu0 0.0
    %v1723 = vand.u32 %v515, 4294901760
    %v1724 = vsub.f32 %v515, %v1723
    %v1725 = vand.u32 %v1724, 4294901760
    %1726 = vmatpush.msra.mxu0 %v1725
    %v1727 = vand.u32 %v1606, 4294901760
    %1728 = vmatmul.f32.gmra.mxu0 %v1727
    %v1729 = vpop.f32.mrf.mxu0
    %v1730 = vadd.f32 %v1706, %v1729
    %1731 = vdwg.mxu0
    %1732 = vmatpush.msra.mxu0 0.0
    %1733 = vmatpush.msra.mxu0 0.0
    %1734 = vmatpush.msra.mxu0 0.0
    %1735 = vmatpush.msra.mxu0 0.0
    %1736 = vmatpush.msra.mxu0 0.0
    %1737 = vmatpush.msra.mxu0 0.0
    %1738 = vmatpush.msra.mxu0 0.0
    %1739 = vmatpush.msra.mxu0 0.0
    %1740 = vmatpush.msra.mxu0 0.0
    %1741 = vmatpush.msra.mxu0 0.0
    %1742 = vmatpush.msra.mxu0 0.0
    %1743 = vmatpush.msra.mxu0 0.0
    %1744 = vmatpush.msra.mxu0 0.0
    %1745 = vmatpush.msra.mxu0 0.0
    %1746 = vmatpush.msra.mxu0 0.0
    %v1747 = vand.u32 %v515, 4294901760
    %1748 = vmatpush.msra.mxu0 %v1747
    %v1749 = vand.u32 %v1606, 4294901760
    %1750 = vmatmul.f32.gmra.mxu0 %v1749
    %v1751 = vpop.f32.mrf.mxu0
    %v1752 = vadd.f32 %v1730, %v1751
    %1753 = vdwg.mxu0
    %v1754 = vlog2.pop %v1752
    %v1755 = vmul.f32 %v1754, 0.6931472
    %v1757 = vrot.slane %v1755, 4
    %v1758 = vrot.slane %v1755, 5
    %v1761 = vadd.f32 %v470, %v1757
    %v1762 = vadd.f32 %v474, %v1758
    %v1765 = vrot.slane %v1762, 7
    %vm1766 = vcmask 1045509
    %v1767 = vsel %vm1766, %v1765, %v1761
    %vm1769 = vcmask 37892
    %v1770 = vsel %vm1769, %v1767, -inf
    %1771 = vmax.xlane.f32.xlu0 %v1770
    %v1772 = vpop.xlane.xlu0 %1771
    %v1774 = vrot.slane %v1772, 4
    %v1776 = vadd.f32 %v1377, %v1774
    %v1777 = vrot.slane %v1772, 1
    %v1780 = vsub.f32 %v1761, %v1772
    %v1781 = vsub.f32 %v1762, %v1777
    %v1782 = vadd.f32 %v1595, %v944
    %v1783 = vadd.f32 %v1595, %v951
    %v1784 = vadd.f32 %v1595, %v958
    %v1785 = vadd.f32 %v1595, %v965
    %v1786 = vadd.f32 %v1595, %v972
    %v1787 = vadd.f32 %v1596, %v944
    %v1788 = vadd.f32 %v1596, %v951
    %v1789 = vadd.f32 %v1596, %v958
    %v1790 = vadd.f32 %v1596, %v965
    %v1791 = vadd.f32 %v1596, %v972
    %1802 = vset.pattern.permute.xlu0 0
    %1803 = vperm.xlu0 %1802, %v1782
    %v1804 = vpop.permute.xlu0 %1803
    %1805 = vset.pattern.permute.xlu0 0
    %1806 = vperm.xlu0 %1805, %v1783
    %v1807 = vpop.permute.xlu0 %1806
    %1808 = vset.pattern.permute.xlu0 0
    %1809 = vperm.xlu0 %1808, %v1784
    %v1810 = vpop.permute.xlu0 %1809
    %1811 = vset.pattern.permute.xlu0 0
    %1812 = vperm.xlu0 %1811, %v1785
    %v1813 = vpop.permute.xlu0 %1812
    %1814 = vset.pattern.permute.xlu0 0
    %1815 = vperm.xlu0 %1814, %v1786
    %v1816 = vpop.permute.xlu0 %1815
    %1817 = vset.pattern.permute.xlu0 0
    %1818 = vperm.xlu0 %1817, %v1787
    %v1819 = vpop.permute.xlu0 %1818
    %1820 = vset.pattern.permute.xlu0 0
    %1821 = vperm.xlu0 %1820, %v1788
    %v1822 = vpop.permute.xlu0 %1821
    %1823 = vset.pattern.permute.xlu0 0
    %1824 = vperm.xlu0 %1823, %v1789
    %v1825 = vpop.permute.xlu0 %1824
    %1826 = vset.pattern.permute.xlu0 0
    %1827 = vperm.xlu0 %1826, %v1790
    %v1828 = vpop.permute.xlu0 %1827
    %1829 = vset.pattern.permute.xlu0 0
    %1830 = vperm.xlu0 %1829, %v1791
    %v1831 = vpop.permute.xlu0 %1830
    %v1832 = vperm.slane %v1804, %v480
    %v1833 = vperm.slane %v1807, %v480
    %v1834 = vperm.slane %v1810, %v480
    %v1835 = vperm.slane %v1813, %v480
    %v1836 = vperm.slane %v1816, %v480
    %v1837 = vperm.slane %v1819, %v480
    %v1838 = vperm.slane %v1822, %v480
    %v1839 = vperm.slane %v1825, %v480
    %v1840 = vperm.slane %v1828, %v480
    %v1841 = vperm.slane %v1831, %v480
    %v1842 = vsel %vm489, %v1833, %v1832
    %v1843 = vsel %vm674, %v1834, %v1842
    %v1844 = vsel %vm921, %v1835, %v1843
    %v1845 = vsel %vm1041, %v1836, %v1844
    %v1846 = vsel %vm489, %v1838, %v1837
    %v1847 = vsel %vm674, %v1839, %v1846
    %v1848 = vsel %vm921, %v1840, %v1847
    %v1849 = vsel %vm1041, %v1841, %v1848
    %v1852 = vsel %vm692, %v1845, -inf
    %1853 = vmax.xlane.f32.xlu0 %v1852
    %v1854 = vpop.xlane.xlu0 %1853
    %v1855 = vsel %vm692, %v1849, -inf
    %1856 = vmax.xlane.f32.xlu0 %v1855
    %v1857 = vpop.xlane.xlu0 %1856
    %v1860 = vperm.slane %v1854, 0
    %v1861 = vperm.slane %v1854, 1
    %v1862 = vperm.slane %v1854, 2
    %v1863 = vperm.slane %v1854, 3
    %v1864 = vperm.slane %v1854, 4
    %v1865 = vperm.slane %v1857, 0
    %v1866 = vperm.slane %v1857, 1
    %v1867 = vperm.slane %v1857, 2
    %v1868 = vperm.slane %v1857, 3
    %v1869 = vperm.slane %v1857, 4
    %vm1880 = vcmp.eq.f32.partialorder %v1782, %v1860
    %vm1881 = vcmp.eq.f32.partialorder %v1783, %v1861
    %vm1882 = vcmp.eq.f32.partialorder %v1784, %v1862
    %vm1883 = vcmp.eq.f32.partialorder %v1785, %v1863
    %vm1884 = vcmp.eq.f32.partialorder %v1786, %v1864
    %vm1885 = vcmp.eq.f32.partialorder %v1787, %v1865
    %vm1886 = vcmp.eq.f32.partialorder %v1788, %v1866
    %vm1887 = vcmp.eq.f32.partialorder %v1789, %v1867
    %vm1888 = vcmp.eq.f32.partialorder %v1790, %v1868
    %vm1889 = vcmp.eq.f32.partialorder %v1791, %v1869
    %v1890 = vsel %vm1880, %v1092, 5
    %v1891 = vsel %vm1881, %v1092, 5
    %v1892 = vsel %vm1882, %v1092, 5
    %v1893 = vsel %vm1883, %v1092, 5
    %v1894 = vsel %vm1884, %v1092, 5
    %v1895 = vsel %vm1885, %v1092, 5
    %v1896 = vsel %vm1886, %v1092, 5
    %v1897 = vsel %vm1887, %v1092, 5
    %v1898 = vsel %vm1888, %v1092, 5
    %v1899 = vsel %vm1889, %v1092, 5
    %1900 = vset.pattern.permute.xlu0 0
    %1901 = vperm.xlu0 %1900, %v1890
    %v1902 = vpop.permute.xlu0 %1901
    %1903 = vset.pattern.permute.xlu0 0
    %1904 = vperm.xlu0 %1903, %v1891
    %v1905 = vpop.permute.xlu0 %1904
    %1906 = vset.pattern.permute.xlu0 0
    %1907 = vperm.xlu0 %1906, %v1892
    %v1908 = vpop.permute.xlu0 %1907
    %1909 = vset.pattern.permute.xlu0 0
    %1910 = vperm.xlu0 %1909, %v1893
    %v1911 = vpop.permute.xlu0 %1910
    %1912 = vset.pattern.permute.xlu0 0
    %1913 = vperm.xlu0 %1912, %v1894
    %v1914 = vpop.permute.xlu0 %1913
    %1915 = vset.pattern.permute.xlu0 0
    %1916 = vperm.xlu0 %1915, %v1895
    %v1917 = vpop.permute.xlu0 %1916
    %1918 = vset.pattern.permute.xlu0 0
    %1919 = vperm.xlu0 %1918, %v1896
    %v1920 = vpop.permute.xlu0 %1919
    %1921 = vset.pattern.permute.xlu0 0
    %1922 = vperm.xlu0 %1921, %v1897
    %v1923 = vpop.permute.xlu0 %1922
    %1924 = vset.pattern.permute.xlu0 0
    %1925 = vperm.xlu0 %1924, %v1898
    %v1926 = vpop.permute.xlu0 %1925
    %1927 = vset.pattern.permute.xlu0 0
    %1928 = vperm.xlu0 %1927, %v1899
    %v1929 = vpop.permute.xlu0 %1928
    %v1930 = vperm.slane %v1902, %v480
    %v1931 = vperm.slane %v1905, %v480
    %v1932 = vperm.slane %v1908, %v480
    %v1933 = vperm.slane %v1911, %v480
    %v1934 = vperm.slane %v1914, %v480
    %v1935 = vperm.slane %v1917, %v480
    %v1936 = vperm.slane %v1920, %v480
    %v1937 = vperm.slane %v1923, %v480
    %v1938 = vperm.slane %v1926, %v480
    %v1939 = vperm.slane %v1929, %v480
    %v1940 = vsel %vm489, %v1931, %v1930
    %v1941 = vsel %vm674, %v1932, %v1940
    %v1942 = vsel %vm921, %v1933, %v1941
    %v1943 = vsel %vm1041, %v1934, %v1942
    %v1944 = vsel %vm489, %v1936, %v1935
    %v1945 = vsel %vm674, %v1937, %v1944
    %v1946 = vsel %vm921, %v1938, %v1945
    %v1947 = vsel %vm1041, %v1939, %v1946
    %v1948 = vsel %vm692, %v1943, 2147483647
    %v1949 = vand.u32 %v1948, 65535
    %v1950 = vshra.s32 %v1948, 16
    %v1951 = vcvt.s32.f32 %v1949
    %v1952 = vcvt.s32.f32 %v1950
    %1953 = vmin.xlane.f32.xlu0 %v1952
    %v1954 = vpop.xlane.xlu0 %1953
    %vm1955 = vcmp.eq.f32.partialorder %v1952, %v1954
    %v1956 = vsel %vm1955, %v1951, inf
    %1957 = vmin.xlane.f32.xlu0 %v1956
    %v1958 = vpop.xlane.xlu0 %1957
    %v1959 = vcvt.f32.s32 %v1958
    %v1960 = vcvt.f32.s32 %v1954
    %v1961 = vshll.u32 %v1960, 16
    %v1962 = vadd.s32 %v1961, %v1959
    %v1963 = vsel %vm692, %v1947, 2147483647
    %v1964 = vand.u32 %v1963, 65535
    %v1965 = vshra.s32 %v1963, 16
    %v1966 = vcvt.s32.f32 %v1964
    %v1967 = vcvt.s32.f32 %v1965
    %1968 = vmin.xlane.f32.xlu0 %v1967
    %v1969 = vpop.xlane.xlu0 %1968
    %vm1970 = vcmp.eq.f32.partialorder %v1967, %v1969
    %v1971 = vsel %vm1970, %v1966, inf
    %1972 = vmin.xlane.f32.xlu0 %v1971
    %v1973 = vpop.xlane.xlu0 %1972
    %v1974 = vcvt.f32.s32 %v1973
    %v1975 = vcvt.f32.s32 %v1969
    %v1976 = vshll.u32 %v1975, 16
    %v1977 = vadd.s32 %v1976, %v1974
    %v1978 = vperm.slane %v470, 4
    %v1979 = vlaneseq
    %v1980 = vshrl.u32 %v1979, 7
    %1982 = vset.pattern.permute.xlu0 %v1980
    %1983 = vperm.xlu0 %1982, %v1978
    %v1984 = vpop.permute.xlu0 %1983
    %v1985 = vperm.slane %v474, 4
    %v1986 = vlaneseq
    %v1987 = vshrl.u32 %v1986, 7
    %1989 = vset.pattern.permute.xlu0 %v1987
    %1990 = vperm.xlu0 %1989, %v1985
    %v1991 = vpop.permute.xlu0 %1990
    %v1994 = vadd.f32 %v1854, %v1984
    %v1995 = vadd.f32 %v1857, %v1991
    %v1996 = vmul.f32 %v1780, 1.442695
    %v1997 = vpow.pop %v1996
    %v1998 = vmul.f32 %v1781, 1.442695
    %v1999 = vpow.pop %v1998
    %v2002 = vrot.slane %v1997, 4
    %v2003 = vrot.slane %v1999, 3
    %v2004 = vsel %vm489, %v2003, %v2002
    %v2005 = vsel %vm510, %v2004, 0
    %2007 = vmatpush.msra.mxu0 0.0
    %2008 = vmatpush.msra.mxu0 0.0
    %2009 = vmatpush.msra.mxu0 0.0
    %2010 = vmatpush.msra.mxu0 0.0
    %2011 = vmatpush.msra.mxu0 0.0
    %2012 = vmatpush.msra.mxu0 0.0
    %2013 = vmatpush.msra.mxu0 0.0
    %2014 = vmatpush.msra.mxu0 0.0
    %2015 = vmatpush.msra.mxu0 0.0
    %2016 = vmatpush.msra.mxu0 0.0
    %2017 = vmatpush.msra.mxu0 0.0
    %2018 = vmatpush.msra.mxu0 0.0
    %2019 = vmatpush.msra.mxu0 0.0
    %2020 = vmatpush.msra.mxu0 0.0
    %2021 = vmatpush.msra.mxu0 0.0
    %v2022 = vand.u32 %v515, 4294901760
    %2023 = vmatpush.msra.mxu0 %v2022
    %v2024 = vand.u32 %v2005, 4294901760
    %v2025 = vsub.f32 %v2005, %v2024
    %v2026 = vand.u32 %v2025, 4294901760
    %v2027 = vsub.f32 %v2025, %v2026
    %v2028 = vand.u32 %v2027, 4294901760
    %2029 = vmatmul.f32.gmra.mxu0 %v2028
    %v2030 = vpop.f32.mrf.mxu0
    %v2031 = vadd.f32 0.0, %v2030
    %2032 = vdwg.mxu0
    %2033 = vmatpush.msra.mxu0 0.0
    %2034 = vmatpush.msra.mxu0 0.0
    %2035 = vmatpush.msra.mxu0 0.0
    %2036 = vmatpush.msra.mxu0 0.0
    %2037 = vmatpush.msra.mxu0 0.0
    %2038 = vmatpush.msra.mxu0 0.0
    %2039 = vmatpush.msra.mxu0 0.0
    %2040 = vmatpush.msra.mxu0 0.0
    %2041 = vmatpush.msra.mxu0 0.0
    %2042 = vmatpush.msra.mxu0 0.0
    %2043 = vmatpush.msra.mxu0 0.0
    %2044 = vmatpush.msra.mxu0 0.0
    %2045 = vmatpush.msra.mxu0 0.0
    %2046 = vmatpush.msra.mxu0 0.0
    %2047 = vmatpush.msra.mxu0 0.0
    %v2048 = vand.u32 %v515, 4294901760
    %v2049 = vsub.f32 %v515, %v2048
    %v2050 = vand.u32 %v2049, 4294901760
    %v2051 = vsub.f32 %v2049, %v2050
    %v2052 = vand.u32 %v2051, 4294901760
    %2053 = vmatpush.msra.mxu0 %v2052
    %v2054 = vand.u32 %v2005, 4294901760
    %2055 = vmatmul.f32.gmra.mxu0 %v2054
    %v2056 = vpop.f32.mrf.mxu0
    %v2057 = vadd.f32 %v2031, %v2056
    %2058 = vdwg.mxu0
    %2059 = vmatpush.msra.mxu0 0.0
    %2060 = vmatpush.msra.mxu0 0.0
    %2061 = vmatpush.msra.mxu0 0.0
    %2062 = vmatpush.msra.mxu0 0.0
    %2063 = vmatpush.msra.mxu0 0.0
    %2064 = vmatpush.msra.mxu0 0.0
    %2065 = vmatpush.msra.mxu0 0.0
    %2066 = vmatpush.msra.mxu0 0.0
    %2067 = vmatpush.msra.mxu0 0.0
    %2068 = vmatpush.msra.mxu0 0.0
    %2069 = vmatpush.msra.mxu0 0.0
    %2070 = vmatpush.msra.mxu0 0.0
    %2071 = vmatpush.msra.mxu0 0.0
    %2072 = vmatpush.msra.mxu0 0.0
    %2073 = vmatpush.msra.mxu0 0.0
    %v2074 = vand.u32 %v515, 4294901760
    %v2075 = vsub.f32 %v515, %v2074
    %2076 = vmatpush.msra.mxu0 %v2075
    %v2077 = vand.u32 %v2005, 4294901760
    %v2078 = vsub.f32 %v2005, %v2077
    %2079 = vmatmul.f32.gmra.mxu0 %v2078
    %v2080 = vpop.f32.mrf.mxu0
    %v2081 = vadd.f32 %v2057, %v2080
    %2082 = vdwg.mxu0
    %2083 = vmatpush.msra.mxu0 0.0
    %2084 = vmatpush.msra.mxu0 0.0
    %2085 = vmatpush.msra.mxu0 0.0
    %2086 = vmatpush.msra.mxu0 0.0
    %2087 = vmatpush.msra.mxu0 0.0
    %2088 = vmatpush.msra.mxu0 0.0
    %2089 = vmatpush.msra.mxu0 0.0
    %2090 = vmatpush.msra.mxu0 0.0
    %2091 = vmatpush.msra.mxu0 0.0
    %2092 = vmatpush.msra.mxu0 0.0
    %2093 = vmatpush.msra.mxu0 0.0
    %2094 = vmatpush.msra.mxu0 0.0
    %2095 = vmatpush.msra.mxu0 0.0
    %2096 = vmatpush.msra.mxu0 0.0
    %2097 = vmatpush.msra.mxu0 0.0
    %v2098 = vand.u32 %v515, 4294901760
    %2099 = vmatpush.msra.mxu0 %v2098
    %v2100 = vand.u32 %v2005, 4294901760
    %v2101 = vsub.f32 %v2005, %v2100
    %v2102 = vand.u32 %v2101, 4294901760
    %2103 = vmatmul.f32.gmra.mxu0 %v2102
    %v2104 = vpop.f32.mrf.mxu0
    %v2105 = vadd.f32 %v2081, %v2104
    %2106 = vdwg.mxu0
    %2107 = vmatpush.msra.mxu0 0.0
    %2108 = vmatpush.msra.mxu0 0.0
    %2109 = vmatpush.msra.mxu0 0.0
    %2110 = vmatpush.msra.mxu0 0.0
    %2111 = vmatpush.msra.mxu0 0.0
    %2112 = vmatpush.msra.mxu0 0.0
    %2113 = vmatpush.msra.mxu0 0.0
    %2114 = vmatpush.msra.mxu0 0.0
    %2115 = vmatpush.msra.mxu0 0.0
    %2116 = vmatpush.msra.mxu0 0.0
    %2117 = vmatpush.msra.mxu0 0.0
    %2118 = vmatpush.msra.mxu0 0.0
    %2119 = vmatpush.msra.mxu0 0.0
    %2120 = vmatpush.msra.mxu0 0.0
    %2121 = vmatpush.msra.mxu0 0.0
    %v2122 = vand.u32 %v515, 4294901760
    %v2123 = vsub.f32 %v515, %v2122
    %v2124 = vand.u32 %v2123, 4294901760
    %2125 = vmatpush.msra.mxu0 %v2124
    %v2126 = vand.u32 %v2005, 4294901760
    %2127 = vmatmul.f32.gmra.mxu0 %v2126
    %v2128 = vpop.f32.mrf.mxu0
    %v2129 = vadd.f32 %v2105, %v2128
    %2130 = vdwg.mxu0
    %2131 = vmatpush.msra.mxu0 0.0
    %2132 = vmatpush.msra.mxu0 0.0
    %2133 = vmatpush.msra.mxu0 0.0
    %2134 = vmatpush.msra.mxu0 0.0
    %2135 = vmatpush.msra.mxu0 0.0
    %2136 = vmatpush.msra.mxu0 0.0
    %2137 = vmatpush.msra.mxu0 0.0
    %2138 = vmatpush.msra.mxu0 0.0
    %2139 = vmatpush.msra.mxu0 0.0
    %2140 = vmatpush.msra.mxu0 0.0
    %2141 = vmatpush.msra.mxu0 0.0
    %2142 = vmatpush.msra.mxu0 0.0
    %2143 = vmatpush.msra.mxu0 0.0
    %2144 = vmatpush.msra.mxu0 0.0
    %2145 = vmatpush.msra.mxu0 0.0
    %v2146 = vand.u32 %v515, 4294901760
    %2147 = vmatpush.msra.mxu0 %v2146
    %v2148 = vand.u32 %v2005, 4294901760
    %2149 = vmatmul.f32.gmra.mxu0 %v2148
    %v2150 = vpop.f32.mrf.mxu0
    %v2151 = vadd.f32 %v2129, %v2150
    %2152 = vdwg.mxu0
    %v2153 = vlog2.pop %v2151
    %v2154 = vmul.f32 %v2153, 0.6931472
    %v2156 = vrot.slane %v2154, 3
    %v2157 = vrot.slane %v2154, 4
    %v2160 = vadd.f32 %v470, %v2156
    %v2161 = vadd.f32 %v474, %v2157
    %v2164 = vrot.slane %v2161, 7
    %vm2165 = vcmask 1046534
    %v2166 = vsel %vm2165, %v2164, %v2160
    %vm2168 = vcmask 38917
    %v2169 = vsel %vm2168, %v2166, -inf
    %2170 = vmax.xlane.f32.xlu0 %v2169
    %v2171 = vpop.xlane.xlu0 %2170
    %v2173 = vrot.slane %v2171, 5
    %v2175 = vadd.f32 %v1776, %v2173
    %v2176 = vrot.slane %v2171, 1
    %v2179 = vsub.f32 %v2160, %v2171
    %v2180 = vsub.f32 %v2161, %v2176
    %v2181 = vadd.f32 %v1994, %v944
    %v2182 = vadd.f32 %v1994, %v951
    %v2183 = vadd.f32 %v1994, %v958
    %v2184 = vadd.f32 %v1994, %v965
    %v2185 = vadd.f32 %v1994, %v972
    %v2186 = vadd.f32 %v1995, %v944
    %v2187 = vadd.f32 %v1995, %v951
    %v2188 = vadd.f32 %v1995, %v958
    %v2189 = vadd.f32 %v1995, %v965
    %v2190 = vadd.f32 %v1995, %v972
    %2201 = vset.pattern.permute.xlu0 0
    %2202 = vperm.xlu0 %2201, %v2181
    %v2203 = vpop.permute.xlu0 %2202
    %2204 = vset.pattern.permute.xlu0 0
    %2205 = vperm.xlu0 %2204, %v2182
    %v2206 = vpop.permute.xlu0 %2205
    %2207 = vset.pattern.permute.xlu0 0
    %2208 = vperm.xlu0 %2207, %v2183
    %v2209 = vpop.permute.xlu0 %2208
    %2210 = vset.pattern.permute.xlu0 0
    %2211 = vperm.xlu0 %2210, %v2184
    %v2212 = vpop.permute.xlu0 %2211
    %2213 = vset.pattern.permute.xlu0 0
    %2214 = vperm.xlu0 %2213, %v2185
    %v2215 = vpop.permute.xlu0 %2214
    %2216 = vset.pattern.permute.xlu0 0
    %2217 = vperm.xlu0 %2216, %v2186
    %v2218 = vpop.permute.xlu0 %2217
    %2219 = vset.pattern.permute.xlu0 0
    %2220 = vperm.xlu0 %2219, %v2187
    %v2221 = vpop.permute.xlu0 %2220
    %2222 = vset.pattern.permute.xlu0 0
    %2223 = vperm.xlu0 %2222, %v2188
    %v2224 = vpop.permute.xlu0 %2223
    %2225 = vset.pattern.permute.xlu0 0
    %2226 = vperm.xlu0 %2225, %v2189
    %v2227 = vpop.permute.xlu0 %2226
    %2228 = vset.pattern.permute.xlu0 0
    %2229 = vperm.xlu0 %2228, %v2190
    %v2230 = vpop.permute.xlu0 %2229
    %v2231 = vperm.slane %v2203, %v480
    %v2232 = vperm.slane %v2206, %v480
    %v2233 = vperm.slane %v2209, %v480
    %v2234 = vperm.slane %v2212, %v480
    %v2235 = vperm.slane %v2215, %v480
    %v2236 = vperm.slane %v2218, %v480
    %v2237 = vperm.slane %v2221, %v480
    %v2238 = vperm.slane %v2224, %v480
    %v2239 = vperm.slane %v2227, %v480
    %v2240 = vperm.slane %v2230, %v480
    %v2241 = vsel %vm489, %v2232, %v2231
    %v2242 = vsel %vm674, %v2233, %v2241
    %v2243 = vsel %vm921, %v2234, %v2242
    %v2244 = vsel %vm1041, %v2235, %v2243
    %v2245 = vsel %vm489, %v2237, %v2236
    %v2246 = vsel %vm674, %v2238, %v2245
    %v2247 = vsel %vm921, %v2239, %v2246
    %v2248 = vsel %vm1041, %v2240, %v2247
    %v2251 = vsel %vm692, %v2244, -inf
    %2252 = vmax.xlane.f32.xlu0 %v2251
    %v2253 = vpop.xlane.xlu0 %2252
    %v2254 = vsel %vm692, %v2248, -inf
    %2255 = vmax.xlane.f32.xlu0 %v2254
    %v2256 = vpop.xlane.xlu0 %2255
    %v2259 = vperm.slane %v2253, 0
    %v2260 = vperm.slane %v2253, 1
    %v2261 = vperm.slane %v2253, 2
    %v2262 = vperm.slane %v2253, 3
    %v2263 = vperm.slane %v2253, 4
    %v2264 = vperm.slane %v2256, 0
    %v2265 = vperm.slane %v2256, 1
    %v2266 = vperm.slane %v2256, 2
    %v2267 = vperm.slane %v2256, 3
    %v2268 = vperm.slane %v2256, 4
    %vm2279 = vcmp.eq.f32.partialorder %v2181, %v2259
    %vm2280 = vcmp.eq.f32.partialorder %v2182, %v2260
    %vm2281 = vcmp.eq.f32.partialorder %v2183, %v2261
    %vm2282 = vcmp.eq.f32.partialorder %v2184, %v2262
    %vm2283 = vcmp.eq.f32.partialorder %v2185, %v2263
    %vm2284 = vcmp.eq.f32.partialorder %v2186, %v2264
    %vm2285 = vcmp.eq.f32.partialorder %v2187, %v2265
    %vm2286 = vcmp.eq.f32.partialorder %v2188, %v2266
    %vm2287 = vcmp.eq.f32.partialorder %v2189, %v2267
    %vm2288 = vcmp.eq.f32.partialorder %v2190, %v2268
    %v2289 = vsel %vm2279, %v1092, 5
    %v2290 = vsel %vm2280, %v1092, 5
    %v2291 = vsel %vm2281, %v1092, 5
    %v2292 = vsel %vm2282, %v1092, 5
    %v2293 = vsel %vm2283, %v1092, 5
    %v2294 = vsel %vm2284, %v1092, 5
    %v2295 = vsel %vm2285, %v1092, 5
    %v2296 = vsel %vm2286, %v1092, 5
    %v2297 = vsel %vm2287, %v1092, 5
    %v2298 = vsel %vm2288, %v1092, 5
    %2299 = vset.pattern.permute.xlu0 0
    %2300 = vperm.xlu0 %2299, %v2289
    %v2301 = vpop.permute.xlu0 %2300
    %2302 = vset.pattern.permute.xlu0 0
    %2303 = vperm.xlu0 %2302, %v2290
    %v2304 = vpop.permute.xlu0 %2303
    %2305 = vset.pattern.permute.xlu0 0
    %2306 = vperm.xlu0 %2305, %v2291
    %v2307 = vpop.permute.xlu0 %2306
    %2308 = vset.pattern.permute.xlu0 0
    %2309 = vperm.xlu0 %2308, %v2292
    %v2310 = vpop.permute.xlu0 %2309
    %2311 = vset.pattern.permute.xlu0 0
    %2312 = vperm.xlu0 %2311, %v2293
    %v2313 = vpop.permute.xlu0 %2312
    %2314 = vset.pattern.permute.xlu0 0
    %2315 = vperm.xlu0 %2314, %v2294
    %v2316 = vpop.permute.xlu0 %2315
    %2317 = vset.pattern.permute.xlu0 0
    %2318 = vperm.xlu0 %2317, %v2295
    %v2319 = vpop.permute.xlu0 %2318
    %2320 = vset.pattern.permute.xlu0 0
    %2321 = vperm.xlu0 %2320, %v2296
    %v2322 = vpop.permute.xlu0 %2321
    %2323 = vset.pattern.permute.xlu0 0
    %2324 = vperm.xlu0 %2323, %v2297
    %v2325 = vpop.permute.xlu0 %2324
    %2326 = vset.pattern.permute.xlu0 0
    %2327 = vperm.xlu0 %2326, %v2298
    %v2328 = vpop.permute.xlu0 %2327
    %v2329 = vperm.slane %v2301, %v480
    %v2330 = vperm.slane %v2304, %v480
    %v2331 = vperm.slane %v2307, %v480
    %v2332 = vperm.slane %v2310, %v480
    %v2333 = vperm.slane %v2313, %v480
    %v2334 = vperm.slane %v2316, %v480
    %v2335 = vperm.slane %v2319, %v480
    %v2336 = vperm.slane %v2322, %v480
    %v2337 = vperm.slane %v2325, %v480
    %v2338 = vperm.slane %v2328, %v480
    %v2339 = vsel %vm489, %v2330, %v2329
    %v2340 = vsel %vm674, %v2331, %v2339
    %v2341 = vsel %vm921, %v2332, %v2340
    %v2342 = vsel %vm1041, %v2333, %v2341
    %v2343 = vsel %vm489, %v2335, %v2334
    %v2344 = vsel %vm674, %v2336, %v2343
    %v2345 = vsel %vm921, %v2337, %v2344
    %v2346 = vsel %vm1041, %v2338, %v2345
    %v2347 = vsel %vm692, %v2342, 2147483647
    %v2348 = vand.u32 %v2347, 65535
    %v2349 = vshra.s32 %v2347, 16
    %v2350 = vcvt.s32.f32 %v2348
    %v2351 = vcvt.s32.f32 %v2349
    %2352 = vmin.xlane.f32.xlu0 %v2351
    %v2353 = vpop.xlane.xlu0 %2352
    %vm2354 = vcmp.eq.f32.partialorder %v2351, %v2353
    %v2355 = vsel %vm2354, %v2350, inf
    %2356 = vmin.xlane.f32.xlu0 %v2355
    %v2357 = vpop.xlane.xlu0 %2356
    %v2358 = vcvt.f32.s32 %v2357
    %v2359 = vcvt.f32.s32 %v2353
    %v2360 = vshll.u32 %v2359, 16
    %v2361 = vadd.s32 %v2360, %v2358
    %v2362 = vsel %vm692, %v2346, 2147483647
    %v2363 = vand.u32 %v2362, 65535
    %v2364 = vshra.s32 %v2362, 16
    %v2365 = vcvt.s32.f32 %v2363
    %v2366 = vcvt.s32.f32 %v2364
    %2367 = vmin.xlane.f32.xlu0 %v2366
    %v2368 = vpop.xlane.xlu0 %2367
    %vm2369 = vcmp.eq.f32.partialorder %v2366, %v2368
    %v2370 = vsel %vm2369, %v2365, inf
    %2371 = vmin.xlane.f32.xlu0 %v2370
    %v2372 = vpop.xlane.xlu0 %2371
    %v2373 = vcvt.f32.s32 %v2372
    %v2374 = vcvt.f32.s32 %v2368
    %v2375 = vshll.u32 %v2374, 16
    %v2376 = vadd.s32 %v2375, %v2373
    %v2377 = vperm.slane %v470, 5
    %v2378 = vlaneseq
    %v2379 = vshrl.u32 %v2378, 7
    %2381 = vset.pattern.permute.xlu0 %v2379
    %2382 = vperm.xlu0 %2381, %v2377
    %v2383 = vpop.permute.xlu0 %2382
    %v2384 = vperm.slane %v474, 5
    %v2385 = vlaneseq
    %v2386 = vshrl.u32 %v2385, 7
    %2388 = vset.pattern.permute.xlu0 %v2386
    %2389 = vperm.xlu0 %2388, %v2384
    %v2390 = vpop.permute.xlu0 %2389
    %v2393 = vadd.f32 %v2253, %v2383
    %v2394 = vadd.f32 %v2256, %v2390
    %v2395 = vmul.f32 %v2179, 1.442695
    %v2396 = vpow.pop %v2395
    %v2397 = vmul.f32 %v2180, 1.442695
    %v2398 = vpow.pop %v2397
    %v2401 = vrot.slane %v2396, 5
    %v2402 = vrot.slane %v2398, 4
    %v2403 = vsel %vm489, %v2402, %v2401
    %v2404 = vsel %vm510, %v2403, 0
    %2406 = vmatpush.msra.mxu0 0.0
    %2407 = vmatpush.msra.mxu0 0.0
    %2408 = vmatpush.msra.mxu0 0.0
    %2409 = vmatpush.msra.mxu0 0.0
    %2410 = vmatpush.msra.mxu0 0.0
    %2411 = vmatpush.msra.mxu0 0.0
    %2412 = vmatpush.msra.mxu0 0.0
    %2413 = vmatpush.msra.mxu0 0.0
    %2414 = vmatpush.msra.mxu0 0.0
    %2415 = vmatpush.msra.mxu0 0.0
    %2416 = vmatpush.msra.mxu0 0.0
    %2417 = vmatpush.msra.mxu0 0.0
    %2418 = vmatpush.msra.mxu0 0.0
    %2419 = vmatpush.msra.mxu0 0.0
    %2420 = vmatpush.msra.mxu0 0.0
    %v2421 = vand.u32 %v515, 4294901760
    %2422 = vmatpush.msra.mxu0 %v2421
    %v2423 = vand.u32 %v2404, 4294901760
    %v2424 = vsub.f32 %v2404, %v2423
    %v2425 = vand.u32 %v2424, 4294901760
    %v2426 = vsub.f32 %v2424, %v2425
    %v2427 = vand.u32 %v2426, 4294901760
    %2428 = vmatmul.f32.gmra.mxu0 %v2427
    %v2429 = vpop.f32.mrf.mxu0
    %v2430 = vadd.f32 0.0, %v2429
    %2431 = vdwg.mxu0
    %2432 = vmatpush.msra.mxu0 0.0
    %2433 = vmatpush.msra.mxu0 0.0
    %2434 = vmatpush.msra.mxu0 0.0
    %2435 = vmatpush.msra.mxu0 0.0
    %2436 = vmatpush.msra.mxu0 0.0
    %2437 = vmatpush.msra.mxu0 0.0
    %2438 = vmatpush.msra.mxu0 0.0
    %2439 = vmatpush.msra.mxu0 0.0
    %2440 = vmatpush.msra.mxu0 0.0
    %2441 = vmatpush.msra.mxu0 0.0
    %2442 = vmatpush.msra.mxu0 0.0
    %2443 = vmatpush.msra.mxu0 0.0
    %2444 = vmatpush.msra.mxu0 0.0
    %2445 = vmatpush.msra.mxu0 0.0
    %2446 = vmatpush.msra.mxu0 0.0
    %v2447 = vand.u32 %v515, 4294901760
    %v2448 = vsub.f32 %v515, %v2447
    %v2449 = vand.u32 %v2448, 4294901760
    %v2450 = vsub.f32 %v2448, %v2449
    %v2451 = vand.u32 %v2450, 4294901760
    %2452 = vmatpush.msra.mxu0 %v2451
    %v2453 = vand.u32 %v2404, 4294901760
    %2454 = vmatmul.f32.gmra.mxu0 %v2453
    %v2455 = vpop.f32.mrf.mxu0
    %v2456 = vadd.f32 %v2430, %v2455
    %2457 = vdwg.mxu0
    %2458 = vmatpush.msra.mxu0 0.0
    %2459 = vmatpush.msra.mxu0 0.0
    %2460 = vmatpush.msra.mxu0 0.0
    %2461 = vmatpush.msra.mxu0 0.0
    %2462 = vmatpush.msra.mxu0 0.0
    %2463 = vmatpush.msra.mxu0 0.0
    %2464 = vmatpush.msra.mxu0 0.0
    %2465 = vmatpush.msra.mxu0 0.0
    %2466 = vmatpush.msra.mxu0 0.0
    %2467 = vmatpush.msra.mxu0 0.0
    %2468 = vmatpush.msra.mxu0 0.0
    %2469 = vmatpush.msra.mxu0 0.0
    %2470 = vmatpush.msra.mxu0 0.0
    %2471 = vmatpush.msra.mxu0 0.0
    %2472 = vmatpush.msra.mxu0 0.0
    %v2473 = vand.u32 %v515, 4294901760
    %v2474 = vsub.f32 %v515, %v2473
    %2475 = vmatpush.msra.mxu0 %v2474
    %v2476 = vand.u32 %v2404, 4294901760
    %v2477 = vsub.f32 %v2404, %v2476
    %2478 = vmatmul.f32.gmra.mxu0 %v2477
    %v2479 = vpop.f32.mrf.mxu0
    %v2480 = vadd.f32 %v2456, %v2479
    %2481 = vdwg.mxu0
    %2482 = vmatpush.msra.mxu0 0.0
    %2483 = vmatpush.msra.mxu0 0.0
    %2484 = vmatpush.msra.mxu0 0.0
    %2485 = vmatpush.msra.mxu0 0.0
    %2486 = vmatpush.msra.mxu0 0.0
    %2487 = vmatpush.msra.mxu0 0.0
    %2488 = vmatpush.msra.mxu0 0.0
    %2489 = vmatpush.msra.mxu0 0.0
    %2490 = vmatpush.msra.mxu0 0.0
    %2491 = vmatpush.msra.mxu0 0.0
    %2492 = vmatpush.msra.mxu0 0.0
    %2493 = vmatpush.msra.mxu0 0.0
    %2494 = vmatpush.msra.mxu0 0.0
    %2495 = vmatpush.msra.mxu0 0.0
    %2496 = vmatpush.msra.mxu0 0.0
    %v2497 = vand.u32 %v515, 4294901760
    %2498 = vmatpush.msra.mxu0 %v2497
    %v2499 = vand.u32 %v2404, 4294901760
    %v2500 = vsub.f32 %v2404, %v2499
    %v2501 = vand.u32 %v2500, 4294901760
    %2502 = vmatmul.f32.gmra.mxu0 %v2501
    %v2503 = vpop.f32.mrf.mxu0
    %v2504 = vadd.f32 %v2480, %v2503
    %2505 = vdwg.mxu0
    %2506 = vmatpush.msra.mxu0 0.0
    %2507 = vmatpush.msra.mxu0 0.0
    %2508 = vmatpush.msra.mxu0 0.0
    %2509 = vmatpush.msra.mxu0 0.0
    %2510 = vmatpush.msra.mxu0 0.0
    %2511 = vmatpush.msra.mxu0 0.0
    %2512 = vmatpush.msra.mxu0 0.0
    %2513 = vmatpush.msra.mxu0 0.0
    %2514 = vmatpush.msra.mxu0 0.0
    %2515 = vmatpush.msra.mxu0 0.0
    %2516 = vmatpush.msra.mxu0 0.0
    %2517 = vmatpush.msra.mxu0 0.0
    %2518 = vmatpush.msra.mxu0 0.0
    %2519 = vmatpush.msra.mxu0 0.0
    %2520 = vmatpush.msra.mxu0 0.0
    %v2521 = vand.u32 %v515, 4294901760
    %v2522 = vsub.f32 %v515, %v2521
    %v2523 = vand.u32 %v2522, 4294901760
    %2524 = vmatpush.msra.mxu0 %v2523
    %v2525 = vand.u32 %v2404, 4294901760
    %2526 = vmatmul.f32.gmra.mxu0 %v2525
    %v2527 = vpop.f32.mrf.mxu0
    %v2528 = vadd.f32 %v2504, %v2527
    %2529 = vdwg.mxu0
    %2530 = vmatpush.msra.mxu0 0.0
    %2531 = vmatpush.msra.mxu0 0.0
    %2532 = vmatpush.msra.mxu0 0.0
    %2533 = vmatpush.msra.mxu0 0.0
    %2534 = vmatpush.msra.mxu0 0.0
    %2535 = vmatpush.msra.mxu0 0.0
    %2536 = vmatpush.msra.mxu0 0.0
    %2537 = vmatpush.msra.mxu0 0.0
    %2538 = vmatpush.msra.mxu0 0.0
    %2539 = vmatpush.msra.mxu0 0.0
    %2540 = vmatpush.msra.mxu0 0.0
    %2541 = vmatpush.msra.mxu0 0.0
    %2542 = vmatpush.msra.mxu0 0.0
    %2543 = vmatpush.msra.mxu0 0.0
    %2544 = vmatpush.msra.mxu0 0.0
    %v2545 = vand.u32 %v515, 4294901760
    %2546 = vmatpush.msra.mxu0 %v2545
    %v2547 = vand.u32 %v2404, 4294901760
    %2548 = vmatmul.f32.gmra.mxu0 %v2547
    %v2549 = vpop.f32.mrf.mxu0
    %v2550 = vadd.f32 %v2528, %v2549
    %2551 = vdwg.mxu0
    %v2552 = vlog2.pop %v2550
    %v2553 = vmul.f32 %v2552, 0.6931472
    %v2555 = vrot.slane %v2553, 2
    %v2556 = vrot.slane %v2553, 3
    %v2559 = vadd.f32 %v470, %v2555
    %v2560 = vadd.f32 %v474, %v2556
    %v2563 = vrot.slane %v2560, 7
    %vm2564 = vcmask 1047559
    %v2565 = vsel %vm2564, %v2563, %v2559
    %vm2567 = vcmask 39942
    %v2568 = vsel %vm2567, %v2565, -inf
    %2569 = vmax.xlane.f32.xlu0 %v2568
    %v2570 = vpop.xlane.xlu0 %2569
    %v2572 = vrot.slane %v2570, 6
    %v2574 = vadd.f32 %v2175, %v2572
    %v2575 = vrot.slane %v2570, 1
    %v2578 = vsub.f32 %v2559, %v2570
    %v2579 = vsub.f32 %v2560, %v2575
    %v2580 = vadd.f32 %v2393, %v944
    %v2581 = vadd.f32 %v2393, %v951
    %v2582 = vadd.f32 %v2393, %v958
    %v2583 = vadd.f32 %v2393, %v965
    %v2584 = vadd.f32 %v2393, %v972
    %v2585 = vadd.f32 %v2394, %v944
    %v2586 = vadd.f32 %v2394, %v951
    %v2587 = vadd.f32 %v2394, %v958
    %v2588 = vadd.f32 %v2394, %v965
    %v2589 = vadd.f32 %v2394, %v972
    %2600 = vset.pattern.permute.xlu0 0
    %2601 = vperm.xlu0 %2600, %v2580
    %v2602 = vpop.permute.xlu0 %2601
    %2603 = vset.pattern.permute.xlu0 0
    %2604 = vperm.xlu0 %2603, %v2581
    %v2605 = vpop.permute.xlu0 %2604
    %2606 = vset.pattern.permute.xlu0 0
    %2607 = vperm.xlu0 %2606, %v2582
    %v2608 = vpop.permute.xlu0 %2607
    %2609 = vset.pattern.permute.xlu0 0
    %2610 = vperm.xlu0 %2609, %v2583
    %v2611 = vpop.permute.xlu0 %2610
    %2612 = vset.pattern.permute.xlu0 0
    %2613 = vperm.xlu0 %2612, %v2584
    %v2614 = vpop.permute.xlu0 %2613
    %2615 = vset.pattern.permute.xlu0 0
    %2616 = vperm.xlu0 %2615, %v2585
    %v2617 = vpop.permute.xlu0 %2616
    %2618 = vset.pattern.permute.xlu0 0
    %2619 = vperm.xlu0 %2618, %v2586
    %v2620 = vpop.permute.xlu0 %2619
    %2621 = vset.pattern.permute.xlu0 0
    %2622 = vperm.xlu0 %2621, %v2587
    %v2623 = vpop.permute.xlu0 %2622
    %2624 = vset.pattern.permute.xlu0 0
    %2625 = vperm.xlu0 %2624, %v2588
    %v2626 = vpop.permute.xlu0 %2625
    %2627 = vset.pattern.permute.xlu0 0
    %2628 = vperm.xlu0 %2627, %v2589
    %v2629 = vpop.permute.xlu0 %2628
    %v2630 = vperm.slane %v2602, %v480
    %v2631 = vperm.slane %v2605, %v480
    %v2632 = vperm.slane %v2608, %v480
    %v2633 = vperm.slane %v2611, %v480
    %v2634 = vperm.slane %v2614, %v480
    %v2635 = vperm.slane %v2617, %v480
    %v2636 = vperm.slane %v2620, %v480
    %v2637 = vperm.slane %v2623, %v480
    %v2638 = vperm.slane %v2626, %v480
    %v2639 = vperm.slane %v2629, %v480
    %v2640 = vsel %vm489, %v2631, %v2630
    %v2641 = vsel %vm674, %v2632, %v2640
    %v2642 = vsel %vm921, %v2633, %v2641
    %v2643 = vsel %vm1041, %v2634, %v2642
    %v2644 = vsel %vm489, %v2636, %v2635
    %v2645 = vsel %vm674, %v2637, %v2644
    %v2646 = vsel %vm921, %v2638, %v2645
    %v2647 = vsel %vm1041, %v2639, %v2646
    %v2650 = vsel %vm692, %v2643, -inf
    %2651 = vmax.xlane.f32.xlu0 %v2650
    %v2652 = vpop.xlane.xlu0 %2651
    %v2653 = vsel %vm692, %v2647, -inf
    %2654 = vmax.xlane.f32.xlu0 %v2653
    %v2655 = vpop.xlane.xlu0 %2654
    %v2658 = vperm.slane %v2652, 0
    %v2659 = vperm.slane %v2652, 1
    %v2660 = vperm.slane %v2652, 2
    %v2661 = vperm.slane %v2652, 3
    %v2662 = vperm.slane %v2652, 4
    %v2663 = vperm.slane %v2655, 0
    %v2664 = vperm.slane %v2655, 1
    %v2665 = vperm.slane %v2655, 2
    %v2666 = vperm.slane %v2655, 3
    %v2667 = vperm.slane %v2655, 4
    %vm2678 = vcmp.eq.f32.partialorder %v2580, %v2658
    %vm2679 = vcmp.eq.f32.partialorder %v2581, %v2659
    %vm2680 = vcmp.eq.f32.partialorder %v2582, %v2660
    %vm2681 = vcmp.eq.f32.partialorder %v2583, %v2661
    %vm2682 = vcmp.eq.f32.partialorder %v2584, %v2662
    %vm2683 = vcmp.eq.f32.partialorder %v2585, %v2663
    %vm2684 = vcmp.eq.f32.partialorder %v2586, %v2664
    %vm2685 = vcmp.eq.f32.partialorder %v2587, %v2665
    %vm2686 = vcmp.eq.f32.partialorder %v2588, %v2666
    %vm2687 = vcmp.eq.f32.partialorder %v2589, %v2667
    %v2688 = vsel %vm2678, %v1092, 5
    %v2689 = vsel %vm2679, %v1092, 5
    %v2690 = vsel %vm2680, %v1092, 5
    %v2691 = vsel %vm2681, %v1092, 5
    %v2692 = vsel %vm2682, %v1092, 5
    %v2693 = vsel %vm2683, %v1092, 5
    %v2694 = vsel %vm2684, %v1092, 5
    %v2695 = vsel %vm2685, %v1092, 5
    %v2696 = vsel %vm2686, %v1092, 5
    %v2697 = vsel %vm2687, %v1092, 5
    %2698 = vset.pattern.permute.xlu0 0
    %2699 = vperm.xlu0 %2698, %v2688
    %v2700 = vpop.permute.xlu0 %2699
    %2701 = vset.pattern.permute.xlu0 0
    %2702 = vperm.xlu0 %2701, %v2689
    %v2703 = vpop.permute.xlu0 %2702
    %2704 = vset.pattern.permute.xlu0 0
    %2705 = vperm.xlu0 %2704, %v2690
    %v2706 = vpop.permute.xlu0 %2705
    %2707 = vset.pattern.permute.xlu0 0
    %2708 = vperm.xlu0 %2707, %v2691
    %v2709 = vpop.permute.xlu0 %2708
    %2710 = vset.pattern.permute.xlu0 0
    %2711 = vperm.xlu0 %2710, %v2692
    %v2712 = vpop.permute.xlu0 %2711
    %2713 = vset.pattern.permute.xlu0 0
    %2714 = vperm.xlu0 %2713, %v2693
    %v2715 = vpop.permute.xlu0 %2714
    %2716 = vset.pattern.permute.xlu0 0
    %2717 = vperm.xlu0 %2716, %v2694
    %v2718 = vpop.permute.xlu0 %2717
    %2719 = vset.pattern.permute.xlu0 0
    %2720 = vperm.xlu0 %2719, %v2695
    %v2721 = vpop.permute.xlu0 %2720
    %2722 = vset.pattern.permute.xlu0 0
    %2723 = vperm.xlu0 %2722, %v2696
    %v2724 = vpop.permute.xlu0 %2723
    %2725 = vset.pattern.permute.xlu0 0
    %2726 = vperm.xlu0 %2725, %v2697
    %v2727 = vpop.permute.xlu0 %2726
    %v2728 = vperm.slane %v2700, %v480
    %v2729 = vperm.slane %v2703, %v480
    %v2730 = vperm.slane %v2706, %v480
    %v2731 = vperm.slane %v2709, %v480
    %v2732 = vperm.slane %v2712, %v480
    %v2733 = vperm.slane %v2715, %v480
    %v2734 = vperm.slane %v2718, %v480
    %v2735 = vperm.slane %v2721, %v480
    %v2736 = vperm.slane %v2724, %v480
    %v2737 = vperm.slane %v2727, %v480
    %v2738 = vsel %vm489, %v2729, %v2728
    %v2739 = vsel %vm674, %v2730, %v2738
    %v2740 = vsel %vm921, %v2731, %v2739
    %v2741 = vsel %vm1041, %v2732, %v2740
    %v2742 = vsel %vm489, %v2734, %v2733
    %v2743 = vsel %vm674, %v2735, %v2742
    %v2744 = vsel %vm921, %v2736, %v2743
    %v2745 = vsel %vm1041, %v2737, %v2744
    %v2746 = vsel %vm692, %v2741, 2147483647
    %v2747 = vand.u32 %v2746, 65535
    %v2748 = vshra.s32 %v2746, 16
    %v2749 = vcvt.s32.f32 %v2747
    %v2750 = vcvt.s32.f32 %v2748
    %2751 = vmin.xlane.f32.xlu0 %v2750
    %v2752 = vpop.xlane.xlu0 %2751
    %vm2753 = vcmp.eq.f32.partialorder %v2750, %v2752
    %v2754 = vsel %vm2753, %v2749, inf
    %2755 = vmin.xlane.f32.xlu0 %v2754
    %v2756 = vpop.xlane.xlu0 %2755
    %v2757 = vcvt.f32.s32 %v2756
    %v2758 = vcvt.f32.s32 %v2752
    %v2759 = vshll.u32 %v2758, 16
    %v2760 = vadd.s32 %v2759, %v2757
    %v2761 = vsel %vm692, %v2745, 2147483647
    %v2762 = vand.u32 %v2761, 65535
    %v2763 = vshra.s32 %v2761, 16
    %v2764 = vcvt.s32.f32 %v2762
    %v2765 = vcvt.s32.f32 %v2763
    %2766 = vmin.xlane.f32.xlu0 %v2765
    %v2767 = vpop.xlane.xlu0 %2766
    %vm2768 = vcmp.eq.f32.partialorder %v2765, %v2767
    %v2769 = vsel %vm2768, %v2764, inf
    %2770 = vmin.xlane.f32.xlu0 %v2769
    %v2771 = vpop.xlane.xlu0 %2770
    %v2772 = vcvt.f32.s32 %v2771
    %v2773 = vcvt.f32.s32 %v2767
    %v2774 = vshll.u32 %v2773, 16
    %v2775 = vadd.s32 %v2774, %v2772
    %v2776 = vperm.slane %v470, 6
    %v2777 = vlaneseq
    %v2778 = vshrl.u32 %v2777, 7
    %2780 = vset.pattern.permute.xlu0 %v2778
    %2781 = vperm.xlu0 %2780, %v2776
    %v2782 = vpop.permute.xlu0 %2781
    %v2783 = vperm.slane %v474, 6
    %v2784 = vlaneseq
    %v2785 = vshrl.u32 %v2784, 7
    %2787 = vset.pattern.permute.xlu0 %v2785
    %2788 = vperm.xlu0 %2787, %v2783
    %v2789 = vpop.permute.xlu0 %2788
    %v2792 = vadd.f32 %v2652, %v2782
    %v2793 = vadd.f32 %v2655, %v2789
    %v2794 = vmul.f32 %v2578, 1.442695
    %v2795 = vpow.pop %v2794
    %v2796 = vmul.f32 %v2579, 1.442695
    %v2797 = vpow.pop %v2796
    %v2800 = vrot.slane %v2795, 6
    %v2801 = vrot.slane %v2797, 5
    %v2802 = vsel %vm489, %v2801, %v2800
    %v2803 = vsel %vm510, %v2802, 0
    %2805 = vmatpush.msra.mxu0 0.0
    %2806 = vmatpush.msra.mxu0 0.0
    %2807 = vmatpush.msra.mxu0 0.0
    %2808 = vmatpush.msra.mxu0 0.0
    %2809 = vmatpush.msra.mxu0 0.0
    %2810 = vmatpush.msra.mxu0 0.0
    %2811 = vmatpush.msra.mxu0 0.0
    %2812 = vmatpush.msra.mxu0 0.0
    %2813 = vmatpush.msra.mxu0 0.0
    %2814 = vmatpush.msra.mxu0 0.0
    %2815 = vmatpush.msra.mxu0 0.0
    %2816 = vmatpush.msra.mxu0 0.0
    %2817 = vmatpush.msra.mxu0 0.0
    %2818 = vmatpush.msra.mxu0 0.0
    %2819 = vmatpush.msra.mxu0 0.0
    %v2820 = vand.u32 %v515, 4294901760
    %2821 = vmatpush.msra.mxu0 %v2820
    %v2822 = vand.u32 %v2803, 4294901760
    %v2823 = vsub.f32 %v2803, %v2822
    %v2824 = vand.u32 %v2823, 4294901760
    %v2825 = vsub.f32 %v2823, %v2824
    %v2826 = vand.u32 %v2825, 4294901760
    %2827 = vmatmul.f32.gmra.mxu0 %v2826
    %v2828 = vpop.f32.mrf.mxu0
    %v2829 = vadd.f32 0.0, %v2828
    %2830 = vdwg.mxu0
    %2831 = vmatpush.msra.mxu0 0.0
    %2832 = vmatpush.msra.mxu0 0.0
    %2833 = vmatpush.msra.mxu0 0.0
    %2834 = vmatpush.msra.mxu0 0.0
    %2835 = vmatpush.msra.mxu0 0.0
    %2836 = vmatpush.msra.mxu0 0.0
    %2837 = vmatpush.msra.mxu0 0.0
    %2838 = vmatpush.msra.mxu0 0.0
    %2839 = vmatpush.msra.mxu0 0.0
    %2840 = vmatpush.msra.mxu0 0.0
    %2841 = vmatpush.msra.mxu0 0.0
    %2842 = vmatpush.msra.mxu0 0.0
    %2843 = vmatpush.msra.mxu0 0.0
    %2844 = vmatpush.msra.mxu0 0.0
    %2845 = vmatpush.msra.mxu0 0.0
    %v2846 = vand.u32 %v515, 4294901760
    %v2847 = vsub.f32 %v515, %v2846
    %v2848 = vand.u32 %v2847, 4294901760
    %v2849 = vsub.f32 %v2847, %v2848
    %v2850 = vand.u32 %v2849, 4294901760
    %2851 = vmatpush.msra.mxu0 %v2850
    %v2852 = vand.u32 %v2803, 4294901760
    %2853 = vmatmul.f32.gmra.mxu0 %v2852
    %v2854 = vpop.f32.mrf.mxu0
    %v2855 = vadd.f32 %v2829, %v2854
    %2856 = vdwg.mxu0
    %2857 = vmatpush.msra.mxu0 0.0
    %2858 = vmatpush.msra.mxu0 0.0
    %2859 = vmatpush.msra.mxu0 0.0
    %2860 = vmatpush.msra.mxu0 0.0
    %2861 = vmatpush.msra.mxu0 0.0
    %2862 = vmatpush.msra.mxu0 0.0
    %2863 = vmatpush.msra.mxu0 0.0
    %2864 = vmatpush.msra.mxu0 0.0
    %2865 = vmatpush.msra.mxu0 0.0
    %2866 = vmatpush.msra.mxu0 0.0
    %2867 = vmatpush.msra.mxu0 0.0
    %2868 = vmatpush.msra.mxu0 0.0
    %2869 = vmatpush.msra.mxu0 0.0
    %2870 = vmatpush.msra.mxu0 0.0
    %2871 = vmatpush.msra.mxu0 0.0
    %v2872 = vand.u32 %v515, 4294901760
    %v2873 = vsub.f32 %v515, %v2872
    %2874 = vmatpush.msra.mxu0 %v2873
    %v2875 = vand.u32 %v2803, 4294901760
    %v2876 = vsub.f32 %v2803, %v2875
    %2877 = vmatmul.f32.gmra.mxu0 %v2876
    %v2878 = vpop.f32.mrf.mxu0
    %v2879 = vadd.f32 %v2855, %v2878
    %2880 = vdwg.mxu0
    %2881 = vmatpush.msra.mxu0 0.0
    %2882 = vmatpush.msra.mxu0 0.0
    %2883 = vmatpush.msra.mxu0 0.0
    %2884 = vmatpush.msra.mxu0 0.0
    %2885 = vmatpush.msra.mxu0 0.0
    %2886 = vmatpush.msra.mxu0 0.0
    %2887 = vmatpush.msra.mxu0 0.0
    %2888 = vmatpush.msra.mxu0 0.0
    %2889 = vmatpush.msra.mxu0 0.0
    %2890 = vmatpush.msra.mxu0 0.0
    %2891 = vmatpush.msra.mxu0 0.0
    %2892 = vmatpush.msra.mxu0 0.0
    %2893 = vmatpush.msra.mxu0 0.0
    %2894 = vmatpush.msra.mxu0 0.0
    %2895 = vmatpush.msra.mxu0 0.0
    %v2896 = vand.u32 %v515, 4294901760
    %2897 = vmatpush.msra.mxu0 %v2896
    %v2898 = vand.u32 %v2803, 4294901760
    %v2899 = vsub.f32 %v2803, %v2898
    %v2900 = vand.u32 %v2899, 4294901760
    %2901 = vmatmul.f32.gmra.mxu0 %v2900
    %v2902 = vpop.f32.mrf.mxu0
    %v2903 = vadd.f32 %v2879, %v2902
    %2904 = vdwg.mxu0
    %2905 = vmatpush.msra.mxu0 0.0
    %2906 = vmatpush.msra.mxu0 0.0
    %2907 = vmatpush.msra.mxu0 0.0
    %2908 = vmatpush.msra.mxu0 0.0
    %2909 = vmatpush.msra.mxu0 0.0
    %2910 = vmatpush.msra.mxu0 0.0
    %2911 = vmatpush.msra.mxu0 0.0
    %2912 = vmatpush.msra.mxu0 0.0
    %2913 = vmatpush.msra.mxu0 0.0
    %2914 = vmatpush.msra.mxu0 0.0
    %2915 = vmatpush.msra.mxu0 0.0
    %2916 = vmatpush.msra.mxu0 0.0
    %2917 = vmatpush.msra.mxu0 0.0
    %2918 = vmatpush.msra.mxu0 0.0
    %2919 = vmatpush.msra.mxu0 0.0
    %v2920 = vand.u32 %v515, 4294901760
    %v2921 = vsub.f32 %v515, %v2920
    %v2922 = vand.u32 %v2921, 4294901760
    %2923 = vmatpush.msra.mxu0 %v2922
    %v2924 = vand.u32 %v2803, 4294901760
    %2925 = vmatmul.f32.gmra.mxu0 %v2924
    %v2926 = vpop.f32.mrf.mxu0
    %v2927 = vadd.f32 %v2903, %v2926
    %2928 = vdwg.mxu0
    %2929 = vmatpush.msra.mxu0 0.0
    %2930 = vmatpush.msra.mxu0 0.0
    %2931 = vmatpush.msra.mxu0 0.0
    %2932 = vmatpush.msra.mxu0 0.0
    %2933 = vmatpush.msra.mxu0 0.0
    %2934 = vmatpush.msra.mxu0 0.0
    %2935 = vmatpush.msra.mxu0 0.0
    %2936 = vmatpush.msra.mxu0 0.0
    %2937 = vmatpush.msra.mxu0 0.0
    %2938 = vmatpush.msra.mxu0 0.0
    %2939 = vmatpush.msra.mxu0 0.0
    %2940 = vmatpush.msra.mxu0 0.0
    %2941 = vmatpush.msra.mxu0 0.0
    %2942 = vmatpush.msra.mxu0 0.0
    %2943 = vmatpush.msra.mxu0 0.0
    %v2944 = vand.u32 %v515, 4294901760
    %2945 = vmatpush.msra.mxu0 %v2944
    %v2946 = vand.u32 %v2803, 4294901760
    %2947 = vmatmul.f32.gmra.mxu0 %v2946
    %v2948 = vpop.f32.mrf.mxu0
    %v2949 = vadd.f32 %v2927, %v2948
    %2950 = vdwg.mxu0
    %v2951 = vlog2.pop %v2949
    %v2952 = vmul.f32 %v2951, 0.6931472
    %v2954 = vrot.slane %v2952, 1
    %v2955 = vrot.slane %v2952, 2
    %v2958 = vadd.f32 %v470, %v2954
    %v2959 = vadd.f32 %v474, %v2955
    %v2962 = vrot.slane %v2959, 7
    %vm2965 = vcmask 39943
    %v2966 = vsel %vm2965, %v2958, -inf
    %2967 = vmax.xlane.f32.xlu0 %v2966
    %v2968 = vpop.xlane.xlu0 %2967
    %vm2969 = vcmask 32768
    %v2970 = vsel %vm2969, %v2962, -inf
    %2971 = vmax.xlane.f32.xlu0 %v2970
    %v2972 = vpop.xlane.xlu0 %2971
    %vm2975 = vcmask 1040384
    %v2976 = vrot.slane %v2968, 7
    %v2977 = vrot.slane %v2972, 7
    %v2978 = vsel %vm2975, %v2976, %v2977
    %v2980 = vadd.f32 %v2574, %v2978
    %v2981 = vrot.slane %v2972, 1
    %v2984 = vsub.f32 %v2958, %v2968
    %v2985 = vsub.f32 %v2959, %v2981
    %v2986 = vadd.f32 %v2792, %v944
    %v2987 = vadd.f32 %v2792, %v951
    %v2988 = vadd.f32 %v2792, %v958
    %v2989 = vadd.f32 %v2792, %v965
    %v2990 = vadd.f32 %v2792, %v972
    %v2991 = vadd.f32 %v2793, %v944
    %v2992 = vadd.f32 %v2793, %v951
    %v2993 = vadd.f32 %v2793, %v958
    %v2994 = vadd.f32 %v2793, %v965
    %v2995 = vadd.f32 %v2793, %v972
    %3006 = vset.pattern.permute.xlu0 0
    %3007 = vperm.xlu0 %3006, %v2986
    %v3008 = vpop.permute.xlu0 %3007
    %3009 = vset.pattern.permute.xlu0 0
    %3010 = vperm.xlu0 %3009, %v2987
    %v3011 = vpop.permute.xlu0 %3010
    %3012 = vset.pattern.permute.xlu0 0
    %3013 = vperm.xlu0 %3012, %v2988
    %v3014 = vpop.permute.xlu0 %3013
    %3015 = vset.pattern.permute.xlu0 0
    %3016 = vperm.xlu0 %3015, %v2989
    %v3017 = vpop.permute.xlu0 %3016
    %3018 = vset.pattern.permute.xlu0 0
    %3019 = vperm.xlu0 %3018, %v2990
    %v3020 = vpop.permute.xlu0 %3019
    %3021 = vset.pattern.permute.xlu0 0
    %3022 = vperm.xlu0 %3021, %v2991
    %v3023 = vpop.permute.xlu0 %3022
    %3024 = vset.pattern.permute.xlu0 0
    %3025 = vperm.xlu0 %3024, %v2992
    %v3026 = vpop.permute.xlu0 %3025
    %3027 = vset.pattern.permute.xlu0 0
    %3028 = vperm.xlu0 %3027, %v2993
    %v3029 = vpop.permute.xlu0 %3028
    %3030 = vset.pattern.permute.xlu0 0
    %3031 = vperm.xlu0 %3030, %v2994
    %v3032 = vpop.permute.xlu0 %3031
    %3033 = vset.pattern.permute.xlu0 0
    %3034 = vperm.xlu0 %3033, %v2995
    %v3035 = vpop.permute.xlu0 %3034
    %v3036 = vperm.slane %v3008, %v480
    %v3037 = vperm.slane %v3011, %v480
    %v3038 = vperm.slane %v3014, %v480
    %v3039 = vperm.slane %v3017, %v480
    %v3040 = vperm.slane %v3020, %v480
    %v3041 = vperm.slane %v3023, %v480
    %v3042 = vperm.slane %v3026, %v480
    %v3043 = vperm.slane %v3029, %v480
    %v3044 = vperm.slane %v3032, %v480
    %v3045 = vperm.slane %v3035, %v480
    %v3046 = vsel %vm489, %v3037, %v3036
    %v3047 = vsel %vm674, %v3038, %v3046
    %v3048 = vsel %vm921, %v3039, %v3047
    %v3049 = vsel %vm1041, %v3040, %v3048
    %v3050 = vsel %vm489, %v3042, %v3041
    %v3051 = vsel %vm674, %v3043, %v3050
    %v3052 = vsel %vm921, %v3044, %v3051
    %v3053 = vsel %vm1041, %v3045, %v3052
    %v3056 = vsel %vm692, %v3049, -inf
    %3057 = vmax.xlane.f32.xlu0 %v3056
    %v3058 = vpop.xlane.xlu0 %3057
    %v3059 = vsel %vm692, %v3053, -inf
    %3060 = vmax.xlane.f32.xlu0 %v3059
    %v3061 = vpop.xlane.xlu0 %3060
    %v3064 = vperm.slane %v3058, 0
    %v3065 = vperm.slane %v3058, 1
    %v3066 = vperm.slane %v3058, 2
    %v3067 = vperm.slane %v3058, 3
    %v3068 = vperm.slane %v3058, 4
    %v3069 = vperm.slane %v3061, 0
    %v3070 = vperm.slane %v3061, 1
    %v3071 = vperm.slane %v3061, 2
    %v3072 = vperm.slane %v3061, 3
    %v3073 = vperm.slane %v3061, 4
    %vm3084 = vcmp.eq.f32.partialorder %v2986, %v3064
    %vm3085 = vcmp.eq.f32.partialorder %v2987, %v3065
    %vm3086 = vcmp.eq.f32.partialorder %v2988, %v3066
    %vm3087 = vcmp.eq.f32.partialorder %v2989, %v3067
    %vm3088 = vcmp.eq.f32.partialorder %v2990, %v3068
    %vm3089 = vcmp.eq.f32.partialorder %v2991, %v3069
    %vm3090 = vcmp.eq.f32.partialorder %v2992, %v3070
    %vm3091 = vcmp.eq.f32.partialorder %v2993, %v3071
    %vm3092 = vcmp.eq.f32.partialorder %v2994, %v3072
    %vm3093 = vcmp.eq.f32.partialorder %v2995, %v3073
    %v3094 = vsel %vm3084, %v1092, 5
    %v3095 = vsel %vm3085, %v1092, 5
    %v3096 = vsel %vm3086, %v1092, 5
    %v3097 = vsel %vm3087, %v1092, 5
    %v3098 = vsel %vm3088, %v1092, 5
    %v3099 = vsel %vm3089, %v1092, 5
    %v3100 = vsel %vm3090, %v1092, 5
    %v3101 = vsel %vm3091, %v1092, 5
    %v3102 = vsel %vm3092, %v1092, 5
    %v3103 = vsel %vm3093, %v1092, 5
    %3104 = vset.pattern.permute.xlu0 0
    %3105 = vperm.xlu0 %3104, %v3094
    %v3106 = vpop.permute.xlu0 %3105
    %3107 = vset.pattern.permute.xlu0 0
    %3108 = vperm.xlu0 %3107, %v3095
    %v3109 = vpop.permute.xlu0 %3108
    %3110 = vset.pattern.permute.xlu0 0
    %3111 = vperm.xlu0 %3110, %v3096
    %v3112 = vpop.permute.xlu0 %3111
    %3113 = vset.pattern.permute.xlu0 0
    %3114 = vperm.xlu0 %3113, %v3097
    %v3115 = vpop.permute.xlu0 %3114
    %3116 = vset.pattern.permute.xlu0 0
    %3117 = vperm.xlu0 %3116, %v3098
    %v3118 = vpop.permute.xlu0 %3117
    %3119 = vset.pattern.permute.xlu0 0
    %3120 = vperm.xlu0 %3119, %v3099
    %v3121 = vpop.permute.xlu0 %3120
    %3122 = vset.pattern.permute.xlu0 0
    %3123 = vperm.xlu0 %3122, %v3100
    %v3124 = vpop.permute.xlu0 %3123
    %3125 = vset.pattern.permute.xlu0 0
    %3126 = vperm.xlu0 %3125, %v3101
    %v3127 = vpop.permute.xlu0 %3126
    %3128 = vset.pattern.permute.xlu0 0
    %3129 = vperm.xlu0 %3128, %v3102
    %v3130 = vpop.permute.xlu0 %3129
    %3131 = vset.pattern.permute.xlu0 0
    %3132 = vperm.xlu0 %3131, %v3103
    %v3133 = vpop.permute.xlu0 %3132
    %v3134 = vperm.slane %v3106, %v480
    %v3135 = vperm.slane %v3109, %v480
    %v3136 = vperm.slane %v3112, %v480
    %v3137 = vperm.slane %v3115, %v480
    %v3138 = vperm.slane %v3118, %v480
    %v3139 = vperm.slane %v3121, %v480
    %v3140 = vperm.slane %v3124, %v480
    %v3141 = vperm.slane %v3127, %v480
    %v3142 = vperm.slane %v3130, %v480
    %v3143 = vperm.slane %v3133, %v480
    %v3144 = vsel %vm489, %v3135, %v3134
    %v3145 = vsel %vm674, %v3136, %v3144
    %v3146 = vsel %vm921, %v3137, %v3145
    %v3147 = vsel %vm1041, %v3138, %v3146
    %v3148 = vsel %vm489, %v3140, %v3139
    %v3149 = vsel %vm674, %v3141, %v3148
    %v3150 = vsel %vm921, %v3142, %v3149
    %v3151 = vsel %vm1041, %v3143, %v3150
    %v3152 = vsel %vm692, %v3147, 2147483647
    %v3153 = vand.u32 %v3152, 65535
    %v3154 = vshra.s32 %v3152, 16
    %v3155 = vcvt.s32.f32 %v3153
    %v3156 = vcvt.s32.f32 %v3154
    %3157 = vmin.xlane.f32.xlu0 %v3156
    %v3158 = vpop.xlane.xlu0 %3157
    %vm3159 = vcmp.eq.f32.partialorder %v3156, %v3158
    %v3160 = vsel %vm3159, %v3155, inf
    %3161 = vmin.xlane.f32.xlu0 %v3160
    %v3162 = vpop.xlane.xlu0 %3161
    %v3163 = vcvt.f32.s32 %v3162
    %v3164 = vcvt.f32.s32 %v3158
    %v3165 = vshll.u32 %v3164, 16
    %v3166 = vadd.s32 %v3165, %v3163
    %v3167 = vsel %vm692, %v3151, 2147483647
    %v3168 = vand.u32 %v3167, 65535
    %v3169 = vshra.s32 %v3167, 16
    %v3170 = vcvt.s32.f32 %v3168
    %v3171 = vcvt.s32.f32 %v3169
    %3172 = vmin.xlane.f32.xlu0 %v3171
    %v3173 = vpop.xlane.xlu0 %3172
    %vm3174 = vcmp.eq.f32.partialorder %v3171, %v3173
    %v3175 = vsel %vm3174, %v3170, inf
    %3176 = vmin.xlane.f32.xlu0 %v3175
    %v3177 = vpop.xlane.xlu0 %3176
    %v3178 = vcvt.f32.s32 %v3177
    %v3179 = vcvt.f32.s32 %v3173
    %v3180 = vshll.u32 %v3179, 16
    %v3181 = vadd.s32 %v3180, %v3178
    %v3182 = vperm.slane %v470, 7
    %v3183 = vlaneseq
    %v3184 = vshrl.u32 %v3183, 7
    %3186 = vset.pattern.permute.xlu0 %v3184
    %3187 = vperm.xlu0 %3186, %v3182
    %v3188 = vpop.permute.xlu0 %3187
    %v3189 = vperm.slane %v474, 7
    %v3190 = vlaneseq
    %v3191 = vshrl.u32 %v3190, 7
    %3193 = vset.pattern.permute.xlu0 %v3191
    %3194 = vperm.xlu0 %3193, %v3189
    %v3195 = vpop.permute.xlu0 %3194
    %v3198 = vadd.f32 %v3058, %v3188
    %v3199 = vadd.f32 %v3061, %v3195
    %v3202 = vrot.slane %v2985, 7
    %v3205 = vsel %vm2965, %v2984, -inf
    %3206 = vmax.xlane.f32.xlu0 %v3205
    %v3207 = vpop.xlane.xlu0 %3206
    %v3208 = vsel %vm2969, %v3202, -inf
    %3209 = vmax.xlane.f32.xlu0 %v3208
    %v3210 = vpop.xlane.xlu0 %3209
    %v3213 = vrot.slane %v3210, 1
    %v3216 = vsub.f32 %v2984, %v3207
    %v3217 = vsub.f32 %v2985, %v3213
    %v3218 = vmul.f32 %v3216, 1.442695
    %v3219 = vpow.pop %v3218
    %v3220 = vmul.f32 %v3217, 1.442695
    %v3221 = vpow.pop %v3220
    %v3224 = vrot.slane %v3221, 7
    %v3227 = vsel %vm2965, %v3219, 0.0
    %3228 = vadd.xlane.f32.xlu0 %v3227
    %v3229 = vpop.xlane.xlu0 %3228
    %v3230 = vsel %vm2969, %v3224, 0.0
    %3231 = vadd.xlane.f32.xlu0 %v3230
    %v3232 = vpop.xlane.xlu0 %3231
    %v3233 = vlog2.pop %v3229
    %v3234 = vmul.f32 %v3233, 0.6931472
    %v3235 = vlog2.pop %v3232
    %v3236 = vmul.f32 %v3235, 0.6931472
    %v3237 = vadd.f32 %v3207, %v3234
    %v3238 = vadd.f32 %v3210, %v3236
    %v3241 = vrot.slane %v3237, 7
    %v3242 = vrot.slane %v3238, 7
    %v3243 = vsel %vm2975, %v3241, %v3242
    %v3245 = vadd.f32 %v2980, %v3243
    %vm3246 = vcmask 1024
    %3247 = vst.msk [vmem:[%s11] sm:$0x3] %vm3246, %v3245
    %3250 = vset.pattern.permute.xlu0 0
    %3251 = vperm.xlu0 %3250, %v3198
    %v3252 = vpop.permute.xlu0 %3251
    %3253 = vset.pattern.permute.xlu0 0
    %3254 = vperm.xlu0 %3253, %v3199
    %v3255 = vpop.permute.xlu0 %3254
    %v3256 = vperm.slane %v3252, %v480
    %v3257 = vperm.slane %v3255, %v480
    %v3258 = vsel %vm489, %v3257, %v3256
    %v3260 = vsel %vm492, %v3258, -inf
    %3261 = vmax.xlane.f32.xlu0 %v3260
    %v3262 = vpop.xlane.xlu0 %3261
    %v3264 = vperm.slane %v3262, 0
    %v3265 = vperm.slane %v3262, 1
    %vm3268 = vcmp.eq.f32.partialorder %v3198, %v3264
    %vm3269 = vcmp.eq.f32.partialorder %v3199, %v3265
    %v3270 = vsel %vm3268, %v1092, 5
    %v3271 = vsel %vm3269, %v1092, 5
    %3272 = vset.pattern.permute.xlu0 0
    %3273 = vperm.xlu0 %3272, %v3270
    %v3274 = vpop.permute.xlu0 %3273
    %3275 = vset.pattern.permute.xlu0 0
    %3276 = vperm.xlu0 %3275, %v3271
    %v3277 = vpop.permute.xlu0 %3276
    %v3278 = vperm.slane %v3274, %v480
    %v3279 = vperm.slane %v3277, %v480
    %v3280 = vsel %vm489, %v3279, %v3278
    %v3281 = vsel %vm492, %v3280, 2147483647
    %v3282 = vand.u32 %v3281, 65535
    %v3283 = vshra.s32 %v3281, 16
    %v3284 = vcvt.s32.f32 %v3282
    %v3285 = vcvt.s32.f32 %v3283
    %3286 = vmin.xlane.f32.xlu0 %v3285
    %v3287 = vpop.xlane.xlu0 %3286
    %vm3288 = vcmp.eq.f32.partialorder %v3285, %v3287
    %v3289 = vsel %vm3288, %v3284, inf
    %3290 = vmin.xlane.f32.xlu0 %v3289
    %v3291 = vpop.xlane.xlu0 %3290
    %v3292 = vcvt.f32.s32 %v3291
    %v3293 = vcvt.f32.s32 %v3287
    %v3294 = vshll.u32 %v3293, 16
    %v3295 = vadd.s32 %v3294, %v3292
    %vm3296 = vcmp.eq.s32.totalorder %v480, %v3295
    %v3297 = vperm.slane %v3166, %v480
    %v3298 = vperm.slane %v3181, %v480
    %v3299 = vsel %vm489, %v3298, %v3297
    %v3300 = vsel %vm3296, %v3299, 0
    %v3301 = vsel %vm492, %v3300, 0
    %v3302 = vand.u32 %v3301, 65535
    %v3303 = vshrl.u32 %v3301, 16
    %v3304 = vcvt.s32.f32 %v3302
    %v3305 = vcvt.s32.f32 %v3303
    %3306 = vadd.xlane.f32.xlu0 %v3304
    %v3307 = vpop.xlane.xlu0 %3306
    %3308 = vadd.xlane.f32.xlu0 %v3305
    %v3309 = vpop.xlane.xlu0 %3308
    %v3310 = vcvt.f32.s32 %v3307
    %v3311 = vcvt.f32.s32 %v3309
    %v3312 = vshll.u32 %v3311, 16
    %v3313 = vadd.s32 %v3312, %v3310
    %vm3314 = vcmp.eq.s32.totalorder %v480, %v3313
    %v3315 = vperm.slane %v2760, %v480
    %v3316 = vperm.slane %v2775, %v480
    %v3317 = vsel %vm489, %v3316, %v3315
    %v3318 = vsel %vm3314, %v3317, 0
    %v3319 = vsel %vm492, %v3318, 0
    %v3320 = vand.u32 %v3319, 65535
    %v3321 = vshrl.u32 %v3319, 16
    %v3322 = vcvt.s32.f32 %v3320
    %v3323 = vcvt.s32.f32 %v3321
    %3324 = vadd.xlane.f32.xlu0 %v3322
    %v3325 = vpop.xlane.xlu0 %3324
    %3326 = vadd.xlane.f32.xlu0 %v3323
    %v3327 = vpop.xlane.xlu0 %3326
    %v3328 = vcvt.f32.s32 %v3325
    %v3329 = vcvt.f32.s32 %v3327
    %v3330 = vshll.u32 %v3329, 16
    %v3331 = vadd.s32 %v3330, %v3328
    %vm3332 = vcmp.eq.s32.totalorder %v480, %v3331
    %v3333 = vperm.slane %v2361, %v480
    %v3334 = vperm.slane %v2376, %v480
    %v3335 = vsel %vm489, %v3334, %v3333
    %v3336 = vsel %vm3332, %v3335, 0
    %v3337 = vsel %vm492, %v3336, 0
    %v3338 = vand.u32 %v3337, 65535
    %v3339 = vshrl.u32 %v3337, 16
    %v3340 = vcvt.s32.f32 %v3338
    %v3341 = vcvt.s32.f32 %v3339
    %3342 = vadd.xlane.f32.xlu0 %v3340
    %v3343 = vpop.xlane.xlu0 %3342
    %3344 = vadd.xlane.f32.xlu0 %v3341
    %v3345 = vpop.xlane.xlu0 %3344
    %v3346 = vcvt.f32.s32 %v3343
    %v3347 = vcvt.f32.s32 %v3345
    %v3348 = vshll.u32 %v3347, 16
    %v3349 = vadd.s32 %v3348, %v3346
    %vm3350 = vcmp.eq.s32.totalorder %v480, %v3349
    %v3351 = vperm.slane %v1962, %v480
    %v3352 = vperm.slane %v1977, %v480
    %v3353 = vsel %vm489, %v3352, %v3351
    %v3354 = vsel %vm3350, %v3353, 0
    %v3355 = vsel %vm492, %v3354, 0
    %v3356 = vand.u32 %v3355, 65535
    %v3357 = vshrl.u32 %v3355, 16
    %v3358 = vcvt.s32.f32 %v3356
    %v3359 = vcvt.s32.f32 %v3357
    %3360 = vadd.xlane.f32.xlu0 %v3358
    %v3361 = vpop.xlane.xlu0 %3360
    %3362 = vadd.xlane.f32.xlu0 %v3359
    %v3363 = vpop.xlane.xlu0 %3362
    %v3364 = vcvt.f32.s32 %v3361
    %v3365 = vcvt.f32.s32 %v3363
    %v3366 = vshll.u32 %v3365, 16
    %v3367 = vadd.s32 %v3366, %v3364
    %vm3368 = vcmp.eq.s32.totalorder %v480, %v3367
    %v3369 = vperm.slane %v1563, %v480
    %v3370 = vperm.slane %v1578, %v480
    %v3371 = vsel %vm489, %v3370, %v3369
    %v3372 = vsel %vm3368, %v3371, 0
    %v3373 = vsel %vm492, %v3372, 0
    %v3374 = vand.u32 %v3373, 65535
    %v3375 = vshrl.u32 %v3373, 16
    %v3376 = vcvt.s32.f32 %v3374
    %v3377 = vcvt.s32.f32 %v3375
    %3378 = vadd.xlane.f32.xlu0 %v3376
    %v3379 = vpop.xlane.xlu0 %3378
    %3380 = vadd.xlane.f32.xlu0 %v3377
    %v3381 = vpop.xlane.xlu0 %3380
    %v3382 = vcvt.f32.s32 %v3379
    %v3383 = vcvt.f32.s32 %v3381
    %v3384 = vshll.u32 %v3383, 16
    %v3385 = vadd.s32 %v3384, %v3382
    %vm3386 = vcmp.eq.s32.totalorder %v480, %v3385
    %v3387 = vperm.slane %v1165, %v480
    %v3388 = vperm.slane %v1180, %v480
    %v3389 = vsel %vm489, %v3388, %v3387
    %v3390 = vsel %vm3386, %v3389, 0
    %v3391 = vsel %vm492, %v3390, 0
    %v3392 = vand.u32 %v3391, 65535
    %v3393 = vshrl.u32 %v3391, 16
    %v3394 = vcvt.s32.f32 %v3392
    %v3395 = vcvt.s32.f32 %v3393
    %3396 = vadd.xlane.f32.xlu0 %v3394
    %v3397 = vpop.xlane.xlu0 %3396
    %3398 = vadd.xlane.f32.xlu0 %v3395
    %v3399 = vpop.xlane.xlu0 %3398
    %v3400 = vcvt.f32.s32 %v3397
    %v3401 = vcvt.f32.s32 %v3399
    %v3402 = vshll.u32 %v3401, 16
    %v3403 = vadd.s32 %v3402, %v3400
    %vm3404 = vcmp.eq.s32.totalorder %v480, %v3403
    %v3405 = vperm.slane %v717, %v480
    %v3406 = vperm.slane %v732, %v480
    %v3407 = vsel %vm489, %v3406, %v3405
    %v3408 = vsel %vm3404, %v3407, 0
    %v3409 = vsel %vm492, %v3408, 0
    %v3410 = vand.u32 %v3409, 65535
    %v3411 = vshrl.u32 %v3409, 16
    %v3412 = vcvt.s32.f32 %v3410
    %v3413 = vcvt.s32.f32 %v3411
    %3414 = vadd.xlane.f32.xlu0 %v3412
    %v3415 = vpop.xlane.xlu0 %3414
    %3416 = vadd.xlane.f32.xlu0 %v3413
    %v3417 = vpop.xlane.xlu0 %3416
    %v3418 = vcvt.f32.s32 %v3415
    %v3419 = vcvt.f32.s32 %v3417
    %v3420 = vshll.u32 %v3419, 16
    %v3421 = vadd.s32 %v3420, %v3418
    %vm3422 = vcmask 7168
    %v3423 = vsel %vm3422, %v3421, %v3403
    %vm3424 = vcmask 15360
    %v3425 = vsel %vm3424, %v3423, %v3385
    %v3426 = vsel %vm47, %v3425, %v3367
    %vm3427 = vcmask 31744
    %v3428 = vsel %vm3427, %v3426, %v3349
    %v3429 = vsel %vm510, %v3428, %v3331
    %v3430 = vsel %vm228, %v3429, %v3313
    %vm3431 = vcmask 56320
    %v3432 = vsel %vm3431, %v3430, %v3295
    %vm3433 = vcmask 58368
    %3434 = vst.msk [vmem:[#allocation2] sm:$0x3] %vm3433, %v3432
    // Predicated region
    $region46: #{hmm_forward_pallas.1} parent=1 // pred_check
      _
    $region47: #{hmm_forward_pallas.1} parent=1 // pred_check_branch
      %3436 = sbr.rel (0) target = $region49
    $region48: #{hmm_forward_pallas.1} parent=1 // pred_region
      _
    $region49: #{hmm_forward_pallas.1} parent=1 // pred_fallthru
      _
    // Predicated region
    $region50: #{hmm_forward_pallas.1} parent=1 // pred_check
      _
    $region51: #{hmm_forward_pallas.1} parent=1 // pred_check_branch
      %3438 = sbr.rel (0) target = $region53
    $region52: #{hmm_forward_pallas.1} parent=1 // pred_region
      %3440 = vsyncadd [#allocation3], 0
      %s3442 = sshll.u32 [#allocation2], 4
      %s3443 = int_to_ptr.vmem [resolvable:$true] %s3442
      %s3444 = sshll.u32 %s12, 4
      %s3445 = int_to_ptr.hbm [resolvable:$true] %s3444
      %3447 = dma.vmem_to_hbm [thread:$0]  %s3443, 32, %s3445, [#allocation3]
    $region53: #{hmm_forward_pallas.1} parent=1 // pred_fallthru
      _
    // Predicated region
    $region54: #{hmm_forward_pallas.1} parent=1 // pred_check
      _
    $region55: #{hmm_forward_pallas.1} parent=1 // pred_check_branch
      %3449 = sbr.rel (0) target = $region57
    $region56: #{hmm_forward_pallas.1} parent=1 // pred_region
      _
    $region57: #{hmm_forward_pallas.1} parent=1 // pred_fallthru
      _
    // Predicated region
    $region58: #{hmm_forward_pallas.1} parent=1 // pred_check
      _
    $region59: #{hmm_forward_pallas.1} parent=1 // pred_check_branch
      %3451 = sbr.rel (0) target = $region61
    $region60: #{hmm_forward_pallas.1} parent=1 // pred_region
      %3453 = dma.done [#allocation3], 32
    $region61: #{hmm_forward_pallas.1} parent=1 // pred_fallthru
      _
    %3454 = vsyncpa [#allocation3], 1

</llo_original>
